<compile_context>
chip_gen: v7x
topology: tpu7x:2x2x1
jax: 0.10.0
libtpu: 0.0.40
codegen_flags: <defaults>
</compile_context>

<pallas_src>
import jax
import jax.numpy as jnp
from jax.experimental import pallas as pl
from jax.experimental.pallas import tpu as pltpu

# ---------------- config (mirrors PatchUpModel.__init__) ----------------
BLOCK_SIZE = 7
GAMMA = 0.9
NUM_CLASSES = 10
PATCHUP_TYPE = "hard"          # the branch fused by this kernel

# small synthetic model dims
B, CIN, H, W = 8, 3, 16, 16
CFEAT = 8                      # channels of the 'features' conv output
HW = H * W                     # 256  (lane-dense: multiple of 128)
K_RAW = CIN * 9                # 27   im2col contraction length
K_DIM = 32                     # contraction padded to a multiple of 8
HALF = BLOCK_SIZE // 2         # 3
TOTAL_FEATS = float(CFEAT * H * W)

# adjust_gamma(features_output): gamma * W^2 / (block^2 * (W - block + 1)^2)
GAMMA_ADJ = GAMMA * W ** 2 / (BLOCK_SIZE ** 2 * (W - BLOCK_SIZE + 1) ** 2)


# ---------------- the single fused kernel ----------------
def _patchup_kernel(idx_ref,                            # scalar prefetch: randperm (SMEM int32[B])
                    patches_ref, wconv_ref, bconv_ref,  # bf16[K_DIM,B*HW], bf16[CFEAT,K_DIM], f32[CFEAT,1]
                    mask_ref, dil_ref,                  # bf16[CFEAT,HW],   bf16[HW,HW]
                    wfc_ref, bfc_ref, ta_ref, tb_ref,   # bf16[CFEAT,HW,NC], f32[1,NC], f32[B,NC] x2
                    logits_ref, loss_ref,               # out: f32[B,NC], f32[1,1]
                    feat_ref, mixed_ref):               # VMEM scratch: f32[B,CFEAT,HW] x2
    f32 = jnp.float32

    # ---- 1. features: 3x3 conv (im2col) as ONE matmul + bias + ReLU --------
    acc = jnp.dot(wconv_ref[...], patches_ref[...], preferred_element_type=f32)
    acc = jnp.maximum(acc + bconv_ref[...], 0.0)              # [CFEAT, B*HW]
    for b in range(B):                                        # lane-tile aligned slabs
        feat_ref[b] = acc[:, b * HW:(b + 1) * HW]             # [CFEAT, HW]

    # ---- 2. PatchUp hook: 7x7 max-pool dilation of the Bernoulli mask ------
    # max_pool2d of a {0,1} mask == (neighbourhood sum > 0); the sum is one
    # matmul with the precomputed adjacency operator (|dh|<=3 & |dw|<=3).
    counts = jnp.dot(mask_ref[...], dil_ref[...], preferred_element_type=f32)
    holes = (counts > 0.5).astype(f32)                        # [CFEAT, HW]
    keep = 1.0 - holes                                        # hoisted out of the mix loop
    unchanged = (TOTAL_FEATS - jnp.sum(holes)) / TOTAL_FEATS  # total_unchanged_portion

    # ---- 3. hard PatchUp mix, batch permutation applied in-kernel ----------
    for b in range(B):
        perm = feat_ref[idx_ref[b]]                           # feat[indices[b]]
        mixed_ref[b] = keep * feat_ref[b] + holes * perm

    # ---- 4. classifier: logits = mixed.view(B, CFEAT*HW) @ Wfc + bfc -------
    logits = jnp.broadcast_to(bfc_ref[...], (B, NUM_CLASSES))
    for c in range(CFEAT):
        logits = logits + jnp.dot(mixed_ref[:, c, :].astype(jnp.bfloat16),
                                  wfc_ref[c], preferred_element_type=f32)
    logits_ref[...] = logits

    # ---- 5. softmax + 3x BCE (torch nn.BCELoss: mean, log clamped >= -100) -
    mx = jnp.max(logits, axis=1, keepdims=True)
    e = jnp.exp(logits - mx)
    s = jnp.sum(e, axis=1, keepdims=True)
    p = e / s
    logp = jnp.maximum(logits - mx - jnp.log(s), -100.0)      # log-softmax
    log1mp = jnp.maximum(jnp.log(1.0 - p), -100.0)
    ta = ta_ref[...]                                          # target_a
    tb = tb_ref[...]                                          # target_b = target_a[indices]
    trw = unchanged * ta + (1.0 - unchanged) * tb             # target_reweighted (hard)

    def bce(t):
        return -jnp.mean(t * logp + (1.0 - t) * log1mp)

    loss = bce(ta) * unchanged + bce(tb) * (1.0 - unchanged) + bce(trw)
    loss_ref[...] = jnp.broadcast_to(loss, (1, 1))


# ---------------- wrapper ----------------
def _full_spec(shape):
    nd = len(shape)
    return pl.BlockSpec(shape, lambda *_, _nd=nd: (0,) * _nd)


def init_params(key):
    k1, k2, k3, k4 = jax.random.split(key, 4)
    w_conv = jax.random.normal(k1, (CFEAT, CIN, 3, 3), jnp.float32) * 0.1
    b_conv = jax.random.normal(k2, (CFEAT,), jnp.float32) * 0.1
    w_fc = jax.random.normal(k3, (CFEAT * H * W, NUM_CLASSES), jnp.float32) * 0.02
    b_fc = jax.random.normal(k4, (NUM_CLASSES,), jnp.float32) * 0.02
    return w_conv, b_conv, w_fc, b_fc


def prepare_params(params):
    """All static packing, done ONCE (hoisted out of the per-call jit path)."""
    w_conv, b_conv, w_fc, b_fc = params
    # conv weight as an im2col matrix, contraction padded 27 -> 32, bf16
    w_mat = jnp.pad(w_conv.reshape(CFEAT, K_RAW),
                    ((0, 0), (0, K_DIM - K_RAW))).astype(jnp.bfloat16)
    b_conv2 = b_conv.reshape(CFEAT, 1).astype(jnp.float32)
    # classifier weight: per-channel [HW, NUM_CLASSES] slabs, bf16, NOT padded
    w_fc3 = w_fc.reshape(CFEAT, HW, NUM_CLASSES).astype(jnp.bfloat16)
    b_fc2 = b_fc.reshape(1, NUM_CLASSES).astype(jnp.float32)
    # 7x7 / stride 1 / pad 3 max-pool (binary dilation) operator on the
    # flattened grid: dil[i, j] = 1  iff  |h_i - h_j| <= 3 and |w_i - w_j| <= 3
    pos = jnp.arange(HW, dtype=jnp.int32)
    hh, ww = pos // W, pos % W
    dil = ((jnp.abs(hh[:, None] - hh[None, :]) <= HALF)
           & (jnp.abs(ww[:, None] - ww[None, :]) <= HALF)).astype(jnp.bfloat16)
    return w_mat, b_conv2, w_fc3, b_fc2, dil


@jax.jit
def patchup_forward(x, target, packed, key):
    """PatchUpModel(x, target) forward, hook fixed on the 'features' conv."""
    w_mat, b_conv2, w_fc3, b_fc2, dil = packed
    k_perm, k_mask = jax.random.split(key)

    # host-side randomness of the reference: randperm + bernoulli(gamma_adj)
    indices = jax.random.permutation(k_perm, B).astype(jnp.int32)
    mask = jax.random.bernoulli(k_mask, GAMMA_ADJ, (CFEAT, HW)).astype(jnp.bfloat16)

    ta = jax.nn.one_hot(target, NUM_CLASSES, dtype=jnp.float32)   # target_onehot
    tb = ta[indices]                                              # shuffled onehot

    # im2col for the 3x3 / pad-1 conv -> bf16 [K_DIM, B*HW]
    # TODO(synk): fold the im2col gather into the kernel (9 shifted FMAs).
    xp = jnp.pad(x, ((0, 0), (0, 0), (1, 1), (1, 1)))
    cols = [xp[:, :, di:di + H, dj:dj + W] for di in range(3) for dj in range(3)]
    patches = jnp.stack(cols, axis=2).reshape(B, K_RAW, HW)
    patches = jnp.pad(patches, ((0, 0), (0, K_DIM - K_RAW), (0, 0)))
    patches = jnp.transpose(patches, (1, 0, 2)).reshape(K_DIM, B * HW)
    patches = patches.astype(jnp.bfloat16)

    grid_spec = pltpu.PrefetchScalarGridSpec(
        num_scalar_prefetch=1,                       # indices -> SMEM
        grid=(1,),
        in_specs=[
            _full_spec((K_DIM, B * HW)),             # im2col patches   (bf16)
            _full_spec((CFEAT, K_DIM)),              # conv weight      (bf16)
            _full_spec((CFEAT, 1)),                  # conv bias        (f32)
            _full_spec((CFEAT, HW)),                 # bernoulli mask   (bf16)
            _full_spec((HW, HW)),                    # dilation operator(bf16)
            _full_spec((CFEAT, HW, NUM_CLASSES)),    # fc weight        (bf16)
            _full_spec((1, NUM_CLASSES)),            # fc bias          (f32)
            _full_spec((B, NUM_CLASSES)),            # target_a one-hot
            _full_spec((B, NUM_CLASSES)),            # target_b one-hot
        ],
        out_specs=(
            _full_spec((B, NUM_CLASSES)),            # logits
            _full_spec((1, 1)),                      # loss
        ),
        scratch_shapes=[
            pltpu.VMEM((B, CFEAT, HW), jnp.float32),   # feat
            pltpu.VMEM((B, CFEAT, HW), jnp.float32),   # mixed
        ],
    )

    logits, loss = pl.pallas_call(
        _patchup_kernel,
        out_shape=(jax.ShapeDtypeStruct((B, NUM_CLASSES), jnp.float32),
                   jax.ShapeDtypeStruct((1, 1), jnp.float32)),
        grid_spec=grid_spec,
        compiler_params=pltpu.CompilerParams(
            dimension_semantics=("arbitrary",)),
    )(indices, patches, w_mat, b_conv2, mask, dil, w_fc3, b_fc2, ta, tb)

    return logits, loss[0, 0]


if __name__ == "__main__":
    key = jax.random.PRNGKey(0)
    kx, kt, kp, kf = jax.random.split(key, 4)
    x = jax.random.normal(kx, (B, CIN, H, W), jnp.float32)
    target = jax.random.randint(kt, (B,), 0, NUM_CLASSES)
    params = init_params(kp)
    packed = prepare_params(params)      # static packing: once, outside the jit

    out, loss = patchup_forward(x, target, packed, kf)
    jax.block_until_ready((out, loss))
    assert out.shape == (B, NUM_CLASSES)
    assert loss.shape == ()
    assert bool(jnp.isfinite(loss))
    print("KERNEL_OK")
</pallas_src>

<mosaic_0001>
module attributes {stable_mosaic.version = 11 : i64} {
  func.func @_patchup_kernel(%arg0: i32, %arg1: memref<8xi32, #tpu.memory_space<smem>>, %arg2: memref<32x2048xbf16, #tpu.memory_space<vmem>>, %arg3: memref<8x32xbf16, #tpu.memory_space<vmem>>, %arg4: memref<8x1xf32, #tpu.memory_space<vmem>>, %arg5: memref<8x256xbf16, #tpu.memory_space<vmem>>, %arg6: memref<256x256xbf16, #tpu.memory_space<vmem>>, %arg7: memref<8x256x10xbf16, #tpu.memory_space<vmem>>, %arg8: memref<1x10xf32, #tpu.memory_space<vmem>>, %arg9: memref<8x10xf32, #tpu.memory_space<vmem>>, %arg10: memref<8x10xf32, #tpu.memory_space<vmem>>, %arg11: memref<8x10xf32, #tpu.memory_space<vmem>>, %arg12: memref<1x1xf32, #tpu.memory_space<vmem>>, %arg13: memref<8x8x256xf32, #tpu.memory_space<vmem>>, %arg14: memref<8x8x256xf32, #tpu.memory_space<vmem>>) attributes {dimension_semantics = [#tpu.dimension_semantics<arbitrary>], iteration_bounds = array<i64: 1>, scalar_prefetch = 1 : i64, scratch_operands = 2 : i64, tpu.core_type = #tpu.core_type<tc>, window_params = [{pipeline_mode = #tpu.pipeline_mode<synchronous>, transform_indices = @transform_0, window_bounds = array<i64: 32, 2048>}, {pipeline_mode = #tpu.pipeline_mode<synchronous>, transform_indices = @transform_1, window_bounds = array<i64: 8, 32>}, {pipeline_mode = #tpu.pipeline_mode<synchronous>, transform_indices = @transform_2, window_bounds = array<i64: 8, 1>}, {pipeline_mode = #tpu.pipeline_mode<synchronous>, transform_indices = @transform_3, window_bounds = array<i64: 8, 256>}, {pipeline_mode = #tpu.pipeline_mode<synchronous>, transform_indices = @transform_4, window_bounds = array<i64: 256, 256>}, {pipeline_mode = #tpu.pipeline_mode<synchronous>, transform_indices = @transform_5, window_bounds = array<i64: 8, 256, 10>}, {pipeline_mode = #tpu.pipeline_mode<synchronous>, transform_indices = @transform_6, window_bounds = array<i64: 1, 10>}, {pipeline_mode = #tpu.pipeline_mode<synchronous>, transform_indices = @transform_7, window_bounds = array<i64: 8, 10>}, {pipeline_mode = #tpu.pipeline_mode<synchronous>, transform_indices = @transform_8, window_bounds = array<i64: 8, 10>}, {pipeline_mode = #tpu.pipeline_mode<synchronous>, transform_indices = @transform_9, window_bounds = array<i64: 8, 10>}, {pipeline_mode = #tpu.pipeline_mode<synchronous>, transform_indices = @transform_10, window_bounds = array<i64: 1, 1>}]} {
    %c0 = arith.constant 0 : index
    %c0_0 = arith.constant 0 : index
    %0 = vector.load %arg3[%c0, %c0_0] : memref<8x32xbf16, #tpu.memory_space<vmem>>, vector<8x32xbf16>
    %c0_1 = arith.constant 0 : index
    %c0_2 = arith.constant 0 : index
    %1 = vector.load %arg2[%c0_1, %c0_2] : memref<32x2048xbf16, #tpu.memory_space<vmem>>, vector<32x2048xbf16>
    %cst = arith.constant dense<0.000000e+00> : vector<8x2048xf32>
    %2 = tpu.matmul %0, %1, %cst {dimension_numbers = #tpu.dot_dimension_numbers<[1], [0], [0], [1], [0, 0, 1, 1], [], []>} : vector<8x32xbf16>, vector<32x2048xbf16>, vector<8x2048xf32> -> vector<8x2048xf32>
    %c0_3 = arith.constant 0 : index
    %c0_4 = arith.constant 0 : index
    %3 = vector.load %arg4[%c0_3, %c0_4] : memref<8x1xf32, #tpu.memory_space<vmem>>, vector<8x1xf32>
    %4 = vector.broadcast %3 : vector<8x1xf32> to vector<8x2048xf32>
    %5 = arith.addf %2, %4 : vector<8x2048xf32>
    %cst_5 = arith.constant 0.000000e+00 : f32
    %6 = vector.broadcast %cst_5 : f32 to vector<8x2048xf32>
    %7 = arith.maximumf %5, %6 : vector<8x2048xf32>
    %8 = vector.extract_strided_slice %7 {offsets = [0, 0], sizes = [8, 256], strides = [1, 1]} : vector<8x2048xf32> to vector<8x256xf32>
    %c0_6 = arith.constant 0 : index
    %c0_7 = arith.constant 0 : index
    %c0_8 = arith.constant 0 : index
    %9 = vector.load %arg13[%c0_6, %c0_7, %c0_8] : memref<8x8x256xf32, #tpu.memory_space<vmem>>, vector<1x8x256xf32>
    %10 = vector.shape_cast %9 : vector<1x8x256xf32> to vector<8x256xf32>
    %11 = vector.shape_cast %8 : vector<8x256xf32> to vector<1x8x256xf32>
    tpu.vector_store %arg13[%c0_6, %c0_7, %c0_8], %11 {strides = array<i32>} : memref<8x8x256xf32, #tpu.memory_space<vmem>>, vector<1x8x256xf32>,
    %12 = vector.extract_strided_slice %7 {offsets = [0, 256], sizes = [8, 256], strides = [1, 1]} : vector<8x2048xf32> to vector<8x256xf32>
    %c1 = arith.constant 1 : index
    %c0_9 = arith.constant 0 : index
    %c0_10 = arith.constant 0 : index
    %13 = vector.load %arg13[%c1, %c0_9, %c0_10] : memref<8x8x256xf32, #tpu.memory_space<vmem>>, vector<1x8x256xf32>
    %14 = vector.shape_cast %13 : vector<1x8x256xf32> to vector<8x256xf32>
    %15 = vector.shape_cast %12 : vector<8x256xf32> to vector<1x8x256xf32>
    tpu.vector_store %arg13[%c1, %c0_9, %c0_10], %15 {strides = array<i32>} : memref<8x8x256xf32, #tpu.memory_space<vmem>>, vector<1x8x256xf32>,
    %16 = vector.extract_strided_slice %7 {offsets = [0, 512], sizes = [8, 256], strides = [1, 1]} : vector<8x2048xf32> to vector<8x256xf32>
    %c2 = arith.constant 2 : index
    %c0_11 = arith.constant 0 : index
    %c0_12 = arith.constant 0 : index
    %17 = vector.load %arg13[%c2, %c0_11, %c0_12] : memref<8x8x256xf32, #tpu.memory_space<vmem>>, vector<1x8x256xf32>
    %18 = vector.shape_cast %17 : vector<1x8x256xf32> to vector<8x256xf32>
    %19 = vector.shape_cast %16 : vector<8x256xf32> to vector<1x8x256xf32>
    tpu.vector_store %arg13[%c2, %c0_11, %c0_12], %19 {strides = array<i32>} : memref<8x8x256xf32, #tpu.memory_space<vmem>>, vector<1x8x256xf32>,
    %20 = vector.extract_strided_slice %7 {offsets = [0, 768], sizes = [8, 256], strides = [1, 1]} : vector<8x2048xf32> to vector<8x256xf32>
    %c3 = arith.constant 3 : index
    %c0_13 = arith.constant 0 : index
    %c0_14 = arith.constant 0 : index
    %21 = vector.load %arg13[%c3, %c0_13, %c0_14] : memref<8x8x256xf32, #tpu.memory_space<vmem>>, vector<1x8x256xf32>
    %22 = vector.shape_cast %21 : vector<1x8x256xf32> to vector<8x256xf32>
    %23 = vector.shape_cast %20 : vector<8x256xf32> to vector<1x8x256xf32>
    tpu.vector_store %arg13[%c3, %c0_13, %c0_14], %23 {strides = array<i32>} : memref<8x8x256xf32, #tpu.memory_space<vmem>>, vector<1x8x256xf32>,
    %24 = vector.extract_strided_slice %7 {offsets = [0, 1024], sizes = [8, 256], strides = [1, 1]} : vector<8x2048xf32> to vector<8x256xf32>
    %c4 = arith.constant 4 : index
    %c0_15 = arith.constant 0 : index
    %c0_16 = arith.constant 0 : index
    %25 = vector.load %arg13[%c4, %c0_15, %c0_16] : memref<8x8x256xf32, #tpu.memory_space<vmem>>, vector<1x8x256xf32>
    %26 = vector.shape_cast %25 : vector<1x8x256xf32> to vector<8x256xf32>
    %27 = vector.shape_cast %24 : vector<8x256xf32> to vector<1x8x256xf32>
    tpu.vector_store %arg13[%c4, %c0_15, %c0_16], %27 {strides = array<i32>} : memref<8x8x256xf32, #tpu.memory_space<vmem>>, vector<1x8x256xf32>,
    %28 = vector.extract_strided_slice %7 {offsets = [0, 1280], sizes = [8, 256], strides = [1, 1]} : vector<8x2048xf32> to vector<8x256xf32>
    %c5 = arith.constant 5 : index
    %c0_17 = arith.constant 0 : index
    %c0_18 = arith.constant 0 : index
    %29 = vector.load %arg13[%c5, %c0_17, %c0_18] : memref<8x8x256xf32, #tpu.memory_space<vmem>>, vector<1x8x256xf32>
    %30 = vector.shape_cast %29 : vector<1x8x256xf32> to vector<8x256xf32>
    %31 = vector.shape_cast %28 : vector<8x256xf32> to vector<1x8x256xf32>
    tpu.vector_store %arg13[%c5, %c0_17, %c0_18], %31 {strides = array<i32>} : memref<8x8x256xf32, #tpu.memory_space<vmem>>, vector<1x8x256xf32>,
    %32 = vector.extract_strided_slice %7 {offsets = [0, 1536], sizes = [8, 256], strides = [1, 1]} : vector<8x2048xf32> to vector<8x256xf32>
    %c6 = arith.constant 6 : index
    %c0_19 = arith.constant 0 : index
    %c0_20 = arith.constant 0 : index
    %33 = vector.load %arg13[%c6, %c0_19, %c0_20] : memref<8x8x256xf32, #tpu.memory_space<vmem>>, vector<1x8x256xf32>
    %34 = vector.shape_cast %33 : vector<1x8x256xf32> to vector<8x256xf32>
    %35 = vector.shape_cast %32 : vector<8x256xf32> to vector<1x8x256xf32>
    tpu.vector_store %arg13[%c6, %c0_19, %c0_20], %35 {strides = array<i32>} : memref<8x8x256xf32, #tpu.memory_space<vmem>>, vector<1x8x256xf32>,
    %36 = vector.extract_strided_slice %7 {offsets = [0, 1792], sizes = [8, 256], strides = [1, 1]} : vector<8x2048xf32> to vector<8x256xf32>
    %c7 = arith.constant 7 : index
    %c0_21 = arith.constant 0 : index
    %c0_22 = arith.constant 0 : index
    %37 = vector.load %arg13[%c7, %c0_21, %c0_22] : memref<8x8x256xf32, #tpu.memory_space<vmem>>, vector<1x8x256xf32>
    %38 = vector.shape_cast %37 : vector<1x8x256xf32> to vector<8x256xf32>
    %39 = vector.shape_cast %36 : vector<8x256xf32> to vector<1x8x256xf32>
    tpu.vector_store %arg13[%c7, %c0_21, %c0_22], %39 {strides = array<i32>} : memref<8x8x256xf32, #tpu.memory_space<vmem>>, vector<1x8x256xf32>,
    %c0_23 = arith.constant 0 : index
    %c0_24 = arith.constant 0 : index
    %40 = vector.load %arg5[%c0_23, %c0_24] : memref<8x256xbf16, #tpu.memory_space<vmem>>, vector<8x256xbf16>
    %c0_25 = arith.constant 0 : index
    %c0_26 = arith.constant 0 : index
    %41 = vector.load %arg6[%c0_25, %c0_26] : memref<256x256xbf16, #tpu.memory_space<vmem>>, vector<256x256xbf16>
    %cst_27 = arith.constant dense<0.000000e+00> : vector<8x256xf32>
    %42 = tpu.matmul %40, %41, %cst_27 {dimension_numbers = #tpu.dot_dimension_numbers<[1], [0], [0], [1], [0, 0, 1, 1], [], []>} : vector<8x256xbf16>, vector<256x256xbf16>, vector<8x256xf32> -> vector<8x256xf32>
    %cst_28 = arith.constant 5.000000e-01 : f32
    %43 = vector.broadcast %cst_28 : f32 to vector<8x256xf32>
    %44 = arith.cmpf ogt, %42, %43 : vector<8x256xf32>
    %45 = arith.extui %44 : vector<8x256xi1> to vector<8x256xi32>
    %46 = arith.sitofp %45 : vector<8x256xi32> to vector<8x256xf32>
    %cst_29 = arith.constant 1.000000e+00 : f32
    %47 = vector.broadcast %cst_29 : f32 to vector<8x256xf32>
    %48 = arith.subf %47, %46 : vector<8x256xf32>
    %49 = vector.shape_cast %46 : vector<8x256xf32> to vector<1x8x256xf32>
    %cst_30 = arith.constant dense<0.000000e+00> : vector<1xf32>
    %50 = vector.multi_reduction <add>, %49, %cst_30 [1, 2] : vector<1x8x256xf32> to vector<1xf32>
    %51 = vector.shape_cast %50 : vector<1xf32> to vector<1x1x1xf32>
    %52 = vector.extract %51[0, 0, 0] : f32 from vector<1x1x1xf32>
    %cst_31 = arith.constant 2.048000e+03 : f32
    %53 = arith.subf %cst_31, %52 : f32
    %cst_32 = arith.constant 2.048000e+03 : f32
    %54 = arith.divf %53, %cst_32 : f32
    %c0_33 = arith.constant 0 : index
    %55 = memref.load %arg1[%c0_33] : memref<8xi32, #tpu.memory_space<smem>>
    %56 = arith.index_cast %55 : i32 to index
    %c0_34 = arith.constant 0 : index
    %c0_35 = arith.constant 0 : index
    %57 = vector.load %arg13[%56, %c0_34, %c0_35] : memref<8x8x256xf32, #tpu.memory_space<vmem>>, vector<1x8x256xf32>
    %58 = vector.shape_cast %57 : vector<1x8x256xf32> to vector<8x256xf32>
    %c0_36 = arith.constant 0 : index
    %c0_37 = arith.constant 0 : index
    %c0_38 = arith.constant 0 : index
    %59 = vector.load %arg13[%c0_36, %c0_37, %c0_38] : memref<8x8x256xf32, #tpu.memory_space<vmem>>, vector<1x8x256xf32>
    %60 = vector.shape_cast %59 : vector<1x8x256xf32> to vector<8x256xf32>
    %61 = arith.mulf %48, %60 : vector<8x256xf32>
    %62 = arith.mulf %46, %58 : vector<8x256xf32>
    %63 = arith.addf %61, %62 : vector<8x256xf32>
    %c0_39 = arith.constant 0 : index
    %c0_40 = arith.constant 0 : index
    %c0_41 = arith.constant 0 : index
    %64 = vector.load %arg14[%c0_39, %c0_40, %c0_41] : memref<8x8x256xf32, #tpu.memory_space<vmem>>, vector<1x8x256xf32>
    %65 = vector.shape_cast %64 : vector<1x8x256xf32> to vector<8x256xf32>
    %66 = vector.shape_cast %63 : vector<8x256xf32> to vector<1x8x256xf32>
    tpu.vector_store %arg14[%c0_39, %c0_40, %c0_41], %66 {strides = array<i32>} : memref<8x8x256xf32, #tpu.memory_space<vmem>>, vector<1x8x256xf32>,
    %c1_42 = arith.constant 1 : index
    %67 = memref.load %arg1[%c1_42] : memref<8xi32, #tpu.memory_space<smem>>
    %68 = arith.index_cast %67 : i32 to index
    %c0_43 = arith.constant 0 : index
    %c0_44 = arith.constant 0 : index
    %69 = vector.load %arg13[%68, %c0_43, %c0_44] : memref<8x8x256xf32, #tpu.memory_space<vmem>>, vector<1x8x256xf32>
    %70 = vector.shape_cast %69 : vector<1x8x256xf32> to vector<8x256xf32>
    %c1_45 = arith.constant 1 : index
    %c0_46 = arith.constant 0 : index
    %c0_47 = arith.constant 0 : index
    %71 = vector.load %arg13[%c1_45, %c0_46, %c0_47] : memref<8x8x256xf32, #tpu.memory_space<vmem>>, vector<1x8x256xf32>
    %72 = vector.shape_cast %71 : vector<1x8x256xf32> to vector<8x256xf32>
    %73 = arith.mulf %48, %72 : vector<8x256xf32>
    %74 = arith.mulf %46, %70 : vector<8x256xf32>
    %75 = arith.addf %73, %74 : vector<8x256xf32>
    %c1_48 = arith.constant 1 : index
    %c0_49 = arith.constant 0 : index
    %c0_50 = arith.constant 0 : index
    %76 = vector.load %arg14[%c1_48, %c0_49, %c0_50] : memref<8x8x256xf32, #tpu.memory_space<vmem>>, vector<1x8x256xf32>
    %77 = vector.shape_cast %76 : vector<1x8x256xf32> to vector<8x256xf32>
    %78 = vector.shape_cast %75 : vector<8x256xf32> to vector<1x8x256xf32>
    tpu.vector_store %arg14[%c1_48, %c0_49, %c0_50], %78 {strides = array<i32>} : memref<8x8x256xf32, #tpu.memory_space<vmem>>, vector<1x8x256xf32>,
    %c2_51 = arith.constant 2 : index
    %79 = memref.load %arg1[%c2_51] : memref<8xi32, #tpu.memory_space<smem>>
    %80 = arith.index_cast %79 : i32 to index
    %c0_52 = arith.constant 0 : index
    %c0_53 = arith.constant 0 : index
    %81 = vector.load %arg13[%80, %c0_52, %c0_53] : memref<8x8x256xf32, #tpu.memory_space<vmem>>, vector<1x8x256xf32>
    %82 = vector.shape_cast %81 : vector<1x8x256xf32> to vector<8x256xf32>
    %c2_54 = arith.constant 2 : index
    %c0_55 = arith.constant 0 : index
    %c0_56 = arith.constant 0 : index
    %83 = vector.load %arg13[%c2_54, %c0_55, %c0_56] : memref<8x8x256xf32, #tpu.memory_space<vmem>>, vector<1x8x256xf32>
    %84 = vector.shape_cast %83 : vector<1x8x256xf32> to vector<8x256xf32>
    %85 = arith.mulf %48, %84 : vector<8x256xf32>
    %86 = arith.mulf %46, %82 : vector<8x256xf32>
    %87 = arith.addf %85, %86 : vector<8x256xf32>
    %c2_57 = arith.constant 2 : index
    %c0_58 = arith.constant 0 : index
    %c0_59 = arith.constant 0 : index
    %88 = vector.load %arg14[%c2_57, %c0_58, %c0_59] : memref<8x8x256xf32, #tpu.memory_space<vmem>>, vector<1x8x256xf32>
    %89 = vector.shape_cast %88 : vector<1x8x256xf32> to vector<8x256xf32>
    %90 = vector.shape_cast %87 : vector<8x256xf32> to vector<1x8x256xf32>
    tpu.vector_store %arg14[%c2_57, %c0_58, %c0_59], %90 {strides = array<i32>} : memref<8x8x256xf32, #tpu.memory_space<vmem>>, vector<1x8x256xf32>,
    %c3_60 = arith.constant 3 : index
    %91 = memref.load %arg1[%c3_60] : memref<8xi32, #tpu.memory_space<smem>>
    %92 = arith.index_cast %91 : i32 to index
    %c0_61 = arith.constant 0 : index
    %c0_62 = arith.constant 0 : index
    %93 = vector.load %arg13[%92, %c0_61, %c0_62] : memref<8x8x256xf32, #tpu.memory_space<vmem>>, vector<1x8x256xf32>
    %94 = vector.shape_cast %93 : vector<1x8x256xf32> to vector<8x256xf32>
    %c3_63 = arith.constant 3 : index
    %c0_64 = arith.constant 0 : index
    %c0_65 = arith.constant 0 : index
    %95 = vector.load %arg13[%c3_63, %c0_64, %c0_65] : memref<8x8x256xf32, #tpu.memory_space<vmem>>, vector<1x8x256xf32>
    %96 = vector.shape_cast %95 : vector<1x8x256xf32> to vector<8x256xf32>
    %97 = arith.mulf %48, %96 : vector<8x256xf32>
    %98 = arith.mulf %46, %94 : vector<8x256xf32>
    %99 = arith.addf %97, %98 : vector<8x256xf32>
    %c3_66 = arith.constant 3 : index
    %c0_67 = arith.constant 0 : index
    %c0_68 = arith.constant 0 : index
    %100 = vector.load %arg14[%c3_66, %c0_67, %c0_68] : memref<8x8x256xf32, #tpu.memory_space<vmem>>, vector<1x8x256xf32>
    %101 = vector.shape_cast %100 : vector<1x8x256xf32> to vector<8x256xf32>
    %102 = vector.shape_cast %99 : vector<8x256xf32> to vector<1x8x256xf32>
    tpu.vector_store %arg14[%c3_66, %c0_67, %c0_68], %102 {strides = array<i32>} : memref<8x8x256xf32, #tpu.memory_space<vmem>>, vector<1x8x256xf32>,
    %c4_69 = arith.constant 4 : index
    %103 = memref.load %arg1[%c4_69] : memref<8xi32, #tpu.memory_space<smem>>
    %104 = arith.index_cast %103 : i32 to index
    %c0_70 = arith.constant 0 : index
    %c0_71 = arith.constant 0 : index
    %105 = vector.load %arg13[%104, %c0_70, %c0_71] : memref<8x8x256xf32, #tpu.memory_space<vmem>>, vector<1x8x256xf32>
    %106 = vector.shape_cast %105 : vector<1x8x256xf32> to vector<8x256xf32>
    %c4_72 = arith.constant 4 : index
    %c0_73 = arith.constant 0 : index
    %c0_74 = arith.constant 0 : index
    %107 = vector.load %arg13[%c4_72, %c0_73, %c0_74] : memref<8x8x256xf32, #tpu.memory_space<vmem>>, vector<1x8x256xf32>
    %108 = vector.shape_cast %107 : vector<1x8x256xf32> to vector<8x256xf32>
    %109 = arith.mulf %48, %108 : vector<8x256xf32>
    %110 = arith.mulf %46, %106 : vector<8x256xf32>
    %111 = arith.addf %109, %110 : vector<8x256xf32>
    %c4_75 = arith.constant 4 : index
    %c0_76 = arith.constant 0 : index
    %c0_77 = arith.constant 0 : index
    %112 = vector.load %arg14[%c4_75, %c0_76, %c0_77] : memref<8x8x256xf32, #tpu.memory_space<vmem>>, vector<1x8x256xf32>
    %113 = vector.shape_cast %112 : vector<1x8x256xf32> to vector<8x256xf32>
    %114 = vector.shape_cast %111 : vector<8x256xf32> to vector<1x8x256xf32>
    tpu.vector_store %arg14[%c4_75, %c0_76, %c0_77], %114 {strides = array<i32>} : memref<8x8x256xf32, #tpu.memory_space<vmem>>, vector<1x8x256xf32>,
    %c5_78 = arith.constant 5 : index
    %115 = memref.load %arg1[%c5_78] : memref<8xi32, #tpu.memory_space<smem>>
    %116 = arith.index_cast %115 : i32 to index
    %c0_79 = arith.constant 0 : index
    %c0_80 = arith.constant 0 : index
    %117 = vector.load %arg13[%116, %c0_79, %c0_80] : memref<8x8x256xf32, #tpu.memory_space<vmem>>, vector<1x8x256xf32>
    %118 = vector.shape_cast %117 : vector<1x8x256xf32> to vector<8x256xf32>
    %c5_81 = arith.constant 5 : index
    %c0_82 = arith.constant 0 : index
    %c0_83 = arith.constant 0 : index
    %119 = vector.load %arg13[%c5_81, %c0_82, %c0_83] : memref<8x8x256xf32, #tpu.memory_space<vmem>>, vector<1x8x256xf32>
    %120 = vector.shape_cast %119 : vector<1x8x256xf32> to vector<8x256xf32>
    %121 = arith.mulf %48, %120 : vector<8x256xf32>
    %122 = arith.mulf %46, %118 : vector<8x256xf32>
    %123 = arith.addf %121, %122 : vector<8x256xf32>
    %c5_84 = arith.constant 5 : index
    %c0_85 = arith.constant 0 : index
    %c0_86 = arith.constant 0 : index
    %124 = vector.load %arg14[%c5_84, %c0_85, %c0_86] : memref<8x8x256xf32, #tpu.memory_space<vmem>>, vector<1x8x256xf32>
    %125 = vector.shape_cast %124 : vector<1x8x256xf32> to vector<8x256xf32>
    %126 = vector.shape_cast %123 : vector<8x256xf32> to vector<1x8x256xf32>
    tpu.vector_store %arg14[%c5_84, %c0_85, %c0_86], %126 {strides = array<i32>} : memref<8x8x256xf32, #tpu.memory_space<vmem>>, vector<1x8x256xf32>,
    %c6_87 = arith.constant 6 : index
    %127 = memref.load %arg1[%c6_87] : memref<8xi32, #tpu.memory_space<smem>>
    %128 = arith.index_cast %127 : i32 to index
    %c0_88 = arith.constant 0 : index
    %c0_89 = arith.constant 0 : index
    %129 = vector.load %arg13[%128, %c0_88, %c0_89] : memref<8x8x256xf32, #tpu.memory_space<vmem>>, vector<1x8x256xf32>
    %130 = vector.shape_cast %129 : vector<1x8x256xf32> to vector<8x256xf32>
    %c6_90 = arith.constant 6 : index
    %c0_91 = arith.constant 0 : index
    %c0_92 = arith.constant 0 : index
    %131 = vector.load %arg13[%c6_90, %c0_91, %c0_92] : memref<8x8x256xf32, #tpu.memory_space<vmem>>, vector<1x8x256xf32>
    %132 = vector.shape_cast %131 : vector<1x8x256xf32> to vector<8x256xf32>
    %133 = arith.mulf %48, %132 : vector<8x256xf32>
    %134 = arith.mulf %46, %130 : vector<8x256xf32>
    %135 = arith.addf %133, %134 : vector<8x256xf32>
    %c6_93 = arith.constant 6 : index
    %c0_94 = arith.constant 0 : index
    %c0_95 = arith.constant 0 : index
    %136 = vector.load %arg14[%c6_93, %c0_94, %c0_95] : memref<8x8x256xf32, #tpu.memory_space<vmem>>, vector<1x8x256xf32>
    %137 = vector.shape_cast %136 : vector<1x8x256xf32> to vector<8x256xf32>
    %138 = vector.shape_cast %135 : vector<8x256xf32> to vector<1x8x256xf32>
    tpu.vector_store %arg14[%c6_93, %c0_94, %c0_95], %138 {strides = array<i32>} : memref<8x8x256xf32, #tpu.memory_space<vmem>>, vector<1x8x256xf32>,
    %c7_96 = arith.constant 7 : index
    %139 = memref.load %arg1[%c7_96] : memref<8xi32, #tpu.memory_space<smem>>
    %140 = arith.index_cast %139 : i32 to index
    %c0_97 = arith.constant 0 : index
    %c0_98 = arith.constant 0 : index
    %141 = vector.load %arg13[%140, %c0_97, %c0_98] : memref<8x8x256xf32, #tpu.memory_space<vmem>>, vector<1x8x256xf32>
    %142 = vector.shape_cast %141 : vector<1x8x256xf32> to vector<8x256xf32>
    %c7_99 = arith.constant 7 : index
    %c0_100 = arith.constant 0 : index
    %c0_101 = arith.constant 0 : index
    %143 = vector.load %arg13[%c7_99, %c0_100, %c0_101] : memref<8x8x256xf32, #tpu.memory_space<vmem>>, vector<1x8x256xf32>
    %144 = vector.shape_cast %143 : vector<1x8x256xf32> to vector<8x256xf32>
    %145 = arith.mulf %48, %144 : vector<8x256xf32>
    %146 = arith.mulf %46, %142 : vector<8x256xf32>
    %147 = arith.addf %145, %146 : vector<8x256xf32>
    %c7_102 = arith.constant 7 : index
    %c0_103 = arith.constant 0 : index
    %c0_104 = arith.constant 0 : index
    %148 = vector.load %arg14[%c7_102, %c0_103, %c0_104] : memref<8x8x256xf32, #tpu.memory_space<vmem>>, vector<1x8x256xf32>
    %149 = vector.shape_cast %148 : vector<1x8x256xf32> to vector<8x256xf32>
    %150 = vector.shape_cast %147 : vector<8x256xf32> to vector<1x8x256xf32>
    tpu.vector_store %arg14[%c7_102, %c0_103, %c0_104], %150 {strides = array<i32>} : memref<8x8x256xf32, #tpu.memory_space<vmem>>, vector<1x8x256xf32>,
    %c0_105 = arith.constant 0 : index
    %c0_106 = arith.constant 0 : index
    %151 = vector.load %arg8[%c0_105, %c0_106] : memref<1x10xf32, #tpu.memory_space<vmem>>, vector<1x10xf32>
    %152 = vector.shape_cast %151 : vector<1x10xf32> to vector<1x10xf32>
    %153 = vector.broadcast %152 : vector<1x10xf32> to vector<8x10xf32>
    %c0_107 = arith.constant 0 : index
    %c0_108 = arith.constant 0 : index
    %c0_109 = arith.constant 0 : index
    %154 = vector.load %arg14[%c0_107, %c0_108, %c0_109] : memref<8x8x256xf32, #tpu.memory_space<vmem>>, vector<8x1x256xf32>
    %155 = vector.shape_cast %154 : vector<8x1x256xf32> to vector<8x256xf32>
    %156 = arith.truncf %155 : vector<8x256xf32> to vector<8x256xbf16>
    %c0_110 = arith.constant 0 : index
    %c0_111 = arith.constant 0 : index
    %c0_112 = arith.constant 0 : index
    %157 = vector.load %arg7[%c0_110, %c0_111, %c0_112] : memref<8x256x10xbf16, #tpu.memory_space<vmem>>, vector<1x256x10xbf16>
    %158 = vector.shape_cast %157 : vector<1x256x10xbf16> to vector<256x10xbf16>
    %cst_113 = arith.constant dense<0.000000e+00> : vector<8x10xf32>
    %159 = tpu.matmul %156, %158, %cst_113 {dimension_numbers = #tpu.dot_dimension_numbers<[1], [0], [0], [1], [0, 0, 1, 1], [], []>} : vector<8x256xbf16>, vector<256x10xbf16>, vector<8x10xf32> -> vector<8x10xf32>
    %160 = arith.addf %153, %159 : vector<8x10xf32>
    %c0_114 = arith.constant 0 : index
    %c1_115 = arith.constant 1 : index
    %c0_116 = arith.constant 0 : index
    %161 = vector.load %arg14[%c0_114, %c1_115, %c0_116] : memref<8x8x256xf32, #tpu.memory_space<vmem>>, vector<8x1x256xf32>
    %162 = vector.shape_cast %161 : vector<8x1x256xf32> to vector<8x256xf32>
    %163 = arith.truncf %162 : vector<8x256xf32> to vector<8x256xbf16>
    %c1_117 = arith.constant 1 : index
    %c0_118 = arith.constant 0 : index
    %c0_119 = arith.constant 0 : index
    %164 = vector.load %arg7[%c1_117, %c0_118, %c0_119] : memref<8x256x10xbf16, #tpu.memory_space<vmem>>, vector<1x256x10xbf16>
    %165 = vector.shape_cast %164 : vector<1x256x10xbf16> to vector<256x10xbf16>
    %cst_120 = arith.constant dense<0.000000e+00> : vector<8x10xf32>
    %166 = tpu.matmul %163, %165, %cst_120 {dimension_numbers = #tpu.dot_dimension_numbers<[1], [0], [0], [1], [0, 0, 1, 1], [], []>} : vector<8x256xbf16>, vector<256x10xbf16>, vector<8x10xf32> -> vector<8x10xf32>
    %167 = arith.addf %160, %166 : vector<8x10xf32>
    %c0_121 = arith.constant 0 : index
    %c2_122 = arith.constant 2 : index
    %c0_123 = arith.constant 0 : index
    %168 = vector.load %arg14[%c0_121, %c2_122, %c0_123] : memref<8x8x256xf32, #tpu.memory_space<vmem>>, vector<8x1x256xf32>
    %169 = vector.shape_cast %168 : vector<8x1x256xf32> to vector<8x256xf32>
    %170 = arith.truncf %169 : vector<8x256xf32> to vector<8x256xbf16>
    %c2_124 = arith.constant 2 : index
    %c0_125 = arith.constant 0 : index
    %c0_126 = arith.constant 0 : index
    %171 = vector.load %arg7[%c2_124, %c0_125, %c0_126] : memref<8x256x10xbf16, #tpu.memory_space<vmem>>, vector<1x256x10xbf16>
    %172 = vector.shape_cast %171 : vector<1x256x10xbf16> to vector<256x10xbf16>
    %cst_127 = arith.constant dense<0.000000e+00> : vector<8x10xf32>
    %173 = tpu.matmul %170, %172, %cst_127 {dimension_numbers = #tpu.dot_dimension_numbers<[1], [0], [0], [1], [0, 0, 1, 1], [], []>} : vector<8x256xbf16>, vector<256x10xbf16>, vector<8x10xf32> -> vector<8x10xf32>
    %174 = arith.addf %167, %173 : vector<8x10xf32>
    %c0_128 = arith.constant 0 : index
    %c3_129 = arith.constant 3 : index
    %c0_130 = arith.constant 0 : index
    %175 = vector.load %arg14[%c0_128, %c3_129, %c0_130] : memref<8x8x256xf32, #tpu.memory_space<vmem>>, vector<8x1x256xf32>
    %176 = vector.shape_cast %175 : vector<8x1x256xf32> to vector<8x256xf32>
    %177 = arith.truncf %176 : vector<8x256xf32> to vector<8x256xbf16>
    %c3_131 = arith.constant 3 : index
    %c0_132 = arith.constant 0 : index
    %c0_133 = arith.constant 0 : index
    %178 = vector.load %arg7[%c3_131, %c0_132, %c0_133] : memref<8x256x10xbf16, #tpu.memory_space<vmem>>, vector<1x256x10xbf16>
    %179 = vector.shape_cast %178 : vector<1x256x10xbf16> to vector<256x10xbf16>
    %cst_134 = arith.constant dense<0.000000e+00> : vector<8x10xf32>
    %180 = tpu.matmul %177, %179, %cst_134 {dimension_numbers = #tpu.dot_dimension_numbers<[1], [0], [0], [1], [0, 0, 1, 1], [], []>} : vector<8x256xbf16>, vector<256x10xbf16>, vector<8x10xf32> -> vector<8x10xf32>
    %181 = arith.addf %174, %180 : vector<8x10xf32>
    %c0_135 = arith.constant 0 : index
    %c4_136 = arith.constant 4 : index
    %c0_137 = arith.constant 0 : index
    %182 = vector.load %arg14[%c0_135, %c4_136, %c0_137] : memref<8x8x256xf32, #tpu.memory_space<vmem>>, vector<8x1x256xf32>
    %183 = vector.shape_cast %182 : vector<8x1x256xf32> to vector<8x256xf32>
    %184 = arith.truncf %183 : vector<8x256xf32> to vector<8x256xbf16>
    %c4_138 = arith.constant 4 : index
    %c0_139 = arith.constant 0 : index
    %c0_140 = arith.constant 0 : index
    %185 = vector.load %arg7[%c4_138, %c0_139, %c0_140] : memref<8x256x10xbf16, #tpu.memory_space<vmem>>, vector<1x256x10xbf16>
    %186 = vector.shape_cast %185 : vector<1x256x10xbf16> to vector<256x10xbf16>
    %cst_141 = arith.constant dense<0.000000e+00> : vector<8x10xf32>
    %187 = tpu.matmul %184, %186, %cst_141 {dimension_numbers = #tpu.dot_dimension_numbers<[1], [0], [0], [1], [0, 0, 1, 1], [], []>} : vector<8x256xbf16>, vector<256x10xbf16>, vector<8x10xf32> -> vector<8x10xf32>
    %188 = arith.addf %181, %187 : vector<8x10xf32>
    %c0_142 = arith.constant 0 : index
    %c5_143 = arith.constant 5 : index
    %c0_144 = arith.constant 0 : index
    %189 = vector.load %arg14[%c0_142, %c5_143, %c0_144] : memref<8x8x256xf32, #tpu.memory_space<vmem>>, vector<8x1x256xf32>
    %190 = vector.shape_cast %189 : vector<8x1x256xf32> to vector<8x256xf32>
    %191 = arith.truncf %190 : vector<8x256xf32> to vector<8x256xbf16>
    %c5_145 = arith.constant 5 : index
    %c0_146 = arith.constant 0 : index
    %c0_147 = arith.constant 0 : index
    %192 = vector.load %arg7[%c5_145, %c0_146, %c0_147] : memref<8x256x10xbf16, #tpu.memory_space<vmem>>, vector<1x256x10xbf16>
    %193 = vector.shape_cast %192 : vector<1x256x10xbf16> to vector<256x10xbf16>
    %cst_148 = arith.constant dense<0.000000e+00> : vector<8x10xf32>
    %194 = tpu.matmul %191, %193, %cst_148 {dimension_numbers = #tpu.dot_dimension_numbers<[1], [0], [0], [1], [0, 0, 1, 1], [], []>} : vector<8x256xbf16>, vector<256x10xbf16>, vector<8x10xf32> -> vector<8x10xf32>
    %195 = arith.addf %188, %194 : vector<8x10xf32>
    %c0_149 = arith.constant 0 : index
    %c6_150 = arith.constant 6 : index
    %c0_151 = arith.constant 0 : index
    %196 = vector.load %arg14[%c0_149, %c6_150, %c0_151] : memref<8x8x256xf32, #tpu.memory_space<vmem>>, vector<8x1x256xf32>
    %197 = vector.shape_cast %196 : vector<8x1x256xf32> to vector<8x256xf32>
    %198 = arith.truncf %197 : vector<8x256xf32> to vector<8x256xbf16>
    %c6_152 = arith.constant 6 : index
    %c0_153 = arith.constant 0 : index
    %c0_154 = arith.constant 0 : index
    %199 = vector.load %arg7[%c6_152, %c0_153, %c0_154] : memref<8x256x10xbf16, #tpu.memory_space<vmem>>, vector<1x256x10xbf16>
    %200 = vector.shape_cast %199 : vector<1x256x10xbf16> to vector<256x10xbf16>
    %cst_155 = arith.constant dense<0.000000e+00> : vector<8x10xf32>
    %201 = tpu.matmul %198, %200, %cst_155 {dimension_numbers = #tpu.dot_dimension_numbers<[1], [0], [0], [1], [0, 0, 1, 1], [], []>} : vector<8x256xbf16>, vector<256x10xbf16>, vector<8x10xf32> -> vector<8x10xf32>
    %202 = arith.addf %195, %201 : vector<8x10xf32>
    %c0_156 = arith.constant 0 : index
    %c7_157 = arith.constant 7 : index
    %c0_158 = arith.constant 0 : index
    %203 = vector.load %arg14[%c0_156, %c7_157, %c0_158] : memref<8x8x256xf32, #tpu.memory_space<vmem>>, vector<8x1x256xf32>
    %204 = vector.shape_cast %203 : vector<8x1x256xf32> to vector<8x256xf32>
    %205 = arith.truncf %204 : vector<8x256xf32> to vector<8x256xbf16>
    %c7_159 = arith.constant 7 : index
    %c0_160 = arith.constant 0 : index
    %c0_161 = arith.constant 0 : index
    %206 = vector.load %arg7[%c7_159, %c0_160, %c0_161] : memref<8x256x10xbf16, #tpu.memory_space<vmem>>, vector<1x256x10xbf16>
    %207 = vector.shape_cast %206 : vector<1x256x10xbf16> to vector<256x10xbf16>
    %cst_162 = arith.constant dense<0.000000e+00> : vector<8x10xf32>
    %208 = tpu.matmul %205, %207, %cst_162 {dimension_numbers = #tpu.dot_dimension_numbers<[1], [0], [0], [1], [0, 0, 1, 1], [], []>} : vector<8x256xbf16>, vector<256x10xbf16>, vector<8x10xf32> -> vector<8x10xf32>
    %209 = arith.addf %202, %208 : vector<8x10xf32>
    %c0_163 = arith.constant 0 : index
    %c0_164 = arith.constant 0 : index
    %210 = vector.load %arg11[%c0_163, %c0_164] : memref<8x10xf32, #tpu.memory_space<vmem>>, vector<8x10xf32>
    tpu.vector_store %arg11[%c0_163, %c0_164], %209 {strides = array<i32>} : memref<8x10xf32, #tpu.memory_space<vmem>>, vector<8x10xf32>,
    %cst_165 = arith.constant dense<0xFF800000> : vector<8xf32>
    %211 = vector.multi_reduction <maximumf>, %209, %cst_165 [1] : vector<8x10xf32> to vector<8xf32>
    %212 = vector.shape_cast %211 : vector<8xf32> to vector<8x1xf32>
    %213 = vector.broadcast %212 : vector<8x1xf32> to vector<8x10xf32>
    %214 = arith.subf %209, %213 : vector<8x10xf32>
    %215 = math.exp %214 : vector<8x10xf32>
    %cst_166 = arith.constant dense<0.000000e+00> : vector<8xf32>
    %216 = vector.multi_reduction <add>, %215, %cst_166 [1] : vector<8x10xf32> to vector<8xf32>
    %217 = vector.shape_cast %216 : vector<8xf32> to vector<8x1xf32>
    %218 = vector.broadcast %217 : vector<8x1xf32> to vector<8x10xf32>
    %219 = arith.divf %215, %218 : vector<8x10xf32>
    %220 = vector.broadcast %212 : vector<8x1xf32> to vector<8x10xf32>
    %221 = arith.subf %209, %220 : vector<8x10xf32>
    %222 = math.log %217 : vector<8x1xf32>
    %223 = vector.broadcast %222 : vector<8x1xf32> to vector<8x10xf32>
    %224 = arith.subf %221, %223 : vector<8x10xf32>
    %cst_167 = arith.constant -1.000000e+02 : f32
    %225 = vector.broadcast %cst_167 : f32 to vector<8x10xf32>
    %226 = arith.maximumf %224, %225 : vector<8x10xf32>
    %cst_168 = arith.constant 1.000000e+00 : f32
    %227 = vector.broadcast %cst_168 : f32 to vector<8x10xf32>
    %228 = arith.subf %227, %219 : vector<8x10xf32>
    %229 = math.log %228 : vector<8x10xf32>
    %cst_169 = arith.constant -1.000000e+02 : f32
    %230 = vector.broadcast %cst_169 : f32 to vector<8x10xf32>
    %231 = arith.maximumf %229, %230 : vector<8x10xf32>
    %c0_170 = arith.constant 0 : index
    %c0_171 = arith.constant 0 : index
    %232 = vector.load %arg9[%c0_170, %c0_171] : memref<8x10xf32, #tpu.memory_space<vmem>>, vector<8x10xf32>
    %c0_172 = arith.constant 0 : index
    %c0_173 = arith.constant 0 : index
    %233 = vector.load %arg10[%c0_172, %c0_173] : memref<8x10xf32, #tpu.memory_space<vmem>>, vector<8x10xf32>
    %234 = vector.broadcast %54 : f32 to vector<8x10xf32>
    %235 = arith.mulf %234, %232 : vector<8x10xf32>
    %cst_174 = arith.constant 1.000000e+00 : f32
    %236 = arith.subf %cst_174, %54 : f32
    %237 = vector.broadcast %236 : f32 to vector<8x10xf32>
    %238 = arith.mulf %237, %233 : vector<8x10xf32>
    %239 = arith.addf %235, %238 : vector<8x10xf32>
    %240 = arith.mulf %232, %226 : vector<8x10xf32>
    %cst_175 = arith.constant 1.000000e+00 : f32
    %241 = vector.broadcast %cst_175 : f32 to vector<8x10xf32>
    %242 = arith.subf %241, %232 : vector<8x10xf32>
    %243 = arith.mulf %242, %231 : vector<8x10xf32>
    %244 = arith.addf %240, %243 : vector<8x10xf32>
    %245 = vector.shape_cast %244 : vector<8x10xf32> to vector<1x8x10xf32>
    %cst_176 = arith.constant dense<0.000000e+00> : vector<1xf32>
    %246 = vector.multi_reduction <add>, %245, %cst_176 [1, 2] : vector<1x8x10xf32> to vector<1xf32>
    %247 = vector.shape_cast %246 : vector<1xf32> to vector<1x1x1xf32>
    %248 = vector.extract %247[0, 0, 0] : f32 from vector<1x1x1xf32>
    %cst_177 = arith.constant 8.000000e+01 : f32
    %249 = arith.divf %248, %cst_177 : f32
    %cst_178 = arith.constant 0.000000e+00 : f32
    %250 = arith.subf %cst_178, %249 : f32
    %251 = arith.mulf %250, %54 : f32
    %252 = arith.mulf %233, %226 : vector<8x10xf32>
    %cst_179 = arith.constant 1.000000e+00 : f32
    %253 = vector.broadcast %cst_179 : f32 to vector<8x10xf32>
    %254 = arith.subf %253, %233 : vector<8x10xf32>
    %255 = arith.mulf %254, %231 : vector<8x10xf32>
    %256 = arith.addf %252, %255 : vector<8x10xf32>
    %257 = vector.shape_cast %256 : vector<8x10xf32> to vector<1x8x10xf32>
    %cst_180 = arith.constant dense<0.000000e+00> : vector<1xf32>
    %258 = vector.multi_reduction <add>, %257, %cst_180 [1, 2] : vector<1x8x10xf32> to vector<1xf32>
    %259 = vector.shape_cast %258 : vector<1xf32> to vector<1x1x1xf32>
    %260 = vector.extract %259[0, 0, 0] : f32 from vector<1x1x1xf32>
    %cst_181 = arith.constant 8.000000e+01 : f32
    %261 = arith.divf %260, %cst_181 : f32
    %cst_182 = arith.constant 0.000000e+00 : f32
    %262 = arith.subf %cst_182, %261 : f32
    %cst_183 = arith.constant 1.000000e+00 : f32
    %263 = arith.subf %cst_183, %54 : f32
    %264 = arith.mulf %262, %263 : f32
    %265 = arith.addf %251, %264 : f32
    %266 = arith.mulf %239, %226 : vector<8x10xf32>
    %cst_184 = arith.constant 1.000000e+00 : f32
    %267 = vector.broadcast %cst_184 : f32 to vector<8x10xf32>
    %268 = arith.subf %267, %239 : vector<8x10xf32>
    %269 = arith.mulf %268, %231 : vector<8x10xf32>
    %270 = arith.addf %266, %269 : vector<8x10xf32>
    %271 = vector.shape_cast %270 : vector<8x10xf32> to vector<1x8x10xf32>
    %cst_185 = arith.constant dense<0.000000e+00> : vector<1xf32>
    %272 = vector.multi_reduction <add>, %271, %cst_185 [1, 2] : vector<1x8x10xf32> to vector<1xf32>
    %273 = vector.shape_cast %272 : vector<1xf32> to vector<1x1x1xf32>
    %274 = vector.extract %273[0, 0, 0] : f32 from vector<1x1x1xf32>
    %cst_186 = arith.constant 8.000000e+01 : f32
    %275 = arith.divf %274, %cst_186 : f32
    %cst_187 = arith.constant 0.000000e+00 : f32
    %276 = arith.subf %cst_187, %275 : f32
    %277 = arith.addf %265, %276 : f32
    %278 = vector.broadcast %277 : f32 to vector<1x1xf32>
    %c0_188 = arith.constant 0 : index
    %c0_189 = arith.constant 0 : index
    %279 = vector.load %arg12[%c0_188, %c0_189] : memref<1x1xf32, #tpu.memory_space<vmem>>, vector<1x1xf32>
    tpu.vector_store %arg12[%c0_188, %c0_189], %278 {strides = array<i32>} : memref<1x1xf32, #tpu.memory_space<vmem>>, vector<1x1xf32>,
    return
  }
  func.func @transform_0(%arg0: i32, %arg1: memref<8xi32, #tpu.memory_space<smem>>) -> (i32, i32) {
    %c0_i32 = arith.constant 0 : i32
    %c0_i32_0 = arith.constant 0 : i32
    %c0_i32_1 = arith.constant 0 : i32
    return %c0_i32, %c0_i32_0 : i32, i32
  }
  func.func @transform_1(%arg0: i32, %arg1: memref<8xi32, #tpu.memory_space<smem>>) -> (i32, i32) {
    %c0_i32 = arith.constant 0 : i32
    %c0_i32_0 = arith.constant 0 : i32
    %c0_i32_1 = arith.constant 0 : i32
    return %c0_i32, %c0_i32_0 : i32, i32
  }
  func.func @transform_2(%arg0: i32, %arg1: memref<8xi32, #tpu.memory_space<smem>>) -> (i32, i32) {
    %c0_i32 = arith.constant 0 : i32
    %c0_i32_0 = arith.constant 0 : i32
    %c0_i32_1 = arith.constant 0 : i32
    return %c0_i32, %c0_i32_0 : i32, i32
  }
  func.func @transform_3(%arg0: i32, %arg1: memref<8xi32, #tpu.memory_space<smem>>) -> (i32, i32) {
    %c0_i32 = arith.constant 0 : i32
    %c0_i32_0 = arith.constant 0 : i32
    %c0_i32_1 = arith.constant 0 : i32
    return %c0_i32, %c0_i32_0 : i32, i32
  }
  func.func @transform_4(%arg0: i32, %arg1: memref<8xi32, #tpu.memory_space<smem>>) -> (i32, i32) {
    %c0_i32 = arith.constant 0 : i32
    %c0_i32_0 = arith.constant 0 : i32
    %c0_i32_1 = arith.constant 0 : i32
    return %c0_i32, %c0_i32_0 : i32, i32
  }
  func.func @transform_5(%arg0: i32, %arg1: memref<8xi32, #tpu.memory_space<smem>>) -> (i32, i32, i32) {
    %c0_i32 = arith.constant 0 : i32
    %c0_i32_0 = arith.constant 0 : i32
    %c0_i32_1 = arith.constant 0 : i32
    %c0_i32_2 = arith.constant 0 : i32
    return %c0_i32, %c0_i32_0, %c0_i32_1 : i32, i32, i32
  }
  func.func @transform_6(%arg0: i32, %arg1: memref<8xi32, #tpu.memory_space<smem>>) -> (i32, i32) {
    %c0_i32 = arith.constant 0 : i32
    %c0_i32_0 = arith.constant 0 : i32
    %c0_i32_1 = arith.constant 0 : i32
    return %c0_i32, %c0_i32_0 : i32, i32
  }
  func.func @transform_7(%arg0: i32, %arg1: memref<8xi32, #tpu.memory_space<smem>>) -> (i32, i32) {
    %c0_i32 = arith.constant 0 : i32
    %c0_i32_0 = arith.constant 0 : i32
    %c0_i32_1 = arith.constant 0 : i32
    return %c0_i32, %c0_i32_0 : i32, i32
  }
  func.func @transform_8(%arg0: i32, %arg1: memref<8xi32, #tpu.memory_space<smem>>) -> (i32, i32) {
    %c0_i32 = arith.constant 0 : i32
    %c0_i32_0 = arith.constant 0 : i32
    %c0_i32_1 = arith.constant 0 : i32
    return %c0_i32, %c0_i32_0 : i32, i32
  }
  func.func @transform_9(%arg0: i32, %arg1: memref<8xi32, #tpu.memory_space<smem>>) -> (i32, i32) {
    %c0_i32 = arith.constant 0 : i32
    %c0_i32_0 = arith.constant 0 : i32
    %c0_i32_1 = arith.constant 0 : i32
    return %c0_i32, %c0_i32_0 : i32, i32
  }
  func.func @transform_10(%arg0: i32, %arg1: memref<8xi32, #tpu.memory_space<smem>>) -> (i32, i32) {
    %c0_i32 = arith.constant 0 : i32
    %c0_i32_0 = arith.constant 0 : i32
    %c0_i32_1 = arith.constant 0 : i32
    return %c0_i32, %c0_i32_0 : i32, i32
  }
}

</mosaic_0001>

<llo_original>
// kernel: patchup_forward.1
$region0: #{patchup_forward.1}
  #allocation0 [shape = 'u32[]', space=smem, size = 0x4, offset = 0x4, fixed_abs, tag = 'smem constant byte address 0x4 - core index']
  #allocation1 [shape = 'u32[144,128]{1,0:T(1,128)}', space=vmem, size = 0x12000, scoped, tag = 'internal scratch']
  #allocation2 [shape = 'f32[8,8,256]{2,1,0:T(8,128)}', space=vmem, size = 0x10000, scoped, tag = 'scratch operand']
  #allocation3 [shape = 'f32[8,8,256]{2,1,0:T(8,128)}', space=vmem, size = 0x10000, scoped, tag = 'scratch operand']
  #allocation4 [shape = 's32[1]{0}', space=sflag, size = 0x4, scoped, tag = 'scoped memory for patchup_forward.1']
  #allocation5 [shape = 'u8[512]{0}', space=smem, size = 0x200, scoped, tag = 'prefetched SMEM operand 0']
  %s0 = inlined_call_operand.vmem [shape: s32[8], index: 0, kind: input, shape index: {}]
  %s1 = inlined_call_operand.vmem [shape: bf16[32,2048], index: 1, kind: input, shape index: {}]
  %s2 = inlined_call_operand.vmem [shape: bf16[8,32], index: 2, kind: input, shape index: {}]
  %s3 = inlined_call_operand.vmem [shape: f32[8,1], index: 3, kind: input, shape index: {}]
  %s4 = inlined_call_operand.vmem [shape: bf16[8,256], index: 4, kind: input, shape index: {}]
  %s5 = inlined_call_operand.vmem [shape: bf16[256,256], index: 5, kind: input, shape index: {}]
  %s6 = inlined_call_operand.vmem [shape: bf16[8,256,10], index: 6, kind: input, shape index: {}]
  %s7 = inlined_call_operand.vmem [shape: f32[1,10], index: 7, kind: input, shape index: {}]
  %s8 = inlined_call_operand.vmem [shape: f32[8,10], index: 8, kind: input, shape index: {}]
  %s9 = inlined_call_operand.vmem [shape: f32[8,10], index: 9, kind: input, shape index: {}]
  %s10 = inlined_call_operand.hbm [shape: f32[8,10], index: 10, kind: output, shape index: {0}]
  %s11 = inlined_call_operand.hbm [shape: f32[1,1], index: 11, kind: output, shape index: {1}]
  %12 = xla_tuple %s10, %s11
  %s13 = sld [smem:[#allocation0]]
  $region54: #{patchup_forward.1} parent=0
    _
  %s15 = ssub.s32 1, %s13
  %s16 = scalar_select 0, %s15, %s13
  %s17 = sshll.u32 %s0, 4
  %s18 = int_to_ptr.vmem [resolvable:$true] %s17
  %20 = dma.vmem_to_smem %s18, 16, [#allocation5], [#allocation4]
  %21 = dma.done [#allocation4], 16
  %22 = sfence
  $region1: #{patchup_forward.1} parent=0
    #allocation6 [shape = 'u8[4096]{0}', space=vmem, size = 0x1000, scoped, tag = 'output window, operand 0, single buffered']
    #allocation7 [shape = 's32[1]{0}', space=sflag, size = 0x4, scoped, tag = 'scoped memory for patchup_forward.1']
    #allocation8 [shape = 'u8[512]{0}', space=vmem, size = 0x400, scoped, tag = 'output window, operand 1, single buffered']
    #allocation9 [shape = 's32[1]{0}', space=sflag, size = 0x4, scoped, tag = 'scoped memory for patchup_forward.1']
    %23 = vsyncpa [#allocation7], 0
    %24 = vsyncpa [#allocation9], 0
    // Predicated region
    $region2: #{patchup_forward.1} parent=1 // pred_check
      _
    $region3: #{patchup_forward.1} parent=1 // pred_check_branch
      %26 = sbr.rel (0) target = $region5
    $region4: #{patchup_forward.1} parent=1 // pred_region
      _
    $region5: #{patchup_forward.1} parent=1 // pred_fallthru
      _
    // Predicated region
    $region6: #{patchup_forward.1} parent=1 // pred_check
      _
    $region7: #{patchup_forward.1} parent=1 // pred_check_branch
      %28 = sbr.rel (0) target = $region9
    $region8: #{patchup_forward.1} parent=1 // pred_region
      _
    $region9: #{patchup_forward.1} parent=1 // pred_fallthru
      _
    // Predicated region
    $region10: #{patchup_forward.1} parent=1 // pred_check
      _
    $region11: #{patchup_forward.1} parent=1 // pred_check_branch
      %30 = sbr.rel (0) target = $region13
    $region12: #{patchup_forward.1} parent=1 // pred_region
      _
    $region13: #{patchup_forward.1} parent=1 // pred_fallthru
      _
    // Predicated region
    $region14: #{patchup_forward.1} parent=1 // pred_check
      _
    $region15: #{patchup_forward.1} parent=1 // pred_check_branch
      %32 = sbr.rel (0) target = $region17
    $region16: #{patchup_forward.1} parent=1 // pred_region
      _
    $region17: #{patchup_forward.1} parent=1 // pred_fallthru
      _
    // Predicated region
    $region18: #{patchup_forward.1} parent=1 // pred_check
      _
    $region19: #{patchup_forward.1} parent=1 // pred_check_branch
      %34 = sbr.rel (0) target = $region21
    $region20: #{patchup_forward.1} parent=1 // pred_region
      _
    $region21: #{patchup_forward.1} parent=1 // pred_fallthru
      _
    // Predicated region
    $region22: #{patchup_forward.1} parent=1 // pred_check
      _
    $region23: #{patchup_forward.1} parent=1 // pred_check_branch
      %36 = sbr.rel (0) target = $region25
    $region24: #{patchup_forward.1} parent=1 // pred_region
      _
    $region25: #{patchup_forward.1} parent=1 // pred_fallthru
      _
    // Predicated region
    $region26: #{patchup_forward.1} parent=1 // pred_check
      _
    $region27: #{patchup_forward.1} parent=1 // pred_check_branch
      %38 = sbr.rel (0) target = $region29
    $region28: #{patchup_forward.1} parent=1 // pred_region
      _
    $region29: #{patchup_forward.1} parent=1 // pred_fallthru
      _
    // Predicated region
    $region30: #{patchup_forward.1} parent=1 // pred_check
      _
    $region31: #{patchup_forward.1} parent=1 // pred_check_branch
      %40 = sbr.rel (0) target = $region33
    $region32: #{patchup_forward.1} parent=1 // pred_region
      _
    $region33: #{patchup_forward.1} parent=1 // pred_fallthru
      _
    // Predicated region
    $region34: #{patchup_forward.1} parent=1 // pred_check
      _
    $region35: #{patchup_forward.1} parent=1 // pred_check_branch
      %42 = sbr.rel (0) target = $region37
    $region36: #{patchup_forward.1} parent=1 // pred_region
      _
    $region37: #{patchup_forward.1} parent=1 // pred_fallthru
      _
    %v44 = vld [vmem:[%s2] sm:$0xf]
    %v45 = vld [vmem:[%s1] sm:$0xff]
    %v46 = vld [vmem:[%s1 + $0x8] sm:$0xff]
    %v47 = vld [vmem:[%s1 + $0x10] sm:$0xff]
    %v48 = vld [vmem:[%s1 + $0x18] sm:$0xff]
    %v49 = vld [vmem:[%s1 + $0x20] sm:$0xff]
    %v50 = vld [vmem:[%s1 + $0x28] sm:$0xff]
    %v51 = vld [vmem:[%s1 + $0x30] sm:$0xff]
    %v52 = vld [vmem:[%s1 + $0x38] sm:$0xff]
    %v53 = vld [vmem:[%s1 + $0x40] sm:$0xff]
    %v54 = vld [vmem:[%s1 + $0x48] sm:$0xff]
    %v55 = vld [vmem:[%s1 + $0x50] sm:$0xff]
    %v56 = vld [vmem:[%s1 + $0x58] sm:$0xff]
    %v57 = vld [vmem:[%s1 + $0x60] sm:$0xff]
    %v58 = vld [vmem:[%s1 + $0x68] sm:$0xff]
    %v59 = vld [vmem:[%s1 + $0x70] sm:$0xff]
    %v60 = vld [vmem:[%s1 + $0x78] sm:$0xff]
    %v61 = vld [vmem:[%s1 + $0x80] sm:$0xff]
    %v62 = vld [vmem:[%s1 + $0x88] sm:$0xff]
    %v63 = vld [vmem:[%s1 + $0x90] sm:$0xff]
    %v64 = vld [vmem:[%s1 + $0x98] sm:$0xff]
    %v65 = vld [vmem:[%s1 + $0xa0] sm:$0xff]
    %v66 = vld [vmem:[%s1 + $0xa8] sm:$0xff]
    %v67 = vld [vmem:[%s1 + $0xb0] sm:$0xff]
    %v68 = vld [vmem:[%s1 + $0xb8] sm:$0xff]
    %v69 = vld [vmem:[%s1 + $0xc0] sm:$0xff]
    %v70 = vld [vmem:[%s1 + $0xc8] sm:$0xff]
    %v71 = vld [vmem:[%s1 + $0xd0] sm:$0xff]
    %v72 = vld [vmem:[%s1 + $0xd8] sm:$0xff]
    %v73 = vld [vmem:[%s1 + $0xe0] sm:$0xff]
    %v74 = vld [vmem:[%s1 + $0xe8] sm:$0xff]
    %v75 = vld [vmem:[%s1 + $0xf0] sm:$0xff]
    %v76 = vld [vmem:[%s1 + $0xf8] sm:$0xff]
    %v77 = vld [vmem:[%s3] sm:$0xff]
    %79 = vset.pattern.permute.xlu0 0
    %80 = vperm.xlu0 %79, %v77
    %v81 = vpop.permute.xlu0 %80
    %v115 = vunpack.c.l.b16 %v45
    %v116 = vunpack.c.h.b16 %v45
    %v117 = vunpack.c.l.b16 %v46
    %v118 = vunpack.c.h.b16 %v46
    %v119 = vunpack.c.l.b16 %v47
    %v120 = vunpack.c.h.b16 %v47
    %v121 = vunpack.c.l.b16 %v48
    %v122 = vunpack.c.h.b16 %v48
    %v123 = vunpack.c.l.b16 %v49
    %v124 = vunpack.c.h.b16 %v49
    %v125 = vunpack.c.l.b16 %v50
    %v126 = vunpack.c.h.b16 %v50
    %v127 = vunpack.c.l.b16 %v51
    %v128 = vunpack.c.h.b16 %v51
    %v129 = vunpack.c.l.b16 %v52
    %v130 = vunpack.c.h.b16 %v52
    %v131 = vunpack.c.l.b16 %v53
    %v132 = vunpack.c.h.b16 %v53
    %v133 = vunpack.c.l.b16 %v54
    %v134 = vunpack.c.h.b16 %v54
    %v135 = vunpack.c.l.b16 %v55
    %v136 = vunpack.c.h.b16 %v55
    %v137 = vunpack.c.l.b16 %v56
    %v138 = vunpack.c.h.b16 %v56
    %v139 = vunpack.c.l.b16 %v57
    %v140 = vunpack.c.h.b16 %v57
    %v141 = vunpack.c.l.b16 %v58
    %v142 = vunpack.c.h.b16 %v58
    %v143 = vunpack.c.l.b16 %v59
    %v144 = vunpack.c.h.b16 %v59
    %v145 = vunpack.c.l.b16 %v60
    %v146 = vunpack.c.h.b16 %v60
    %v147 = vunpack.c.l.b16 %v61
    %v148 = vunpack.c.h.b16 %v61
    %v149 = vunpack.c.l.b16 %v62
    %v150 = vunpack.c.h.b16 %v62
    %v151 = vunpack.c.l.b16 %v63
    %v152 = vunpack.c.h.b16 %v63
    %v153 = vunpack.c.l.b16 %v64
    %v154 = vunpack.c.h.b16 %v64
    %v155 = vunpack.c.l.b16 %v65
    %v156 = vunpack.c.h.b16 %v65
    %v157 = vunpack.c.l.b16 %v66
    %v158 = vunpack.c.h.b16 %v66
    %v159 = vunpack.c.l.b16 %v67
    %v160 = vunpack.c.h.b16 %v67
    %v161 = vunpack.c.l.b16 %v68
    %v162 = vunpack.c.h.b16 %v68
    %v163 = vunpack.c.l.b16 %v69
    %v164 = vunpack.c.h.b16 %v69
    %v165 = vunpack.c.l.b16 %v70
    %v166 = vunpack.c.h.b16 %v70
    %v167 = vunpack.c.l.b16 %v71
    %v168 = vunpack.c.h.b16 %v71
    %v169 = vunpack.c.l.b16 %v72
    %v170 = vunpack.c.h.b16 %v72
    %v171 = vunpack.c.l.b16 %v73
    %v172 = vunpack.c.h.b16 %v73
    %v173 = vunpack.c.l.b16 %v74
    %v174 = vunpack.c.h.b16 %v74
    %v175 = vunpack.c.l.b16 %v75
    %v176 = vunpack.c.h.b16 %v75
    %v177 = vunpack.c.l.b16 %v76
    %v178 = vunpack.c.h.b16 %v76
    %v179 = vpack.c.b16 %v131, %v115
    %v180 = vpack.c.b16 %v132, %v116
    %v181 = vpack.c.b16 %v133, %v117
    %v182 = vpack.c.b16 %v134, %v118
    %v183 = vpack.c.b16 %v135, %v119
    %v184 = vpack.c.b16 %v136, %v120
    %v185 = vpack.c.b16 %v137, %v121
    %v186 = vpack.c.b16 %v138, %v122
    %v187 = vpack.c.b16 %v139, %v123
    %v188 = vpack.c.b16 %v140, %v124
    %v189 = vpack.c.b16 %v141, %v125
    %v190 = vpack.c.b16 %v142, %v126
    %v191 = vpack.c.b16 %v143, %v127
    %v192 = vpack.c.b16 %v144, %v128
    %v193 = vpack.c.b16 %v145, %v129
    %v194 = vpack.c.b16 %v146, %v130
    %v195 = vpack.c.b16 %v163, %v147
    %v196 = vpack.c.b16 %v164, %v148
    %v197 = vpack.c.b16 %v165, %v149
    %v198 = vpack.c.b16 %v166, %v150
    %v199 = vpack.c.b16 %v167, %v151
    %v200 = vpack.c.b16 %v168, %v152
    %v201 = vpack.c.b16 %v169, %v153
    %v202 = vpack.c.b16 %v170, %v154
    %v203 = vpack.c.b16 %v171, %v155
    %v204 = vpack.c.b16 %v172, %v156
    %v205 = vpack.c.b16 %v173, %v157
    %v206 = vpack.c.b16 %v174, %v158
    %v207 = vpack.c.b16 %v175, %v159
    %v208 = vpack.c.b16 %v176, %v160
    %v209 = vpack.c.b16 %v177, %v161
    %v210 = vpack.c.b16 %v178, %v162
    %vm243 = vcmask 261120
    %v245 = vsel %vm243, %v44, 0
    %247 = vmatprep.subr.bf16.mxu0 %v180
    %248 = vmatpush1.bf16.msra.mxu0 %v179
    %249 = vmatprep.subr.bf16.mxu0 %v196
    %250 = vmatpush1.bf16.msra.mxu0 %v195
    %251 = vmatprep.subr.bf16.mxu0 0
    %252 = vmatpush1.bf16.msra.mxu0 0
    %253 = vmatprep.subr.bf16.mxu0 0
    %254 = vmatpush1.bf16.msra.mxu0 0
    %255 = vmatprep.subr.bf16.mxu0 0
    %256 = vmatpush1.bf16.msra.mxu0 0
    %257 = vmatprep.subr.bf16.mxu0 0
    %258 = vmatpush1.bf16.msra.mxu0 0
    %259 = vmatprep.subr.bf16.mxu0 0
    %260 = vmatpush1.bf16.msra.mxu0 0
    %261 = vmatprep.subr.bf16.mxu0 0
    %262 = vmatpush1.bf16.msra.mxu0 0
    %263 = vmatprep.subr.bf16.mxu0 0
    %264 = vmatpush1.bf16.msra.mxu0 0
    %265 = vmatprep.subr.bf16.mxu0 0
    %266 = vmatpush1.bf16.msra.mxu0 0
    %267 = vmatprep.subr.bf16.mxu0 0
    %268 = vmatpush1.bf16.msra.mxu0 0
    %269 = vmatprep.subr.bf16.mxu0 0
    %270 = vmatpush1.bf16.msra.mxu0 0
    %271 = vmatprep.subr.bf16.mxu0 0
    %272 = vmatpush1.bf16.msra.mxu0 0
    %273 = vmatprep.subr.bf16.mxu0 0
    %274 = vmatpush1.bf16.msra.mxu0 0
    %275 = vmatprep.subr.bf16.mxu0 0
    %276 = vmatpush1.bf16.msra.mxu0 0
    %277 = vmatprep.subr.bf16.mxu0 0
    %278 = vmatpush1.bf16.msra.mxu0 0
    %279 = vmatprep.mubr.bf16.mxu0 0
    %280 = vmatmul.mubr.bf16.gmra.mrb[0].mxu0 %v245
    %v281 = vpop.f32.mrb[0].mxu0
    %v282 = vadd.f32 %v81, %v281
    %v283 = vpop.f32.mrb[0].mxu0
    %v284 = vadd.f32 %v81, %v283
    %v285 = vpop.f32.mrb[0].mxu0
    %v286 = vpop.f32.mrb[0].mxu0
    %287 = vdwg.mxu0
    %288 = vmatprep.subr.bf16.mxu0 %v182
    %289 = vmatpush1.bf16.msra.mxu0 %v181
    %290 = vmatprep.subr.bf16.mxu0 %v198
    %291 = vmatpush1.bf16.msra.mxu0 %v197
    %292 = vmatprep.subr.bf16.mxu0 0
    %293 = vmatpush1.bf16.msra.mxu0 0
    %294 = vmatprep.subr.bf16.mxu0 0
    %295 = vmatpush1.bf16.msra.mxu0 0
    %296 = vmatprep.subr.bf16.mxu0 0
    %297 = vmatpush1.bf16.msra.mxu0 0
    %298 = vmatprep.subr.bf16.mxu0 0
    %299 = vmatpush1.bf16.msra.mxu0 0
    %300 = vmatprep.subr.bf16.mxu0 0
    %301 = vmatpush1.bf16.msra.mxu0 0
    %302 = vmatprep.subr.bf16.mxu0 0
    %303 = vmatpush1.bf16.msra.mxu0 0
    %304 = vmatprep.subr.bf16.mxu0 0
    %305 = vmatpush1.bf16.msra.mxu0 0
    %306 = vmatprep.subr.bf16.mxu0 0
    %307 = vmatpush1.bf16.msra.mxu0 0
    %308 = vmatprep.subr.bf16.mxu0 0
    %309 = vmatpush1.bf16.msra.mxu0 0
    %310 = vmatprep.subr.bf16.mxu0 0
    %311 = vmatpush1.bf16.msra.mxu0 0
    %312 = vmatprep.subr.bf16.mxu0 0
    %313 = vmatpush1.bf16.msra.mxu0 0
    %314 = vmatprep.subr.bf16.mxu0 0
    %315 = vmatpush1.bf16.msra.mxu0 0
    %316 = vmatprep.subr.bf16.mxu0 0
    %317 = vmatpush1.bf16.msra.mxu0 0
    %318 = vmatprep.subr.bf16.mxu0 0
    %319 = vmatpush1.bf16.msra.mxu0 0
    %320 = vmatprep.mubr.bf16.mxu0 0
    %321 = vmatmul.mubr.bf16.gmra.mrb[0].mxu0 %v245
    %v322 = vpop.f32.mrb[0].mxu0
    %v323 = vadd.f32 %v81, %v322
    %v324 = vpop.f32.mrb[0].mxu0
    %v325 = vadd.f32 %v81, %v324
    %v326 = vpop.f32.mrb[0].mxu0
    %v327 = vpop.f32.mrb[0].mxu0
    %328 = vdwg.mxu0
    %329 = vmatprep.subr.bf16.mxu0 %v184
    %330 = vmatpush1.bf16.msra.mxu0 %v183
    %331 = vmatprep.subr.bf16.mxu0 %v200
    %332 = vmatpush1.bf16.msra.mxu0 %v199
    %333 = vmatprep.subr.bf16.mxu0 0
    %334 = vmatpush1.bf16.msra.mxu0 0
    %335 = vmatprep.subr.bf16.mxu0 0
    %336 = vmatpush1.bf16.msra.mxu0 0
    %337 = vmatprep.subr.bf16.mxu0 0
    %338 = vmatpush1.bf16.msra.mxu0 0
    %339 = vmatprep.subr.bf16.mxu0 0
    %340 = vmatpush1.bf16.msra.mxu0 0
    %341 = vmatprep.subr.bf16.mxu0 0
    %342 = vmatpush1.bf16.msra.mxu0 0
    %343 = vmatprep.subr.bf16.mxu0 0
    %344 = vmatpush1.bf16.msra.mxu0 0
    %345 = vmatprep.subr.bf16.mxu0 0
    %346 = vmatpush1.bf16.msra.mxu0 0
    %347 = vmatprep.subr.bf16.mxu0 0
    %348 = vmatpush1.bf16.msra.mxu0 0
    %349 = vmatprep.subr.bf16.mxu0 0
    %350 = vmatpush1.bf16.msra.mxu0 0
    %351 = vmatprep.subr.bf16.mxu0 0
    %352 = vmatpush1.bf16.msra.mxu0 0
    %353 = vmatprep.subr.bf16.mxu0 0
    %354 = vmatpush1.bf16.msra.mxu0 0
    %355 = vmatprep.subr.bf16.mxu0 0
    %356 = vmatpush1.bf16.msra.mxu0 0
    %357 = vmatprep.subr.bf16.mxu0 0
    %358 = vmatpush1.bf16.msra.mxu0 0
    %359 = vmatprep.subr.bf16.mxu0 0
    %360 = vmatpush1.bf16.msra.mxu0 0
    %361 = vmatprep.mubr.bf16.mxu0 0
    %362 = vmatmul.mubr.bf16.gmra.mrb[0].mxu0 %v245
    %v363 = vpop.f32.mrb[0].mxu0
    %v364 = vadd.f32 %v81, %v363
    %v365 = vpop.f32.mrb[0].mxu0
    %v366 = vadd.f32 %v81, %v365
    %v367 = vpop.f32.mrb[0].mxu0
    %v368 = vpop.f32.mrb[0].mxu0
    %369 = vdwg.mxu0
    %370 = vmatprep.subr.bf16.mxu0 %v186
    %371 = vmatpush1.bf16.msra.mxu0 %v185
    %372 = vmatprep.subr.bf16.mxu0 %v202
    %373 = vmatpush1.bf16.msra.mxu0 %v201
    %374 = vmatprep.subr.bf16.mxu0 0
    %375 = vmatpush1.bf16.msra.mxu0 0
    %376 = vmatprep.subr.bf16.mxu0 0
    %377 = vmatpush1.bf16.msra.mxu0 0
    %378 = vmatprep.subr.bf16.mxu0 0
    %379 = vmatpush1.bf16.msra.mxu0 0
    %380 = vmatprep.subr.bf16.mxu0 0
    %381 = vmatpush1.bf16.msra.mxu0 0
    %382 = vmatprep.subr.bf16.mxu0 0
    %383 = vmatpush1.bf16.msra.mxu0 0
    %384 = vmatprep.subr.bf16.mxu0 0
    %385 = vmatpush1.bf16.msra.mxu0 0
    %386 = vmatprep.subr.bf16.mxu0 0
    %387 = vmatpush1.bf16.msra.mxu0 0
    %388 = vmatprep.subr.bf16.mxu0 0
    %389 = vmatpush1.bf16.msra.mxu0 0
    %390 = vmatprep.subr.bf16.mxu0 0
    %391 = vmatpush1.bf16.msra.mxu0 0
    %392 = vmatprep.subr.bf16.mxu0 0
    %393 = vmatpush1.bf16.msra.mxu0 0
    %394 = vmatprep.subr.bf16.mxu0 0
    %395 = vmatpush1.bf16.msra.mxu0 0
    %396 = vmatprep.subr.bf16.mxu0 0
    %397 = vmatpush1.bf16.msra.mxu0 0
    %398 = vmatprep.subr.bf16.mxu0 0
    %399 = vmatpush1.bf16.msra.mxu0 0
    %400 = vmatprep.subr.bf16.mxu0 0
    %401 = vmatpush1.bf16.msra.mxu0 0
    %402 = vmatprep.mubr.bf16.mxu0 0
    %403 = vmatmul.mubr.bf16.gmra.mrb[0].mxu0 %v245
    %v404 = vpop.f32.mrb[0].mxu0
    %v405 = vadd.f32 %v81, %v404
    %v406 = vpop.f32.mrb[0].mxu0
    %v407 = vadd.f32 %v81, %v406
    %v408 = vpop.f32.mrb[0].mxu0
    %v409 = vpop.f32.mrb[0].mxu0
    %410 = vdwg.mxu0
    %411 = vmatprep.subr.bf16.mxu0 %v188
    %412 = vmatpush1.bf16.msra.mxu0 %v187
    %413 = vmatprep.subr.bf16.mxu0 %v204
    %414 = vmatpush1.bf16.msra.mxu0 %v203
    %415 = vmatprep.subr.bf16.mxu0 0
    %416 = vmatpush1.bf16.msra.mxu0 0
    %417 = vmatprep.subr.bf16.mxu0 0
    %418 = vmatpush1.bf16.msra.mxu0 0
    %419 = vmatprep.subr.bf16.mxu0 0
    %420 = vmatpush1.bf16.msra.mxu0 0
    %421 = vmatprep.subr.bf16.mxu0 0
    %422 = vmatpush1.bf16.msra.mxu0 0
    %423 = vmatprep.subr.bf16.mxu0 0
    %424 = vmatpush1.bf16.msra.mxu0 0
    %425 = vmatprep.subr.bf16.mxu0 0
    %426 = vmatpush1.bf16.msra.mxu0 0
    %427 = vmatprep.subr.bf16.mxu0 0
    %428 = vmatpush1.bf16.msra.mxu0 0
    %429 = vmatprep.subr.bf16.mxu0 0
    %430 = vmatpush1.bf16.msra.mxu0 0
    %431 = vmatprep.subr.bf16.mxu0 0
    %432 = vmatpush1.bf16.msra.mxu0 0
    %433 = vmatprep.subr.bf16.mxu0 0
    %434 = vmatpush1.bf16.msra.mxu0 0
    %435 = vmatprep.subr.bf16.mxu0 0
    %436 = vmatpush1.bf16.msra.mxu0 0
    %437 = vmatprep.subr.bf16.mxu0 0
    %438 = vmatpush1.bf16.msra.mxu0 0
    %439 = vmatprep.subr.bf16.mxu0 0
    %440 = vmatpush1.bf16.msra.mxu0 0
    %441 = vmatprep.subr.bf16.mxu0 0
    %442 = vmatpush1.bf16.msra.mxu0 0
    %443 = vmatprep.mubr.bf16.mxu0 0
    %444 = vmatmul.mubr.bf16.gmra.mrb[0].mxu0 %v245
    %v445 = vpop.f32.mrb[0].mxu0
    %v446 = vadd.f32 %v81, %v445
    %v447 = vpop.f32.mrb[0].mxu0
    %v448 = vadd.f32 %v81, %v447
    %v449 = vpop.f32.mrb[0].mxu0
    %v450 = vpop.f32.mrb[0].mxu0
    %451 = vdwg.mxu0
    %452 = vmatprep.subr.bf16.mxu0 %v190
    %453 = vmatpush1.bf16.msra.mxu0 %v189
    %454 = vmatprep.subr.bf16.mxu0 %v206
    %455 = vmatpush1.bf16.msra.mxu0 %v205
    %456 = vmatprep.subr.bf16.mxu0 0
    %457 = vmatpush1.bf16.msra.mxu0 0
    %458 = vmatprep.subr.bf16.mxu0 0
    %459 = vmatpush1.bf16.msra.mxu0 0
    %460 = vmatprep.subr.bf16.mxu0 0
    %461 = vmatpush1.bf16.msra.mxu0 0
    %462 = vmatprep.subr.bf16.mxu0 0
    %463 = vmatpush1.bf16.msra.mxu0 0
    %464 = vmatprep.subr.bf16.mxu0 0
    %465 = vmatpush1.bf16.msra.mxu0 0
    %466 = vmatprep.subr.bf16.mxu0 0
    %467 = vmatpush1.bf16.msra.mxu0 0
    %468 = vmatprep.subr.bf16.mxu0 0
    %469 = vmatpush1.bf16.msra.mxu0 0
    %470 = vmatprep.subr.bf16.mxu0 0
    %471 = vmatpush1.bf16.msra.mxu0 0
    %472 = vmatprep.subr.bf16.mxu0 0
    %473 = vmatpush1.bf16.msra.mxu0 0
    %474 = vmatprep.subr.bf16.mxu0 0
    %475 = vmatpush1.bf16.msra.mxu0 0
    %476 = vmatprep.subr.bf16.mxu0 0
    %477 = vmatpush1.bf16.msra.mxu0 0
    %478 = vmatprep.subr.bf16.mxu0 0
    %479 = vmatpush1.bf16.msra.mxu0 0
    %480 = vmatprep.subr.bf16.mxu0 0
    %481 = vmatpush1.bf16.msra.mxu0 0
    %482 = vmatprep.subr.bf16.mxu0 0
    %483 = vmatpush1.bf16.msra.mxu0 0
    %484 = vmatprep.mubr.bf16.mxu0 0
    %485 = vmatmul.mubr.bf16.gmra.mrb[0].mxu0 %v245
    %v486 = vpop.f32.mrb[0].mxu0
    %v487 = vadd.f32 %v81, %v486
    %v488 = vpop.f32.mrb[0].mxu0
    %v489 = vadd.f32 %v81, %v488
    %v490 = vpop.f32.mrb[0].mxu0
    %v491 = vpop.f32.mrb[0].mxu0
    %492 = vdwg.mxu0
    %493 = vmatprep.subr.bf16.mxu0 %v192
    %494 = vmatpush1.bf16.msra.mxu0 %v191
    %495 = vmatprep.subr.bf16.mxu0 %v208
    %496 = vmatpush1.bf16.msra.mxu0 %v207
    %497 = vmatprep.subr.bf16.mxu0 0
    %498 = vmatpush1.bf16.msra.mxu0 0
    %499 = vmatprep.subr.bf16.mxu0 0
    %500 = vmatpush1.bf16.msra.mxu0 0
    %501 = vmatprep.subr.bf16.mxu0 0
    %502 = vmatpush1.bf16.msra.mxu0 0
    %503 = vmatprep.subr.bf16.mxu0 0
    %504 = vmatpush1.bf16.msra.mxu0 0
    %505 = vmatprep.subr.bf16.mxu0 0
    %506 = vmatpush1.bf16.msra.mxu0 0
    %507 = vmatprep.subr.bf16.mxu0 0
    %508 = vmatpush1.bf16.msra.mxu0 0
    %509 = vmatprep.subr.bf16.mxu0 0
    %510 = vmatpush1.bf16.msra.mxu0 0
    %511 = vmatprep.subr.bf16.mxu0 0
    %512 = vmatpush1.bf16.msra.mxu0 0
    %513 = vmatprep.subr.bf16.mxu0 0
    %514 = vmatpush1.bf16.msra.mxu0 0
    %515 = vmatprep.subr.bf16.mxu0 0
    %516 = vmatpush1.bf16.msra.mxu0 0
    %517 = vmatprep.subr.bf16.mxu0 0
    %518 = vmatpush1.bf16.msra.mxu0 0
    %519 = vmatprep.subr.bf16.mxu0 0
    %520 = vmatpush1.bf16.msra.mxu0 0
    %521 = vmatprep.subr.bf16.mxu0 0
    %522 = vmatpush1.bf16.msra.mxu0 0
    %523 = vmatprep.subr.bf16.mxu0 0
    %524 = vmatpush1.bf16.msra.mxu0 0
    %525 = vmatprep.mubr.bf16.mxu0 0
    %526 = vmatmul.mubr.bf16.gmra.mrb[0].mxu0 %v245
    %v527 = vpop.f32.mrb[0].mxu0
    %v528 = vadd.f32 %v81, %v527
    %v529 = vpop.f32.mrb[0].mxu0
    %v530 = vadd.f32 %v81, %v529
    %v531 = vpop.f32.mrb[0].mxu0
    %v532 = vpop.f32.mrb[0].mxu0
    %533 = vdwg.mxu0
    %534 = vmatprep.subr.bf16.mxu0 %v194
    %535 = vmatpush1.bf16.msra.mxu0 %v193
    %536 = vmatprep.subr.bf16.mxu0 %v210
    %537 = vmatpush1.bf16.msra.mxu0 %v209
    %538 = vmatprep.subr.bf16.mxu0 0
    %539 = vmatpush1.bf16.msra.mxu0 0
    %540 = vmatprep.subr.bf16.mxu0 0
    %541 = vmatpush1.bf16.msra.mxu0 0
    %542 = vmatprep.subr.bf16.mxu0 0
    %543 = vmatpush1.bf16.msra.mxu0 0
    %544 = vmatprep.subr.bf16.mxu0 0
    %545 = vmatpush1.bf16.msra.mxu0 0
    %546 = vmatprep.subr.bf16.mxu0 0
    %547 = vmatpush1.bf16.msra.mxu0 0
    %548 = vmatprep.subr.bf16.mxu0 0
    %549 = vmatpush1.bf16.msra.mxu0 0
    %550 = vmatprep.subr.bf16.mxu0 0
    %551 = vmatpush1.bf16.msra.mxu0 0
    %552 = vmatprep.subr.bf16.mxu0 0
    %553 = vmatpush1.bf16.msra.mxu0 0
    %554 = vmatprep.subr.bf16.mxu0 0
    %555 = vmatpush1.bf16.msra.mxu0 0
    %556 = vmatprep.subr.bf16.mxu0 0
    %557 = vmatpush1.bf16.msra.mxu0 0
    %558 = vmatprep.subr.bf16.mxu0 0
    %559 = vmatpush1.bf16.msra.mxu0 0
    %560 = vmatprep.subr.bf16.mxu0 0
    %561 = vmatpush1.bf16.msra.mxu0 0
    %562 = vmatprep.subr.bf16.mxu0 0
    %563 = vmatpush1.bf16.msra.mxu0 0
    %564 = vmatprep.subr.bf16.mxu0 0
    %565 = vmatpush1.bf16.msra.mxu0 0
    %566 = vmatprep.mubr.bf16.mxu0 0
    %567 = vmatmul.mubr.bf16.gmra.mrb[0].mxu0 %v245
    %v568 = vpop.f32.mrb[0].mxu0
    %v569 = vadd.f32 %v81, %v568
    %v570 = vpop.f32.mrb[0].mxu0
    %v571 = vadd.f32 %v81, %v570
    %v572 = vpop.f32.mrb[0].mxu0
    %v573 = vpop.f32.mrb[0].mxu0
    %574 = vdwg.mxu0
    %v575 = vmax.f32 %v282, 0.0
    %v576 = vmax.f32 %v284, 0.0
    %v577 = vmax.f32 %v323, 0.0
    %v578 = vmax.f32 %v325, 0.0
    %v579 = vmax.f32 %v364, 0.0
    %v580 = vmax.f32 %v366, 0.0
    %v581 = vmax.f32 %v405, 0.0
    %v582 = vmax.f32 %v407, 0.0
    %v583 = vmax.f32 %v446, 0.0
    %v584 = vmax.f32 %v448, 0.0
    %v585 = vmax.f32 %v487, 0.0
    %v586 = vmax.f32 %v489, 0.0
    %v587 = vmax.f32 %v528, 0.0
    %v588 = vmax.f32 %v530, 0.0
    %v589 = vmax.f32 %v569, 0.0
    %v590 = vmax.f32 %v571, 0.0
    %591 = vst [vmem:[#allocation2] sm:$0xff] %v575
    %592 = vst [vmem:[#allocation2 + $0x8] sm:$0xff] %v576
    %s593 = scalar_lea.vmem [#allocation2], 16
    %594 = vst [vmem:[%s593] sm:$0xff] %v577
    %595 = vst [vmem:[%s593 + $0x8] sm:$0xff] %v578
    %s596 = scalar_lea.vmem [#allocation2], 32
    %597 = vst [vmem:[%s596] sm:$0xff] %v579
    %598 = vst [vmem:[%s596 + $0x8] sm:$0xff] %v580
    %s599 = scalar_lea.vmem [#allocation2], 48
    %600 = vst [vmem:[%s599] sm:$0xff] %v581
    %601 = vst [vmem:[%s599 + $0x8] sm:$0xff] %v582
    %s602 = scalar_lea.vmem [#allocation2], 64
    %603 = vst [vmem:[%s602] sm:$0xff] %v583
    %604 = vst [vmem:[%s602 + $0x8] sm:$0xff] %v584
    %s605 = scalar_lea.vmem [#allocation2], 80
    %606 = vst [vmem:[%s605] sm:$0xff] %v585
    %607 = vst [vmem:[%s605 + $0x8] sm:$0xff] %v586
    %s608 = scalar_lea.vmem [#allocation2], 96
    %609 = vst [vmem:[%s608] sm:$0xff] %v587
    %610 = vst [vmem:[%s608 + $0x8] sm:$0xff] %v588
    %s611 = scalar_lea.vmem [#allocation2], 112
    %612 = vst [vmem:[%s611] sm:$0xff] %v589
    %613 = vst [vmem:[%s611 + $0x8] sm:$0xff] %v590
    %v614 = vld [vmem:[%s4] sm:$0xff]
    %v615 = vld [vmem:[%s5] sm:$0xff]
    %v616 = vld [vmem:[%s5 + $0x8] sm:$0xff]
    %v617 = vld [vmem:[%s5 + $0x10] sm:$0xff]
    %v618 = vld [vmem:[%s5 + $0x18] sm:$0xff]
    %v619 = vld [vmem:[%s5 + $0x20] sm:$0xff]
    %v620 = vld [vmem:[%s5 + $0x28] sm:$0xff]
    %v621 = vld [vmem:[%s5 + $0x30] sm:$0xff]
    %v622 = vld [vmem:[%s5 + $0x38] sm:$0xff]
    %v623 = vld [vmem:[%s5 + $0x40] sm:$0xff]
    %v624 = vld [vmem:[%s5 + $0x48] sm:$0xff]
    %v625 = vld [vmem:[%s5 + $0x50] sm:$0xff]
    %v626 = vld [vmem:[%s5 + $0x58] sm:$0xff]
    %v627 = vld [vmem:[%s5 + $0x60] sm:$0xff]
    %v628 = vld [vmem:[%s5 + $0x68] sm:$0xff]
    %v629 = vld [vmem:[%s5 + $0x70] sm:$0xff]
    %v630 = vld [vmem:[%s5 + $0x78] sm:$0xff]
    %v631 = vld [vmem:[%s5 + $0x80] sm:$0xff]
    %v632 = vld [vmem:[%s5 + $0x88] sm:$0xff]
    %v633 = vld [vmem:[%s5 + $0x90] sm:$0xff]
    %v634 = vld [vmem:[%s5 + $0x98] sm:$0xff]
    %v635 = vld [vmem:[%s5 + $0xa0] sm:$0xff]
    %v636 = vld [vmem:[%s5 + $0xa8] sm:$0xff]
    %v637 = vld [vmem:[%s5 + $0xb0] sm:$0xff]
    %v638 = vld [vmem:[%s5 + $0xb8] sm:$0xff]
    %v639 = vld [vmem:[%s5 + $0xc0] sm:$0xff]
    %v640 = vld [vmem:[%s5 + $0xc8] sm:$0xff]
    %v641 = vld [vmem:[%s5 + $0xd0] sm:$0xff]
    %v642 = vld [vmem:[%s5 + $0xd8] sm:$0xff]
    %v643 = vld [vmem:[%s5 + $0xe0] sm:$0xff]
    %v644 = vld [vmem:[%s5 + $0xe8] sm:$0xff]
    %v645 = vld [vmem:[%s5 + $0xf0] sm:$0xff]
    %v646 = vld [vmem:[%s5 + $0xf8] sm:$0xff]
    %v648 = vunpack.c.l.b16 %v614
    %v649 = vunpack.c.h.b16 %v614
    %v650 = vpack.c.b16 %v648, %v648
    %v651 = vpack.c.b16 %v649, %v649
    %v686 = vunpack.c.l.b16 %v615
    %v687 = vunpack.c.h.b16 %v615
    %v688 = vunpack.c.l.b16 %v616
    %v689 = vunpack.c.h.b16 %v616
    %v690 = vunpack.c.l.b16 %v617
    %v691 = vunpack.c.h.b16 %v617
    %v692 = vunpack.c.l.b16 %v618
    %v693 = vunpack.c.h.b16 %v618
    %v694 = vunpack.c.l.b16 %v619
    %v695 = vunpack.c.h.b16 %v619
    %v696 = vunpack.c.l.b16 %v620
    %v697 = vunpack.c.h.b16 %v620
    %v698 = vunpack.c.l.b16 %v621
    %v699 = vunpack.c.h.b16 %v621
    %v700 = vunpack.c.l.b16 %v622
    %v701 = vunpack.c.h.b16 %v622
    %v702 = vunpack.c.l.b16 %v623
    %v703 = vunpack.c.h.b16 %v623
    %v704 = vunpack.c.l.b16 %v624
    %v705 = vunpack.c.h.b16 %v624
    %v706 = vunpack.c.l.b16 %v625
    %v707 = vunpack.c.h.b16 %v625
    %v708 = vunpack.c.l.b16 %v626
    %v709 = vunpack.c.h.b16 %v626
    %v710 = vunpack.c.l.b16 %v627
    %v711 = vunpack.c.h.b16 %v627
    %v712 = vunpack.c.l.b16 %v628
    %v713 = vunpack.c.h.b16 %v628
    %v714 = vunpack.c.l.b16 %v629
    %v715 = vunpack.c.h.b16 %v629
    %v716 = vunpack.c.l.b16 %v630
    %v717 = vunpack.c.h.b16 %v630
    %v718 = vunpack.c.l.b16 %v631
    %v719 = vunpack.c.h.b16 %v631
    %v720 = vunpack.c.l.b16 %v632
    %v721 = vunpack.c.h.b16 %v632
    %v722 = vunpack.c.l.b16 %v633
    %v723 = vunpack.c.h.b16 %v633
    %v724 = vunpack.c.l.b16 %v634
    %v725 = vunpack.c.h.b16 %v634
    %v726 = vunpack.c.l.b16 %v635
    %v727 = vunpack.c.h.b16 %v635
    %v728 = vunpack.c.l.b16 %v636
    %v729 = vunpack.c.h.b16 %v636
    %v730 = vunpack.c.l.b16 %v637
    %v731 = vunpack.c.h.b16 %v637
    %v732 = vunpack.c.l.b16 %v638
    %v733 = vunpack.c.h.b16 %v638
    %v734 = vunpack.c.l.b16 %v639
    %v735 = vunpack.c.h.b16 %v639
    %v736 = vunpack.c.l.b16 %v640
    %v737 = vunpack.c.h.b16 %v640
    %v738 = vunpack.c.l.b16 %v641
    %v739 = vunpack.c.h.b16 %v641
    %v740 = vunpack.c.l.b16 %v642
    %v741 = vunpack.c.h.b16 %v642
    %v742 = vunpack.c.l.b16 %v643
    %v743 = vunpack.c.h.b16 %v643
    %v744 = vunpack.c.l.b16 %v644
    %v745 = vunpack.c.h.b16 %v644
    %v746 = vunpack.c.l.b16 %v645
    %v747 = vunpack.c.h.b16 %v645
    %v748 = vunpack.c.l.b16 %v646
    %v749 = vunpack.c.h.b16 %v646
    %v750 = vpack.c.b16 %v688, %v686
    %v751 = vpack.c.b16 %v689, %v687
    %v752 = vpack.c.b16 %v692, %v690
    %v753 = vpack.c.b16 %v693, %v691
    %v754 = vpack.c.b16 %v696, %v694
    %v755 = vpack.c.b16 %v697, %v695
    %v756 = vpack.c.b16 %v700, %v698
    %v757 = vpack.c.b16 %v701, %v699
    %v758 = vpack.c.b16 %v704, %v702
    %v759 = vpack.c.b16 %v705, %v703
    %v760 = vpack.c.b16 %v708, %v706
    %v761 = vpack.c.b16 %v709, %v707
    %v762 = vpack.c.b16 %v712, %v710
    %v763 = vpack.c.b16 %v713, %v711
    %v764 = vpack.c.b16 %v716, %v714
    %v765 = vpack.c.b16 %v717, %v715
    %v766 = vpack.c.b16 %v720, %v718
    %v767 = vpack.c.b16 %v721, %v719
    %v768 = vpack.c.b16 %v724, %v722
    %v769 = vpack.c.b16 %v725, %v723
    %v770 = vpack.c.b16 %v728, %v726
    %v771 = vpack.c.b16 %v729, %v727
    %v772 = vpack.c.b16 %v732, %v730
    %v773 = vpack.c.b16 %v733, %v731
    %v774 = vpack.c.b16 %v736, %v734
    %v775 = vpack.c.b16 %v737, %v735
    %v776 = vpack.c.b16 %v740, %v738
    %v777 = vpack.c.b16 %v741, %v739
    %v778 = vpack.c.b16 %v744, %v742
    %v779 = vpack.c.b16 %v745, %v743
    %v780 = vpack.c.b16 %v748, %v746
    %v781 = vpack.c.b16 %v749, %v747
    %814 = vmatprep.subr.bf16.mxu0 %v751
    %815 = vmatpush1.bf16.msra.mxu0 %v750
    %816 = vmatprep.subr.bf16.mxu0 %v753
    %817 = vmatpush1.bf16.msra.mxu0 %v752
    %818 = vmatprep.subr.bf16.mxu0 %v755
    %819 = vmatpush1.bf16.msra.mxu0 %v754
    %820 = vmatprep.subr.bf16.mxu0 %v757
    %821 = vmatpush1.bf16.msra.mxu0 %v756
    %822 = vmatprep.subr.bf16.mxu0 %v759
    %823 = vmatpush1.bf16.msra.mxu0 %v758
    %824 = vmatprep.subr.bf16.mxu0 %v761
    %825 = vmatpush1.bf16.msra.mxu0 %v760
    %826 = vmatprep.subr.bf16.mxu0 %v763
    %827 = vmatpush1.bf16.msra.mxu0 %v762
    %828 = vmatprep.subr.bf16.mxu0 %v765
    %829 = vmatpush1.bf16.msra.mxu0 %v764
    %830 = vmatprep.subr.bf16.mxu0 %v767
    %831 = vmatpush1.bf16.msra.mxu0 %v766
    %832 = vmatprep.subr.bf16.mxu0 %v769
    %833 = vmatpush1.bf16.msra.mxu0 %v768
    %834 = vmatprep.subr.bf16.mxu0 %v771
    %835 = vmatpush1.bf16.msra.mxu0 %v770
    %836 = vmatprep.subr.bf16.mxu0 %v773
    %837 = vmatpush1.bf16.msra.mxu0 %v772
    %838 = vmatprep.subr.bf16.mxu0 %v775
    %839 = vmatpush1.bf16.msra.mxu0 %v774
    %840 = vmatprep.subr.bf16.mxu0 %v777
    %841 = vmatpush1.bf16.msra.mxu0 %v776
    %842 = vmatprep.subr.bf16.mxu0 %v779
    %843 = vmatpush1.bf16.msra.mxu0 %v778
    %844 = vmatprep.subr.bf16.mxu0 %v781
    %845 = vmatpush1.bf16.msra.mxu0 %v780
    %846 = vmatprep.mubr.bf16.mxu0 %v651
    %847 = vmatmul.mubr.bf16.gmra.mrb[0].mxu0 %v650
    %v848 = vpop.f32.mrb[0].mxu0
    %v849 = vadd.f32 0.0, %v848
    %v850 = vpop.f32.mrb[0].mxu0
    %v851 = vadd.f32 0.0, %v850
    %v852 = vpop.f32.mrb[0].mxu0
    %v853 = vpop.f32.mrb[0].mxu0
    %854 = vdwg.mxu0
    %vm855 = vcmp.gt.f32.partialorder %v849, 0.5
    %vm856 = vcmp.gt.f32.partialorder %v851, 0.5
    %v857 = vsel %vm855, 1, 0
    %v858 = vsel %vm856, 1, 0
    %v859 = vcvt.s32.f32 %v857
    %v860 = vcvt.s32.f32 %v858
    %v861 = vsub.f32 1.0, %v859
    %v862 = vsub.f32 1.0, %v860
    %v863 = vadd.f32 %v859, %v860
    %864 = vadd.xlane.f32.xlu0 %v863
    %v865 = vpop.xlane.xlu0 %864
    %v866 = vrot.slane %v865, 4
    %v867 = vadd.f32 %v865, %v866
    %v868 = vrot.slane %v867, 2
    %v869 = vadd.f32 %v867, %v868
    %v870 = vrot.slane %v869, 1
    %v871 = vadd.f32 %v869, %v870
    %s872 = vtos %v871
    %s873 = ssub.f32 2048.0, %s872
    %v874 = vrcp.pop 2048.0
    %s875 = vtos %v874
    %s876 = smul.f32 %s873, %s875
    %s877 = sld [smem:[#allocation5]]
    %s878 = smul.u32 %s877, 2
    %s879 = smul.addr %s878, 8
    %s880 = scalar_lea.vmem [#allocation2], %s879
    %v881 = vld [vmem:[%s880] sm:$0xff]
    %v882 = vld [vmem:[%s880 + $0x8] sm:$0xff]
    %v883 = vld [vmem:[#allocation2] sm:$0xff]
    %v884 = vld [vmem:[#allocation2 + $0x8] sm:$0xff]
    %v885 = vmul.f32 %v861, %v883
    %v886 = vmul.f32 %v862, %v884
    %v887 = vmul.f32 %v859, %v881
    %v888 = vmul.f32 %v860, %v882
    %v889 = vadd.f32 %v885, %v887
    %v890 = vadd.f32 %v886, %v888
    %891 = vst [vmem:[#allocation3] sm:$0xff] %v889
    %892 = vst [vmem:[#allocation3 + $0x8] sm:$0xff] %v890
    %s893 = sld [smem:[#allocation5 + $0x1]]
    %s894 = smul.u32 %s893, 2
    %s895 = smul.addr %s894, 8
    %s896 = scalar_lea.vmem [#allocation2], %s895
    %v897 = vld [vmem:[%s896] sm:$0xff]
    %v898 = vld [vmem:[%s896 + $0x8] sm:$0xff]
    %v899 = vld [vmem:[%s593] sm:$0xff]
    %v900 = vld [vmem:[%s593 + $0x8] sm:$0xff]
    %v901 = vmul.f32 %v861, %v899
    %v902 = vmul.f32 %v862, %v900
    %v903 = vmul.f32 %v859, %v897
    %v904 = vmul.f32 %v860, %v898
    %v905 = vadd.f32 %v901, %v903
    %v906 = vadd.f32 %v902, %v904
    %s907 = scalar_lea.vmem [#allocation3], 16
    %908 = vst [vmem:[%s907] sm:$0xff] %v905
    %909 = vst [vmem:[%s907 + $0x8] sm:$0xff] %v906
    %s910 = sld [smem:[#allocation5 + $0x2]]
    %s911 = smul.u32 %s910, 2
    %s912 = smul.addr %s911, 8
    %s913 = scalar_lea.vmem [#allocation2], %s912
    %v914 = vld [vmem:[%s913] sm:$0xff]
    %v915 = vld [vmem:[%s913 + $0x8] sm:$0xff]
    %v916 = vld [vmem:[%s596] sm:$0xff]
    %v917 = vld [vmem:[%s596 + $0x8] sm:$0xff]
    %v918 = vmul.f32 %v861, %v916
    %v919 = vmul.f32 %v862, %v917
    %v920 = vmul.f32 %v859, %v914
    %v921 = vmul.f32 %v860, %v915
    %v922 = vadd.f32 %v918, %v920
    %v923 = vadd.f32 %v919, %v921
    %s924 = scalar_lea.vmem [#allocation3], 32
    %925 = vst [vmem:[%s924] sm:$0xff] %v922
    %926 = vst [vmem:[%s924 + $0x8] sm:$0xff] %v923
    %s927 = sld [smem:[#allocation5 + $0x3]]
    %s928 = smul.u32 %s927, 2
    %s929 = smul.addr %s928, 8
    %s930 = scalar_lea.vmem [#allocation2], %s929
    %v931 = vld [vmem:[%s930] sm:$0xff]
    %v932 = vld [vmem:[%s930 + $0x8] sm:$0xff]
    %v933 = vld [vmem:[%s599] sm:$0xff]
    %v934 = vld [vmem:[%s599 + $0x8] sm:$0xff]
    %v935 = vmul.f32 %v861, %v933
    %v936 = vmul.f32 %v862, %v934
    %v937 = vmul.f32 %v859, %v931
    %v938 = vmul.f32 %v860, %v932
    %v939 = vadd.f32 %v935, %v937
    %v940 = vadd.f32 %v936, %v938
    %s941 = scalar_lea.vmem [#allocation3], 48
    %942 = vst [vmem:[%s941] sm:$0xff] %v939
    %943 = vst [vmem:[%s941 + $0x8] sm:$0xff] %v940
    %s944 = sld [smem:[#allocation5 + $0x4]]
    %s945 = smul.u32 %s944, 2
    %s946 = smul.addr %s945, 8
    %s947 = scalar_lea.vmem [#allocation2], %s946
    %v948 = vld [vmem:[%s947] sm:$0xff]
    %v949 = vld [vmem:[%s947 + $0x8] sm:$0xff]
    %v950 = vld [vmem:[%s602] sm:$0xff]
    %v951 = vld [vmem:[%s602 + $0x8] sm:$0xff]
    %v952 = vmul.f32 %v861, %v950
    %v953 = vmul.f32 %v862, %v951
    %v954 = vmul.f32 %v859, %v948
    %v955 = vmul.f32 %v860, %v949
    %v956 = vadd.f32 %v952, %v954
    %v957 = vadd.f32 %v953, %v955
    %s958 = scalar_lea.vmem [#allocation3], 64
    %959 = vst [vmem:[%s958] sm:$0xff] %v956
    %960 = vst [vmem:[%s958 + $0x8] sm:$0xff] %v957
    %s961 = sld [smem:[#allocation5 + $0x5]]
    %s962 = smul.u32 %s961, 2
    %s963 = smul.addr %s962, 8
    %s964 = scalar_lea.vmem [#allocation2], %s963
    %v965 = vld [vmem:[%s964] sm:$0xff]
    %v966 = vld [vmem:[%s964 + $0x8] sm:$0xff]
    %v967 = vld [vmem:[%s605] sm:$0xff]
    %v968 = vld [vmem:[%s605 + $0x8] sm:$0xff]
    %v969 = vmul.f32 %v861, %v967
    %v970 = vmul.f32 %v862, %v968
    %v971 = vmul.f32 %v859, %v965
    %v972 = vmul.f32 %v860, %v966
    %v973 = vadd.f32 %v969, %v971
    %v974 = vadd.f32 %v970, %v972
    %s975 = scalar_lea.vmem [#allocation3], 80
    %976 = vst [vmem:[%s975] sm:$0xff] %v973
    %977 = vst [vmem:[%s975 + $0x8] sm:$0xff] %v974
    %s978 = sld [smem:[#allocation5 + $0x6]]
    %s979 = smul.u32 %s978, 2
    %s980 = smul.addr %s979, 8
    %s981 = scalar_lea.vmem [#allocation2], %s980
    %v982 = vld [vmem:[%s981] sm:$0xff]
    %v983 = vld [vmem:[%s981 + $0x8] sm:$0xff]
    %v984 = vld [vmem:[%s608] sm:$0xff]
    %v985 = vld [vmem:[%s608 + $0x8] sm:$0xff]
    %v986 = vmul.f32 %v861, %v984
    %v987 = vmul.f32 %v862, %v985
    %v988 = vmul.f32 %v859, %v982
    %v989 = vmul.f32 %v860, %v983
    %v990 = vadd.f32 %v986, %v988
    %v991 = vadd.f32 %v987, %v989
    %s992 = scalar_lea.vmem [#allocation3], 96
    %993 = vst [vmem:[%s992] sm:$0xff] %v990
    %994 = vst [vmem:[%s992 + $0x8] sm:$0xff] %v991
    %s995 = sld [smem:[#allocation5 + $0x7]]
    %s996 = smul.u32 %s995, 2
    %s997 = smul.addr %s996, 8
    %s998 = scalar_lea.vmem [#allocation2], %s997
    %v999 = vld [vmem:[%s998] sm:$0xff]
    %v1000 = vld [vmem:[%s998 + $0x8] sm:$0xff]
    %v1001 = vld [vmem:[%s611] sm:$0xff]
    %v1002 = vld [vmem:[%s611 + $0x8] sm:$0xff]
    %v1003 = vmul.f32 %v861, %v1001
    %v1004 = vmul.f32 %v862, %v1002
    %v1005 = vmul.f32 %v859, %v999
    %v1006 = vmul.f32 %v860, %v1000
    %v1007 = vadd.f32 %v1003, %v1005
    %v1008 = vadd.f32 %v1004, %v1006
    %s1009 = scalar_lea.vmem [#allocation3], 112
    %1010 = vst [vmem:[%s1009] sm:$0xff] %v1007
    %1011 = vst [vmem:[%s1009 + $0x8] sm:$0xff] %v1008
    %v1012 = vld [vmem:[%s7] sm:$0x1]
    %v1014 = vlaneseq
    %v1015 = vshrl.u32 %v1014, 7
    %v1016 = vsub.s32 0, %v1015
    %v1017 = vrot.slane %v1012, %v1016
    %v1019 = vld [vmem:[#allocation3] ss:$8 sm:$0x3]
    %s1020 = scalar_lea.vmem [#allocation3], 16
    %v1021 = vld [vmem:[%s1020] ss:$8 sm:$0x3]
    %s1022 = scalar_lea.vmem [#allocation3], 32
    %v1023 = vld [vmem:[%s1022] ss:$8 sm:$0x3]
    %s1024 = scalar_lea.vmem [#allocation3], 48
    %v1025 = vld [vmem:[%s1024] ss:$8 sm:$0x3]
    %s1026 = scalar_lea.vmem [#allocation3], 64
    %v1027 = vld [vmem:[%s1026] ss:$8 sm:$0x3]
    %s1028 = scalar_lea.vmem [#allocation3], 80
    %v1029 = vld [vmem:[%s1028] ss:$8 sm:$0x3]
    %s1030 = scalar_lea.vmem [#allocation3], 96
    %v1031 = vld [vmem:[%s1030] ss:$8 sm:$0x3]
    %s1032 = scalar_lea.vmem [#allocation3], 112
    %v1033 = vld [vmem:[%s1032] ss:$8 sm:$0x3]
    %v1042 = vlaneseq
    %v1043 = vshrl.u32 %v1042, 7
    %v1044 = vsub.s32 0, %v1043
    %v1045 = vrot.slane %v1019, %v1044
    %v1046 = vlaneseq
    %v1047 = vshrl.u32 %v1046, 7
    %v1048 = vsub.s32 1, %v1047
    %v1049 = vrot.slane %v1019, %v1048
    %v1050 = vlaneseq
    %v1051 = vshrl.u32 %v1050, 7
    %v1052 = vsub.s32 0, %v1051
    %v1053 = vrot.slane %v1021, %v1052
    %v1054 = vlaneseq
    %v1055 = vshrl.u32 %v1054, 7
    %v1056 = vsub.s32 1, %v1055
    %v1057 = vrot.slane %v1021, %v1056
    %v1058 = vlaneseq
    %v1059 = vshrl.u32 %v1058, 7
    %v1060 = vsub.s32 0, %v1059
    %v1061 = vrot.slane %v1023, %v1060
    %v1062 = vlaneseq
    %v1063 = vshrl.u32 %v1062, 7
    %v1064 = vsub.s32 1, %v1063
    %v1065 = vrot.slane %v1023, %v1064
    %v1066 = vlaneseq
    %v1067 = vshrl.u32 %v1066, 7
    %v1068 = vsub.s32 0, %v1067
    %v1069 = vrot.slane %v1025, %v1068
    %v1070 = vlaneseq
    %v1071 = vshrl.u32 %v1070, 7
    %v1072 = vsub.s32 1, %v1071
    %v1073 = vrot.slane %v1025, %v1072
    %v1074 = vlaneseq
    %v1075 = vshrl.u32 %v1074, 7
    %v1076 = vsub.s32 0, %v1075
    %v1077 = vrot.slane %v1027, %v1076
    %v1078 = vlaneseq
    %v1079 = vshrl.u32 %v1078, 7
    %v1080 = vsub.s32 1, %v1079
    %v1081 = vrot.slane %v1027, %v1080
    %v1082 = vlaneseq
    %v1083 = vshrl.u32 %v1082, 7
    %v1084 = vsub.s32 0, %v1083
    %v1085 = vrot.slane %v1029, %v1084
    %v1086 = vlaneseq
    %v1087 = vshrl.u32 %v1086, 7
    %v1088 = vsub.s32 1, %v1087
    %v1089 = vrot.slane %v1029, %v1088
    %v1090 = vlaneseq
    %v1091 = vshrl.u32 %v1090, 7
    %v1092 = vsub.s32 0, %v1091
    %v1093 = vrot.slane %v1031, %v1092
    %v1094 = vlaneseq
    %v1095 = vshrl.u32 %v1094, 7
    %v1096 = vsub.s32 1, %v1095
    %v1097 = vrot.slane %v1031, %v1096
    %v1098 = vlaneseq
    %v1099 = vshrl.u32 %v1098, 7
    %v1100 = vsub.s32 0, %v1099
    %v1101 = vrot.slane %v1033, %v1100
    %v1102 = vlaneseq
    %v1103 = vshrl.u32 %v1102, 7
    %v1104 = vsub.s32 1, %v1103
    %v1105 = vrot.slane %v1033, %v1104
    %v1122 = vpack.c.bf16 %v1045, %v1045
    %v1123 = vpack.c.bf16 %v1049, %v1049
    %v1124 = vpack.c.bf16 %v1053, %v1053
    %v1125 = vpack.c.bf16 %v1057, %v1057
    %v1126 = vpack.c.bf16 %v1061, %v1061
    %v1127 = vpack.c.bf16 %v1065, %v1065
    %v1128 = vpack.c.bf16 %v1069, %v1069
    %v1129 = vpack.c.bf16 %v1073, %v1073
    %v1130 = vpack.c.bf16 %v1077, %v1077
    %v1131 = vpack.c.bf16 %v1081, %v1081
    %v1132 = vpack.c.bf16 %v1085, %v1085
    %v1133 = vpack.c.bf16 %v1089, %v1089
    %v1134 = vpack.c.bf16 %v1093, %v1093
    %v1135 = vpack.c.bf16 %v1097, %v1097
    %v1136 = vpack.c.bf16 %v1101, %v1101
    %v1137 = vpack.c.bf16 %v1105, %v1105
    %v1138 = vld [vmem:[%s6] sm:$0xf]
    %v1139 = vld [vmem:[%s6 + $0x4] sm:$0xf]
    %v1140 = vld [vmem:[%s6 + $0x8] sm:$0xf]
    %v1141 = vld [vmem:[%s6 + $0xc] sm:$0xf]
    %v1142 = vld [vmem:[%s6 + $0x10] sm:$0xf]
    %v1143 = vld [vmem:[%s6 + $0x14] sm:$0xf]
    %v1144 = vld [vmem:[%s6 + $0x18] sm:$0xf]
    %v1145 = vld [vmem:[%s6 + $0x1c] sm:$0xf]
    %v1146 = vld [vmem:[%s6 + $0x20] sm:$0xf]
    %v1147 = vld [vmem:[%s6 + $0x24] sm:$0xf]
    %v1148 = vld [vmem:[%s6 + $0x28] sm:$0xf]
    %v1149 = vld [vmem:[%s6 + $0x2c] sm:$0xf]
    %v1150 = vld [vmem:[%s6 + $0x30] sm:$0xf]
    %v1151 = vld [vmem:[%s6 + $0x34] sm:$0xf]
    %v1152 = vld [vmem:[%s6 + $0x38] sm:$0xf]
    %v1153 = vld [vmem:[%s6 + $0x3c] sm:$0xf]
    %v1154 = vld [vmem:[%s6 + $0x40] sm:$0xf]
    %v1155 = vld [vmem:[%s6 + $0x44] sm:$0xf]
    %v1156 = vld [vmem:[%s6 + $0x48] sm:$0xf]
    %v1157 = vld [vmem:[%s6 + $0x4c] sm:$0xf]
    %v1158 = vld [vmem:[%s6 + $0x50] sm:$0xf]
    %v1159 = vld [vmem:[%s6 + $0x54] sm:$0xf]
    %v1160 = vld [vmem:[%s6 + $0x58] sm:$0xf]
    %v1161 = vld [vmem:[%s6 + $0x5c] sm:$0xf]
    %v1162 = vld [vmem:[%s6 + $0x60] sm:$0xf]
    %v1163 = vld [vmem:[%s6 + $0x64] sm:$0xf]
    %v1164 = vld [vmem:[%s6 + $0x68] sm:$0xf]
    %v1165 = vld [vmem:[%s6 + $0x6c] sm:$0xf]
    %v1166 = vld [vmem:[%s6 + $0x70] sm:$0xf]
    %v1167 = vld [vmem:[%s6 + $0x74] sm:$0xf]
    %v1168 = vld [vmem:[%s6 + $0x78] sm:$0xf]
    %v1169 = vld [vmem:[%s6 + $0x7c] sm:$0xf]
    %v1186 = vunpack.c.l.b16 %v1122
    %v1187 = vunpack.c.l.b16 %v1123
    %v1188 = vunpack.c.l.b16 %v1124
    %v1189 = vunpack.c.l.b16 %v1125
    %v1190 = vunpack.c.l.b16 %v1126
    %v1191 = vunpack.c.l.b16 %v1127
    %v1192 = vunpack.c.l.b16 %v1128
    %v1193 = vunpack.c.l.b16 %v1129
    %v1194 = vunpack.c.l.b16 %v1130
    %v1195 = vunpack.c.l.b16 %v1131
    %v1196 = vunpack.c.l.b16 %v1132
    %v1197 = vunpack.c.l.b16 %v1133
    %v1198 = vunpack.c.l.b16 %v1134
    %v1199 = vunpack.c.l.b16 %v1135
    %v1200 = vunpack.c.l.b16 %v1136
    %v1201 = vunpack.c.l.b16 %v1137
    %v1202 = vrot.slane %v1188, 7
    %vm1203 = vcmask 1041409
    %v1204 = vsel %vm1203, %v1202, %v1186
    %v1205 = vrot.slane %v1190, 6
    %vm1206 = vcmask 1042434
    %v1207 = vsel %vm1206, %v1205, %v1204
    %v1208 = vrot.slane %v1192, 5
    %vm1209 = vcmask 1043459
    %v1210 = vsel %vm1209, %v1208, %v1207
    %v1211 = vrot.slane %v1194, 4
    %vm1212 = vcmask 1044484
    %v1213 = vsel %vm1212, %v1211, %v1210
    %v1214 = vrot.slane %v1196, 3
    %vm1215 = vcmask 1045509
    %v1216 = vsel %vm1215, %v1214, %v1213
    %v1217 = vrot.slane %v1198, 2
    %vm1218 = vcmask 1046534
    %v1219 = vsel %vm1218, %v1217, %v1216
    %v1220 = vrot.slane %v1200, 1
    %vm1221 = vcmask 1047559
    %v1222 = vsel %vm1221, %v1220, %v1219
    %v1223 = vrot.slane %v1189, 7
    %v1224 = vsel %vm1203, %v1223, %v1187
    %v1225 = vrot.slane %v1191, 6
    %v1226 = vsel %vm1206, %v1225, %v1224
    %v1227 = vrot.slane %v1193, 5
    %v1228 = vsel %vm1209, %v1227, %v1226
    %v1229 = vrot.slane %v1195, 4
    %v1230 = vsel %vm1212, %v1229, %v1228
    %v1231 = vrot.slane %v1197, 3
    %v1232 = vsel %vm1215, %v1231, %v1230
    %v1233 = vrot.slane %v1199, 2
    %v1234 = vsel %vm1218, %v1233, %v1232
    %v1235 = vrot.slane %v1201, 1
    %v1236 = vsel %vm1221, %v1235, %v1234
    %v1237 = vpack.c.b16 %v1222, %v1222
    %v1238 = vpack.c.b16 %v1236, %v1236
    %v1273 = vunpack.c.l.b16 %v1138
    %v1274 = vunpack.c.l.b16 %v1139
    %v1275 = vunpack.c.l.b16 %v1140
    %v1276 = vunpack.c.l.b16 %v1141
    %v1277 = vunpack.c.l.b16 %v1142
    %v1278 = vunpack.c.l.b16 %v1143
    %v1279 = vunpack.c.l.b16 %v1144
    %v1280 = vunpack.c.l.b16 %v1145
    %v1281 = vunpack.c.l.b16 %v1146
    %v1282 = vunpack.c.l.b16 %v1147
    %v1283 = vunpack.c.l.b16 %v1148
    %v1284 = vunpack.c.l.b16 %v1149
    %v1285 = vunpack.c.l.b16 %v1150
    %v1286 = vunpack.c.l.b16 %v1151
    %v1287 = vunpack.c.l.b16 %v1152
    %v1288 = vunpack.c.l.b16 %v1153
    %v1289 = vunpack.c.l.b16 %v1154
    %v1290 = vunpack.c.l.b16 %v1155
    %v1291 = vunpack.c.l.b16 %v1156
    %v1292 = vunpack.c.l.b16 %v1157
    %v1293 = vunpack.c.l.b16 %v1158
    %v1294 = vunpack.c.l.b16 %v1159
    %v1295 = vunpack.c.l.b16 %v1160
    %v1296 = vunpack.c.l.b16 %v1161
    %v1297 = vunpack.c.l.b16 %v1162
    %v1298 = vunpack.c.l.b16 %v1163
    %v1299 = vunpack.c.l.b16 %v1164
    %v1300 = vunpack.c.l.b16 %v1165
    %v1301 = vunpack.c.l.b16 %v1166
    %v1302 = vunpack.c.l.b16 %v1167
    %v1303 = vunpack.c.l.b16 %v1168
    %v1304 = vunpack.c.l.b16 %v1169
    %v1305 = vpack.c.b16 %v1274, %v1273
    %v1306 = vpack.c.b16 %v1276, %v1275
    %v1307 = vpack.c.b16 %v1278, %v1277
    %v1308 = vpack.c.b16 %v1280, %v1279
    %v1309 = vpack.c.b16 %v1282, %v1281
    %v1310 = vpack.c.b16 %v1284, %v1283
    %v1311 = vpack.c.b16 %v1286, %v1285
    %v1312 = vpack.c.b16 %v1288, %v1287
    %v1313 = vpack.c.b16 %v1290, %v1289
    %v1314 = vpack.c.b16 %v1292, %v1291
    %v1315 = vpack.c.b16 %v1294, %v1293
    %v1316 = vpack.c.b16 %v1296, %v1295
    %v1317 = vpack.c.b16 %v1298, %v1297
    %v1318 = vpack.c.b16 %v1300, %v1299
    %v1319 = vpack.c.b16 %v1302, %v1301
    %v1320 = vpack.c.b16 %v1304, %v1303
    %1337 = vmatprep.subr.bf16.mxu0 0
    %1338 = vmatpush1.bf16.msra.mxu0 %v1305
    %1339 = vmatprep.subr.bf16.mxu0 0
    %1340 = vmatpush1.bf16.msra.mxu0 %v1306
    %1341 = vmatprep.subr.bf16.mxu0 0
    %1342 = vmatpush1.bf16.msra.mxu0 %v1307
    %1343 = vmatprep.subr.bf16.mxu0 0
    %1344 = vmatpush1.bf16.msra.mxu0 %v1308
    %1345 = vmatprep.subr.bf16.mxu0 0
    %1346 = vmatpush1.bf16.msra.mxu0 %v1309
    %1347 = vmatprep.subr.bf16.mxu0 0
    %1348 = vmatpush1.bf16.msra.mxu0 %v1310
    %1349 = vmatprep.subr.bf16.mxu0 0
    %1350 = vmatpush1.bf16.msra.mxu0 %v1311
    %1351 = vmatprep.subr.bf16.mxu0 0
    %1352 = vmatpush1.bf16.msra.mxu0 %v1312
    %1353 = vmatprep.subr.bf16.mxu0 0
    %1354 = vmatpush1.bf16.msra.mxu0 %v1313
    %1355 = vmatprep.subr.bf16.mxu0 0
    %1356 = vmatpush1.bf16.msra.mxu0 %v1314
    %1357 = vmatprep.subr.bf16.mxu0 0
    %1358 = vmatpush1.bf16.msra.mxu0 %v1315
    %1359 = vmatprep.subr.bf16.mxu0 0
    %1360 = vmatpush1.bf16.msra.mxu0 %v1316
    %1361 = vmatprep.subr.bf16.mxu0 0
    %1362 = vmatpush1.bf16.msra.mxu0 %v1317
    %1363 = vmatprep.subr.bf16.mxu0 0
    %1364 = vmatpush1.bf16.msra.mxu0 %v1318
    %1365 = vmatprep.subr.bf16.mxu0 0
    %1366 = vmatpush1.bf16.msra.mxu0 %v1319
    %1367 = vmatprep.subr.bf16.mxu0 0
    %1368 = vmatpush1.bf16.msra.mxu0 %v1320
    %1369 = vmatprep.mubr.bf16.mxu0 %v1238
    %1370 = vmatmul.mubr.bf16.gmra.mrb[0].mxu0 %v1237
    %v1371 = vpop.f32.mrb[0].mxu0
    %v1372 = vadd.f32 0.0, %v1371
    %v1373 = vpop.f32.mrb[0].mxu0
    %v1374 = vpop.f32.mrb[0].mxu0
    %v1375 = vpop.f32.mrb[0].mxu0
    %1376 = vdwg.mxu0
    %v1377 = vadd.f32 %v1017, %v1372
    %s1378 = scalar_lea.vmem [#allocation3], 1
    %v1379 = vld [vmem:[%s1378] ss:$8 sm:$0x3]
    %s1380 = scalar_lea.vmem [#allocation3], 17
    %v1381 = vld [vmem:[%s1380] ss:$8 sm:$0x3]
    %s1382 = scalar_lea.vmem [#allocation3], 33
    %v1383 = vld [vmem:[%s1382] ss:$8 sm:$0x3]
    %s1384 = scalar_lea.vmem [#allocation3], 49
    %v1385 = vld [vmem:[%s1384] ss:$8 sm:$0x3]
    %s1386 = scalar_lea.vmem [#allocation3], 65
    %v1387 = vld [vmem:[%s1386] ss:$8 sm:$0x3]
    %s1388 = scalar_lea.vmem [#allocation3], 81
    %v1389 = vld [vmem:[%s1388] ss:$8 sm:$0x3]
    %s1390 = scalar_lea.vmem [#allocation3], 97
    %v1391 = vld [vmem:[%s1390] ss:$8 sm:$0x3]
    %s1392 = scalar_lea.vmem [#allocation3], 113
    %v1393 = vld [vmem:[%s1392] ss:$8 sm:$0x3]
    %v1402 = vlaneseq
    %v1403 = vshrl.u32 %v1402, 7
    %v1404 = vsub.s32 0, %v1403
    %v1405 = vrot.slane %v1379, %v1404
    %v1406 = vlaneseq
    %v1407 = vshrl.u32 %v1406, 7
    %v1408 = vsub.s32 1, %v1407
    %v1409 = vrot.slane %v1379, %v1408
    %v1410 = vlaneseq
    %v1411 = vshrl.u32 %v1410, 7
    %v1412 = vsub.s32 0, %v1411
    %v1413 = vrot.slane %v1381, %v1412
    %v1414 = vlaneseq
    %v1415 = vshrl.u32 %v1414, 7
    %v1416 = vsub.s32 1, %v1415
    %v1417 = vrot.slane %v1381, %v1416
    %v1418 = vlaneseq
    %v1419 = vshrl.u32 %v1418, 7
    %v1420 = vsub.s32 0, %v1419
    %v1421 = vrot.slane %v1383, %v1420
    %v1422 = vlaneseq
    %v1423 = vshrl.u32 %v1422, 7
    %v1424 = vsub.s32 1, %v1423
    %v1425 = vrot.slane %v1383, %v1424
    %v1426 = vlaneseq
    %v1427 = vshrl.u32 %v1426, 7
    %v1428 = vsub.s32 0, %v1427
    %v1429 = vrot.slane %v1385, %v1428
    %v1430 = vlaneseq
    %v1431 = vshrl.u32 %v1430, 7
    %v1432 = vsub.s32 1, %v1431
    %v1433 = vrot.slane %v1385, %v1432
    %v1434 = vlaneseq
    %v1435 = vshrl.u32 %v1434, 7
    %v1436 = vsub.s32 0, %v1435
    %v1437 = vrot.slane %v1387, %v1436
    %v1438 = vlaneseq
    %v1439 = vshrl.u32 %v1438, 7
    %v1440 = vsub.s32 1, %v1439
    %v1441 = vrot.slane %v1387, %v1440
    %v1442 = vlaneseq
    %v1443 = vshrl.u32 %v1442, 7
    %v1444 = vsub.s32 0, %v1443
    %v1445 = vrot.slane %v1389, %v1444
    %v1446 = vlaneseq
    %v1447 = vshrl.u32 %v1446, 7
    %v1448 = vsub.s32 1, %v1447
    %v1449 = vrot.slane %v1389, %v1448
    %v1450 = vlaneseq
    %v1451 = vshrl.u32 %v1450, 7
    %v1452 = vsub.s32 0, %v1451
    %v1453 = vrot.slane %v1391, %v1452
    %v1454 = vlaneseq
    %v1455 = vshrl.u32 %v1454, 7
    %v1456 = vsub.s32 1, %v1455
    %v1457 = vrot.slane %v1391, %v1456
    %v1458 = vlaneseq
    %v1459 = vshrl.u32 %v1458, 7
    %v1460 = vsub.s32 0, %v1459
    %v1461 = vrot.slane %v1393, %v1460
    %v1462 = vlaneseq
    %v1463 = vshrl.u32 %v1462, 7
    %v1464 = vsub.s32 1, %v1463
    %v1465 = vrot.slane %v1393, %v1464
    %v1482 = vpack.c.bf16 %v1405, %v1405
    %v1483 = vpack.c.bf16 %v1409, %v1409
    %v1484 = vpack.c.bf16 %v1413, %v1413
    %v1485 = vpack.c.bf16 %v1417, %v1417
    %v1486 = vpack.c.bf16 %v1421, %v1421
    %v1487 = vpack.c.bf16 %v1425, %v1425
    %v1488 = vpack.c.bf16 %v1429, %v1429
    %v1489 = vpack.c.bf16 %v1433, %v1433
    %v1490 = vpack.c.bf16 %v1437, %v1437
    %v1491 = vpack.c.bf16 %v1441, %v1441
    %v1492 = vpack.c.bf16 %v1445, %v1445
    %v1493 = vpack.c.bf16 %v1449, %v1449
    %v1494 = vpack.c.bf16 %v1453, %v1453
    %v1495 = vpack.c.bf16 %v1457, %v1457
    %v1496 = vpack.c.bf16 %v1461, %v1461
    %v1497 = vpack.c.bf16 %v1465, %v1465
    %s1498 = scalar_lea.vmem %s6, 128
    %v1499 = vld [vmem:[%s1498] sm:$0xf]
    %v1500 = vld [vmem:[%s1498 + $0x4] sm:$0xf]
    %v1501 = vld [vmem:[%s1498 + $0x8] sm:$0xf]
    %v1502 = vld [vmem:[%s1498 + $0xc] sm:$0xf]
    %v1503 = vld [vmem:[%s1498 + $0x10] sm:$0xf]
    %v1504 = vld [vmem:[%s1498 + $0x14] sm:$0xf]
    %v1505 = vld [vmem:[%s1498 + $0x18] sm:$0xf]
    %v1506 = vld [vmem:[%s1498 + $0x1c] sm:$0xf]
    %v1507 = vld [vmem:[%s1498 + $0x20] sm:$0xf]
    %v1508 = vld [vmem:[%s1498 + $0x24] sm:$0xf]
    %v1509 = vld [vmem:[%s1498 + $0x28] sm:$0xf]
    %v1510 = vld [vmem:[%s1498 + $0x2c] sm:$0xf]
    %v1511 = vld [vmem:[%s1498 + $0x30] sm:$0xf]
    %v1512 = vld [vmem:[%s1498 + $0x34] sm:$0xf]
    %v1513 = vld [vmem:[%s1498 + $0x38] sm:$0xf]
    %v1514 = vld [vmem:[%s1498 + $0x3c] sm:$0xf]
    %v1515 = vld [vmem:[%s1498 + $0x40] sm:$0xf]
    %v1516 = vld [vmem:[%s1498 + $0x44] sm:$0xf]
    %v1517 = vld [vmem:[%s1498 + $0x48] sm:$0xf]
    %v1518 = vld [vmem:[%s1498 + $0x4c] sm:$0xf]
    %v1519 = vld [vmem:[%s1498 + $0x50] sm:$0xf]
    %v1520 = vld [vmem:[%s1498 + $0x54] sm:$0xf]
    %v1521 = vld [vmem:[%s1498 + $0x58] sm:$0xf]
    %v1522 = vld [vmem:[%s1498 + $0x5c] sm:$0xf]
    %v1523 = vld [vmem:[%s1498 + $0x60] sm:$0xf]
    %v1524 = vld [vmem:[%s1498 + $0x64] sm:$0xf]
    %v1525 = vld [vmem:[%s1498 + $0x68] sm:$0xf]
    %v1526 = vld [vmem:[%s1498 + $0x6c] sm:$0xf]
    %v1527 = vld [vmem:[%s1498 + $0x70] sm:$0xf]
    %v1528 = vld [vmem:[%s1498 + $0x74] sm:$0xf]
    %v1529 = vld [vmem:[%s1498 + $0x78] sm:$0xf]
    %v1530 = vld [vmem:[%s1498 + $0x7c] sm:$0xf]
    %v1547 = vunpack.c.l.b16 %v1482
    %v1548 = vunpack.c.l.b16 %v1483
    %v1549 = vunpack.c.l.b16 %v1484
    %v1550 = vunpack.c.l.b16 %v1485
    %v1551 = vunpack.c.l.b16 %v1486
    %v1552 = vunpack.c.l.b16 %v1487
    %v1553 = vunpack.c.l.b16 %v1488
    %v1554 = vunpack.c.l.b16 %v1489
    %v1555 = vunpack.c.l.b16 %v1490
    %v1556 = vunpack.c.l.b16 %v1491
    %v1557 = vunpack.c.l.b16 %v1492
    %v1558 = vunpack.c.l.b16 %v1493
    %v1559 = vunpack.c.l.b16 %v1494
    %v1560 = vunpack.c.l.b16 %v1495
    %v1561 = vunpack.c.l.b16 %v1496
    %v1562 = vunpack.c.l.b16 %v1497
    %v1563 = vrot.slane %v1549, 7
    %v1564 = vsel %vm1203, %v1563, %v1547
    %v1565 = vrot.slane %v1551, 6
    %v1566 = vsel %vm1206, %v1565, %v1564
    %v1567 = vrot.slane %v1553, 5
    %v1568 = vsel %vm1209, %v1567, %v1566
    %v1569 = vrot.slane %v1555, 4
    %v1570 = vsel %vm1212, %v1569, %v1568
    %v1571 = vrot.slane %v1557, 3
    %v1572 = vsel %vm1215, %v1571, %v1570
    %v1573 = vrot.slane %v1559, 2
    %v1574 = vsel %vm1218, %v1573, %v1572
    %v1575 = vrot.slane %v1561, 1
    %v1576 = vsel %vm1221, %v1575, %v1574
    %v1577 = vrot.slane %v1550, 7
    %v1578 = vsel %vm1203, %v1577, %v1548
    %v1579 = vrot.slane %v1552, 6
    %v1580 = vsel %vm1206, %v1579, %v1578
    %v1581 = vrot.slane %v1554, 5
    %v1582 = vsel %vm1209, %v1581, %v1580
    %v1583 = vrot.slane %v1556, 4
    %v1584 = vsel %vm1212, %v1583, %v1582
    %v1585 = vrot.slane %v1558, 3
    %v1586 = vsel %vm1215, %v1585, %v1584
    %v1587 = vrot.slane %v1560, 2
    %v1588 = vsel %vm1218, %v1587, %v1586
    %v1589 = vrot.slane %v1562, 1
    %v1590 = vsel %vm1221, %v1589, %v1588
    %v1591 = vpack.c.b16 %v1576, %v1576
    %v1592 = vpack.c.b16 %v1590, %v1590
    %v1627 = vunpack.c.l.b16 %v1499
    %v1628 = vunpack.c.l.b16 %v1500
    %v1629 = vunpack.c.l.b16 %v1501
    %v1630 = vunpack.c.l.b16 %v1502
    %v1631 = vunpack.c.l.b16 %v1503
    %v1632 = vunpack.c.l.b16 %v1504
    %v1633 = vunpack.c.l.b16 %v1505
    %v1634 = vunpack.c.l.b16 %v1506
    %v1635 = vunpack.c.l.b16 %v1507
    %v1636 = vunpack.c.l.b16 %v1508
    %v1637 = vunpack.c.l.b16 %v1509
    %v1638 = vunpack.c.l.b16 %v1510
    %v1639 = vunpack.c.l.b16 %v1511
    %v1640 = vunpack.c.l.b16 %v1512
    %v1641 = vunpack.c.l.b16 %v1513
    %v1642 = vunpack.c.l.b16 %v1514
    %v1643 = vunpack.c.l.b16 %v1515
    %v1644 = vunpack.c.l.b16 %v1516
    %v1645 = vunpack.c.l.b16 %v1517
    %v1646 = vunpack.c.l.b16 %v1518
    %v1647 = vunpack.c.l.b16 %v1519
    %v1648 = vunpack.c.l.b16 %v1520
    %v1649 = vunpack.c.l.b16 %v1521
    %v1650 = vunpack.c.l.b16 %v1522
    %v1651 = vunpack.c.l.b16 %v1523
    %v1652 = vunpack.c.l.b16 %v1524
    %v1653 = vunpack.c.l.b16 %v1525
    %v1654 = vunpack.c.l.b16 %v1526
    %v1655 = vunpack.c.l.b16 %v1527
    %v1656 = vunpack.c.l.b16 %v1528
    %v1657 = vunpack.c.l.b16 %v1529
    %v1658 = vunpack.c.l.b16 %v1530
    %v1659 = vpack.c.b16 %v1628, %v1627
    %v1660 = vpack.c.b16 %v1630, %v1629
    %v1661 = vpack.c.b16 %v1632, %v1631
    %v1662 = vpack.c.b16 %v1634, %v1633
    %v1663 = vpack.c.b16 %v1636, %v1635
    %v1664 = vpack.c.b16 %v1638, %v1637
    %v1665 = vpack.c.b16 %v1640, %v1639
    %v1666 = vpack.c.b16 %v1642, %v1641
    %v1667 = vpack.c.b16 %v1644, %v1643
    %v1668 = vpack.c.b16 %v1646, %v1645
    %v1669 = vpack.c.b16 %v1648, %v1647
    %v1670 = vpack.c.b16 %v1650, %v1649
    %v1671 = vpack.c.b16 %v1652, %v1651
    %v1672 = vpack.c.b16 %v1654, %v1653
    %v1673 = vpack.c.b16 %v1656, %v1655
    %v1674 = vpack.c.b16 %v1658, %v1657
    %1691 = vmatprep.subr.bf16.mxu0 0
    %1692 = vmatpush1.bf16.msra.mxu0 %v1659
    %1693 = vmatprep.subr.bf16.mxu0 0
    %1694 = vmatpush1.bf16.msra.mxu0 %v1660
    %1695 = vmatprep.subr.bf16.mxu0 0
    %1696 = vmatpush1.bf16.msra.mxu0 %v1661
    %1697 = vmatprep.subr.bf16.mxu0 0
    %1698 = vmatpush1.bf16.msra.mxu0 %v1662
    %1699 = vmatprep.subr.bf16.mxu0 0
    %1700 = vmatpush1.bf16.msra.mxu0 %v1663
    %1701 = vmatprep.subr.bf16.mxu0 0
    %1702 = vmatpush1.bf16.msra.mxu0 %v1664
    %1703 = vmatprep.subr.bf16.mxu0 0
    %1704 = vmatpush1.bf16.msra.mxu0 %v1665
    %1705 = vmatprep.subr.bf16.mxu0 0
    %1706 = vmatpush1.bf16.msra.mxu0 %v1666
    %1707 = vmatprep.subr.bf16.mxu0 0
    %1708 = vmatpush1.bf16.msra.mxu0 %v1667
    %1709 = vmatprep.subr.bf16.mxu0 0
    %1710 = vmatpush1.bf16.msra.mxu0 %v1668
    %1711 = vmatprep.subr.bf16.mxu0 0
    %1712 = vmatpush1.bf16.msra.mxu0 %v1669
    %1713 = vmatprep.subr.bf16.mxu0 0
    %1714 = vmatpush1.bf16.msra.mxu0 %v1670
    %1715 = vmatprep.subr.bf16.mxu0 0
    %1716 = vmatpush1.bf16.msra.mxu0 %v1671
    %1717 = vmatprep.subr.bf16.mxu0 0
    %1718 = vmatpush1.bf16.msra.mxu0 %v1672
    %1719 = vmatprep.subr.bf16.mxu0 0
    %1720 = vmatpush1.bf16.msra.mxu0 %v1673
    %1721 = vmatprep.subr.bf16.mxu0 0
    %1722 = vmatpush1.bf16.msra.mxu0 %v1674
    %1723 = vmatprep.mubr.bf16.mxu0 %v1592
    %1724 = vmatmul.mubr.bf16.gmra.mrb[0].mxu0 %v1591
    %v1725 = vpop.f32.mrb[0].mxu0
    %v1726 = vadd.f32 0.0, %v1725
    %v1727 = vpop.f32.mrb[0].mxu0
    %v1728 = vpop.f32.mrb[0].mxu0
    %v1729 = vpop.f32.mrb[0].mxu0
    %1730 = vdwg.mxu0
    %v1731 = vadd.f32 %v1377, %v1726
    %s1732 = scalar_lea.vmem [#allocation3], 2
    %v1733 = vld [vmem:[%s1732] ss:$8 sm:$0x3]
    %s1734 = scalar_lea.vmem [#allocation3], 18
    %v1735 = vld [vmem:[%s1734] ss:$8 sm:$0x3]
    %s1736 = scalar_lea.vmem [#allocation3], 34
    %v1737 = vld [vmem:[%s1736] ss:$8 sm:$0x3]
    %s1738 = scalar_lea.vmem [#allocation3], 50
    %v1739 = vld [vmem:[%s1738] ss:$8 sm:$0x3]
    %s1740 = scalar_lea.vmem [#allocation3], 66
    %v1741 = vld [vmem:[%s1740] ss:$8 sm:$0x3]
    %s1742 = scalar_lea.vmem [#allocation3], 82
    %v1743 = vld [vmem:[%s1742] ss:$8 sm:$0x3]
    %s1744 = scalar_lea.vmem [#allocation3], 98
    %v1745 = vld [vmem:[%s1744] ss:$8 sm:$0x3]
    %s1746 = scalar_lea.vmem [#allocation3], 114
    %v1747 = vld [vmem:[%s1746] ss:$8 sm:$0x3]
    %v1756 = vlaneseq
    %v1757 = vshrl.u32 %v1756, 7
    %v1758 = vsub.s32 0, %v1757
    %v1759 = vrot.slane %v1733, %v1758
    %v1760 = vlaneseq
    %v1761 = vshrl.u32 %v1760, 7
    %v1762 = vsub.s32 1, %v1761
    %v1763 = vrot.slane %v1733, %v1762
    %v1764 = vlaneseq
    %v1765 = vshrl.u32 %v1764, 7
    %v1766 = vsub.s32 0, %v1765
    %v1767 = vrot.slane %v1735, %v1766
    %v1768 = vlaneseq
    %v1769 = vshrl.u32 %v1768, 7
    %v1770 = vsub.s32 1, %v1769
    %v1771 = vrot.slane %v1735, %v1770
    %v1772 = vlaneseq
    %v1773 = vshrl.u32 %v1772, 7
    %v1774 = vsub.s32 0, %v1773
    %v1775 = vrot.slane %v1737, %v1774
    %v1776 = vlaneseq
    %v1777 = vshrl.u32 %v1776, 7
    %v1778 = vsub.s32 1, %v1777
    %v1779 = vrot.slane %v1737, %v1778
    %v1780 = vlaneseq
    %v1781 = vshrl.u32 %v1780, 7
    %v1782 = vsub.s32 0, %v1781
    %v1783 = vrot.slane %v1739, %v1782
    %v1784 = vlaneseq
    %v1785 = vshrl.u32 %v1784, 7
    %v1786 = vsub.s32 1, %v1785
    %v1787 = vrot.slane %v1739, %v1786
    %v1788 = vlaneseq
    %v1789 = vshrl.u32 %v1788, 7
    %v1790 = vsub.s32 0, %v1789
    %v1791 = vrot.slane %v1741, %v1790
    %v1792 = vlaneseq
    %v1793 = vshrl.u32 %v1792, 7
    %v1794 = vsub.s32 1, %v1793
    %v1795 = vrot.slane %v1741, %v1794
    %v1796 = vlaneseq
    %v1797 = vshrl.u32 %v1796, 7
    %v1798 = vsub.s32 0, %v1797
    %v1799 = vrot.slane %v1743, %v1798
    %v1800 = vlaneseq
    %v1801 = vshrl.u32 %v1800, 7
    %v1802 = vsub.s32 1, %v1801
    %v1803 = vrot.slane %v1743, %v1802
    %v1804 = vlaneseq
    %v1805 = vshrl.u32 %v1804, 7
    %v1806 = vsub.s32 0, %v1805
    %v1807 = vrot.slane %v1745, %v1806
    %v1808 = vlaneseq
    %v1809 = vshrl.u32 %v1808, 7
    %v1810 = vsub.s32 1, %v1809
    %v1811 = vrot.slane %v1745, %v1810
    %v1812 = vlaneseq
    %v1813 = vshrl.u32 %v1812, 7
    %v1814 = vsub.s32 0, %v1813
    %v1815 = vrot.slane %v1747, %v1814
    %v1816 = vlaneseq
    %v1817 = vshrl.u32 %v1816, 7
    %v1818 = vsub.s32 1, %v1817
    %v1819 = vrot.slane %v1747, %v1818
    %v1836 = vpack.c.bf16 %v1759, %v1759
    %v1837 = vpack.c.bf16 %v1763, %v1763
    %v1838 = vpack.c.bf16 %v1767, %v1767
    %v1839 = vpack.c.bf16 %v1771, %v1771
    %v1840 = vpack.c.bf16 %v1775, %v1775
    %v1841 = vpack.c.bf16 %v1779, %v1779
    %v1842 = vpack.c.bf16 %v1783, %v1783
    %v1843 = vpack.c.bf16 %v1787, %v1787
    %v1844 = vpack.c.bf16 %v1791, %v1791
    %v1845 = vpack.c.bf16 %v1795, %v1795
    %v1846 = vpack.c.bf16 %v1799, %v1799
    %v1847 = vpack.c.bf16 %v1803, %v1803
    %v1848 = vpack.c.bf16 %v1807, %v1807
    %v1849 = vpack.c.bf16 %v1811, %v1811
    %v1850 = vpack.c.bf16 %v1815, %v1815
    %v1851 = vpack.c.bf16 %v1819, %v1819
    %s1852 = scalar_lea.vmem %s6, 256
    %v1853 = vld [vmem:[%s1852] sm:$0xf]
    %v1854 = vld [vmem:[%s1852 + $0x4] sm:$0xf]
    %v1855 = vld [vmem:[%s1852 + $0x8] sm:$0xf]
    %v1856 = vld [vmem:[%s1852 + $0xc] sm:$0xf]
    %v1857 = vld [vmem:[%s1852 + $0x10] sm:$0xf]
    %v1858 = vld [vmem:[%s1852 + $0x14] sm:$0xf]
    %v1859 = vld [vmem:[%s1852 + $0x18] sm:$0xf]
    %v1860 = vld [vmem:[%s1852 + $0x1c] sm:$0xf]
    %v1861 = vld [vmem:[%s1852 + $0x20] sm:$0xf]
    %v1862 = vld [vmem:[%s1852 + $0x24] sm:$0xf]
    %v1863 = vld [vmem:[%s1852 + $0x28] sm:$0xf]
    %v1864 = vld [vmem:[%s1852 + $0x2c] sm:$0xf]
    %v1865 = vld [vmem:[%s1852 + $0x30] sm:$0xf]
    %v1866 = vld [vmem:[%s1852 + $0x34] sm:$0xf]
    %v1867 = vld [vmem:[%s1852 + $0x38] sm:$0xf]
    %v1868 = vld [vmem:[%s1852 + $0x3c] sm:$0xf]
    %v1869 = vld [vmem:[%s1852 + $0x40] sm:$0xf]
    %v1870 = vld [vmem:[%s1852 + $0x44] sm:$0xf]
    %v1871 = vld [vmem:[%s1852 + $0x48] sm:$0xf]
    %v1872 = vld [vmem:[%s1852 + $0x4c] sm:$0xf]
    %v1873 = vld [vmem:[%s1852 + $0x50] sm:$0xf]
    %v1874 = vld [vmem:[%s1852 + $0x54] sm:$0xf]
    %v1875 = vld [vmem:[%s1852 + $0x58] sm:$0xf]
    %v1876 = vld [vmem:[%s1852 + $0x5c] sm:$0xf]
    %v1877 = vld [vmem:[%s1852 + $0x60] sm:$0xf]
    %v1878 = vld [vmem:[%s1852 + $0x64] sm:$0xf]
    %v1879 = vld [vmem:[%s1852 + $0x68] sm:$0xf]
    %v1880 = vld [vmem:[%s1852 + $0x6c] sm:$0xf]
    %v1881 = vld [vmem:[%s1852 + $0x70] sm:$0xf]
    %v1882 = vld [vmem:[%s1852 + $0x74] sm:$0xf]
    %v1883 = vld [vmem:[%s1852 + $0x78] sm:$0xf]
    %v1884 = vld [vmem:[%s1852 + $0x7c] sm:$0xf]
    %v1901 = vunpack.c.l.b16 %v1836
    %v1902 = vunpack.c.l.b16 %v1837
    %v1903 = vunpack.c.l.b16 %v1838
    %v1904 = vunpack.c.l.b16 %v1839
    %v1905 = vunpack.c.l.b16 %v1840
    %v1906 = vunpack.c.l.b16 %v1841
    %v1907 = vunpack.c.l.b16 %v1842
    %v1908 = vunpack.c.l.b16 %v1843
    %v1909 = vunpack.c.l.b16 %v1844
    %v1910 = vunpack.c.l.b16 %v1845
    %v1911 = vunpack.c.l.b16 %v1846
    %v1912 = vunpack.c.l.b16 %v1847
    %v1913 = vunpack.c.l.b16 %v1848
    %v1914 = vunpack.c.l.b16 %v1849
    %v1915 = vunpack.c.l.b16 %v1850
    %v1916 = vunpack.c.l.b16 %v1851
    %v1917 = vrot.slane %v1903, 7
    %v1918 = vsel %vm1203, %v1917, %v1901
    %v1919 = vrot.slane %v1905, 6
    %v1920 = vsel %vm1206, %v1919, %v1918
    %v1921 = vrot.slane %v1907, 5
    %v1922 = vsel %vm1209, %v1921, %v1920
    %v1923 = vrot.slane %v1909, 4
    %v1924 = vsel %vm1212, %v1923, %v1922
    %v1925 = vrot.slane %v1911, 3
    %v1926 = vsel %vm1215, %v1925, %v1924
    %v1927 = vrot.slane %v1913, 2
    %v1928 = vsel %vm1218, %v1927, %v1926
    %v1929 = vrot.slane %v1915, 1
    %v1930 = vsel %vm1221, %v1929, %v1928
    %v1931 = vrot.slane %v1904, 7
    %v1932 = vsel %vm1203, %v1931, %v1902
    %v1933 = vrot.slane %v1906, 6
    %v1934 = vsel %vm1206, %v1933, %v1932
    %v1935 = vrot.slane %v1908, 5
    %v1936 = vsel %vm1209, %v1935, %v1934
    %v1937 = vrot.slane %v1910, 4
    %v1938 = vsel %vm1212, %v1937, %v1936
    %v1939 = vrot.slane %v1912, 3
    %v1940 = vsel %vm1215, %v1939, %v1938
    %v1941 = vrot.slane %v1914, 2
    %v1942 = vsel %vm1218, %v1941, %v1940
    %v1943 = vrot.slane %v1916, 1
    %v1944 = vsel %vm1221, %v1943, %v1942
    %v1945 = vpack.c.b16 %v1930, %v1930
    %v1946 = vpack.c.b16 %v1944, %v1944
    %v1981 = vunpack.c.l.b16 %v1853
    %v1982 = vunpack.c.l.b16 %v1854
    %v1983 = vunpack.c.l.b16 %v1855
    %v1984 = vunpack.c.l.b16 %v1856
    %v1985 = vunpack.c.l.b16 %v1857
    %v1986 = vunpack.c.l.b16 %v1858
    %v1987 = vunpack.c.l.b16 %v1859
    %v1988 = vunpack.c.l.b16 %v1860
    %v1989 = vunpack.c.l.b16 %v1861
    %v1990 = vunpack.c.l.b16 %v1862
    %v1991 = vunpack.c.l.b16 %v1863
    %v1992 = vunpack.c.l.b16 %v1864
    %v1993 = vunpack.c.l.b16 %v1865
    %v1994 = vunpack.c.l.b16 %v1866
    %v1995 = vunpack.c.l.b16 %v1867
    %v1996 = vunpack.c.l.b16 %v1868
    %v1997 = vunpack.c.l.b16 %v1869
    %v1998 = vunpack.c.l.b16 %v1870
    %v1999 = vunpack.c.l.b16 %v1871
    %v2000 = vunpack.c.l.b16 %v1872
    %v2001 = vunpack.c.l.b16 %v1873
    %v2002 = vunpack.c.l.b16 %v1874
    %v2003 = vunpack.c.l.b16 %v1875
    %v2004 = vunpack.c.l.b16 %v1876
    %v2005 = vunpack.c.l.b16 %v1877
    %v2006 = vunpack.c.l.b16 %v1878
    %v2007 = vunpack.c.l.b16 %v1879
    %v2008 = vunpack.c.l.b16 %v1880
    %v2009 = vunpack.c.l.b16 %v1881
    %v2010 = vunpack.c.l.b16 %v1882
    %v2011 = vunpack.c.l.b16 %v1883
    %v2012 = vunpack.c.l.b16 %v1884
    %v2013 = vpack.c.b16 %v1982, %v1981
    %v2014 = vpack.c.b16 %v1984, %v1983
    %v2015 = vpack.c.b16 %v1986, %v1985
    %v2016 = vpack.c.b16 %v1988, %v1987
    %v2017 = vpack.c.b16 %v1990, %v1989
    %v2018 = vpack.c.b16 %v1992, %v1991
    %v2019 = vpack.c.b16 %v1994, %v1993
    %v2020 = vpack.c.b16 %v1996, %v1995
    %v2021 = vpack.c.b16 %v1998, %v1997
    %v2022 = vpack.c.b16 %v2000, %v1999
    %v2023 = vpack.c.b16 %v2002, %v2001
    %v2024 = vpack.c.b16 %v2004, %v2003
    %v2025 = vpack.c.b16 %v2006, %v2005
    %v2026 = vpack.c.b16 %v2008, %v2007
    %v2027 = vpack.c.b16 %v2010, %v2009
    %v2028 = vpack.c.b16 %v2012, %v2011
    %2045 = vmatprep.subr.bf16.mxu0 0
    %2046 = vmatpush1.bf16.msra.mxu0 %v2013
    %2047 = vmatprep.subr.bf16.mxu0 0
    %2048 = vmatpush1.bf16.msra.mxu0 %v2014
    %2049 = vmatprep.subr.bf16.mxu0 0
    %2050 = vmatpush1.bf16.msra.mxu0 %v2015
    %2051 = vmatprep.subr.bf16.mxu0 0
    %2052 = vmatpush1.bf16.msra.mxu0 %v2016
    %2053 = vmatprep.subr.bf16.mxu0 0
    %2054 = vmatpush1.bf16.msra.mxu0 %v2017
    %2055 = vmatprep.subr.bf16.mxu0 0
    %2056 = vmatpush1.bf16.msra.mxu0 %v2018
    %2057 = vmatprep.subr.bf16.mxu0 0
    %2058 = vmatpush1.bf16.msra.mxu0 %v2019
    %2059 = vmatprep.subr.bf16.mxu0 0
    %2060 = vmatpush1.bf16.msra.mxu0 %v2020
    %2061 = vmatprep.subr.bf16.mxu0 0
    %2062 = vmatpush1.bf16.msra.mxu0 %v2021
    %2063 = vmatprep.subr.bf16.mxu0 0
    %2064 = vmatpush1.bf16.msra.mxu0 %v2022
    %2065 = vmatprep.subr.bf16.mxu0 0
    %2066 = vmatpush1.bf16.msra.mxu0 %v2023
    %2067 = vmatprep.subr.bf16.mxu0 0
    %2068 = vmatpush1.bf16.msra.mxu0 %v2024
    %2069 = vmatprep.subr.bf16.mxu0 0
    %2070 = vmatpush1.bf16.msra.mxu0 %v2025
    %2071 = vmatprep.subr.bf16.mxu0 0
    %2072 = vmatpush1.bf16.msra.mxu0 %v2026
    %2073 = vmatprep.subr.bf16.mxu0 0
    %2074 = vmatpush1.bf16.msra.mxu0 %v2027
    %2075 = vmatprep.subr.bf16.mxu0 0
    %2076 = vmatpush1.bf16.msra.mxu0 %v2028
    %2077 = vmatprep.mubr.bf16.mxu0 %v1946
    %2078 = vmatmul.mubr.bf16.gmra.mrb[0].mxu0 %v1945
    %v2079 = vpop.f32.mrb[0].mxu0
    %v2080 = vadd.f32 0.0, %v2079
    %v2081 = vpop.f32.mrb[0].mxu0
    %v2082 = vpop.f32.mrb[0].mxu0
    %v2083 = vpop.f32.mrb[0].mxu0
    %2084 = vdwg.mxu0
    %v2085 = vadd.f32 %v1731, %v2080
    %s2086 = scalar_lea.vmem [#allocation3], 3
    %v2087 = vld [vmem:[%s2086] ss:$8 sm:$0x3]
    %s2088 = scalar_lea.vmem [#allocation3], 19
    %v2089 = vld [vmem:[%s2088] ss:$8 sm:$0x3]
    %s2090 = scalar_lea.vmem [#allocation3], 35
    %v2091 = vld [vmem:[%s2090] ss:$8 sm:$0x3]
    %s2092 = scalar_lea.vmem [#allocation3], 51
    %v2093 = vld [vmem:[%s2092] ss:$8 sm:$0x3]
    %s2094 = scalar_lea.vmem [#allocation3], 67
    %v2095 = vld [vmem:[%s2094] ss:$8 sm:$0x3]
    %s2096 = scalar_lea.vmem [#allocation3], 83
    %v2097 = vld [vmem:[%s2096] ss:$8 sm:$0x3]
    %s2098 = scalar_lea.vmem [#allocation3], 99
    %v2099 = vld [vmem:[%s2098] ss:$8 sm:$0x3]
    %s2100 = scalar_lea.vmem [#allocation3], 115
    %v2101 = vld [vmem:[%s2100] ss:$8 sm:$0x3]
    %v2110 = vlaneseq
    %v2111 = vshrl.u32 %v2110, 7
    %v2112 = vsub.s32 0, %v2111
    %v2113 = vrot.slane %v2087, %v2112
    %v2114 = vlaneseq
    %v2115 = vshrl.u32 %v2114, 7
    %v2116 = vsub.s32 1, %v2115
    %v2117 = vrot.slane %v2087, %v2116
    %v2118 = vlaneseq
    %v2119 = vshrl.u32 %v2118, 7
    %v2120 = vsub.s32 0, %v2119
    %v2121 = vrot.slane %v2089, %v2120
    %v2122 = vlaneseq
    %v2123 = vshrl.u32 %v2122, 7
    %v2124 = vsub.s32 1, %v2123
    %v2125 = vrot.slane %v2089, %v2124
    %v2126 = vlaneseq
    %v2127 = vshrl.u32 %v2126, 7
    %v2128 = vsub.s32 0, %v2127
    %v2129 = vrot.slane %v2091, %v2128
    %v2130 = vlaneseq
    %v2131 = vshrl.u32 %v2130, 7
    %v2132 = vsub.s32 1, %v2131
    %v2133 = vrot.slane %v2091, %v2132
    %v2134 = vlaneseq
    %v2135 = vshrl.u32 %v2134, 7
    %v2136 = vsub.s32 0, %v2135
    %v2137 = vrot.slane %v2093, %v2136
    %v2138 = vlaneseq
    %v2139 = vshrl.u32 %v2138, 7
    %v2140 = vsub.s32 1, %v2139
    %v2141 = vrot.slane %v2093, %v2140
    %v2142 = vlaneseq
    %v2143 = vshrl.u32 %v2142, 7
    %v2144 = vsub.s32 0, %v2143
    %v2145 = vrot.slane %v2095, %v2144
    %v2146 = vlaneseq
    %v2147 = vshrl.u32 %v2146, 7
    %v2148 = vsub.s32 1, %v2147
    %v2149 = vrot.slane %v2095, %v2148
    %v2150 = vlaneseq
    %v2151 = vshrl.u32 %v2150, 7
    %v2152 = vsub.s32 0, %v2151
    %v2153 = vrot.slane %v2097, %v2152
    %v2154 = vlaneseq
    %v2155 = vshrl.u32 %v2154, 7
    %v2156 = vsub.s32 1, %v2155
    %v2157 = vrot.slane %v2097, %v2156
    %v2158 = vlaneseq
    %v2159 = vshrl.u32 %v2158, 7
    %v2160 = vsub.s32 0, %v2159
    %v2161 = vrot.slane %v2099, %v2160
    %v2162 = vlaneseq
    %v2163 = vshrl.u32 %v2162, 7
    %v2164 = vsub.s32 1, %v2163
    %v2165 = vrot.slane %v2099, %v2164
    %v2166 = vlaneseq
    %v2167 = vshrl.u32 %v2166, 7
    %v2168 = vsub.s32 0, %v2167
    %v2169 = vrot.slane %v2101, %v2168
    %v2170 = vlaneseq
    %v2171 = vshrl.u32 %v2170, 7
    %v2172 = vsub.s32 1, %v2171
    %v2173 = vrot.slane %v2101, %v2172
    %v2190 = vpack.c.bf16 %v2113, %v2113
    %v2191 = vpack.c.bf16 %v2117, %v2117
    %v2192 = vpack.c.bf16 %v2121, %v2121
    %v2193 = vpack.c.bf16 %v2125, %v2125
    %v2194 = vpack.c.bf16 %v2129, %v2129
    %v2195 = vpack.c.bf16 %v2133, %v2133
    %v2196 = vpack.c.bf16 %v2137, %v2137
    %v2197 = vpack.c.bf16 %v2141, %v2141
    %v2198 = vpack.c.bf16 %v2145, %v2145
    %v2199 = vpack.c.bf16 %v2149, %v2149
    %v2200 = vpack.c.bf16 %v2153, %v2153
    %v2201 = vpack.c.bf16 %v2157, %v2157
    %v2202 = vpack.c.bf16 %v2161, %v2161
    %v2203 = vpack.c.bf16 %v2165, %v2165
    %v2204 = vpack.c.bf16 %v2169, %v2169
    %v2205 = vpack.c.bf16 %v2173, %v2173
    %s2206 = scalar_lea.vmem %s6, 384
    %v2207 = vld [vmem:[%s2206] sm:$0xf]
    %v2208 = vld [vmem:[%s2206 + $0x4] sm:$0xf]
    %v2209 = vld [vmem:[%s2206 + $0x8] sm:$0xf]
    %v2210 = vld [vmem:[%s2206 + $0xc] sm:$0xf]
    %v2211 = vld [vmem:[%s2206 + $0x10] sm:$0xf]
    %v2212 = vld [vmem:[%s2206 + $0x14] sm:$0xf]
    %v2213 = vld [vmem:[%s2206 + $0x18] sm:$0xf]
    %v2214 = vld [vmem:[%s2206 + $0x1c] sm:$0xf]
    %v2215 = vld [vmem:[%s2206 + $0x20] sm:$0xf]
    %v2216 = vld [vmem:[%s2206 + $0x24] sm:$0xf]
    %v2217 = vld [vmem:[%s2206 + $0x28] sm:$0xf]
    %v2218 = vld [vmem:[%s2206 + $0x2c] sm:$0xf]
    %v2219 = vld [vmem:[%s2206 + $0x30] sm:$0xf]
    %v2220 = vld [vmem:[%s2206 + $0x34] sm:$0xf]
    %v2221 = vld [vmem:[%s2206 + $0x38] sm:$0xf]
    %v2222 = vld [vmem:[%s2206 + $0x3c] sm:$0xf]
    %v2223 = vld [vmem:[%s2206 + $0x40] sm:$0xf]
    %v2224 = vld [vmem:[%s2206 + $0x44] sm:$0xf]
    %v2225 = vld [vmem:[%s2206 + $0x48] sm:$0xf]
    %v2226 = vld [vmem:[%s2206 + $0x4c] sm:$0xf]
    %v2227 = vld [vmem:[%s2206 + $0x50] sm:$0xf]
    %v2228 = vld [vmem:[%s2206 + $0x54] sm:$0xf]
    %v2229 = vld [vmem:[%s2206 + $0x58] sm:$0xf]
    %v2230 = vld [vmem:[%s2206 + $0x5c] sm:$0xf]
    %v2231 = vld [vmem:[%s2206 + $0x60] sm:$0xf]
    %v2232 = vld [vmem:[%s2206 + $0x64] sm:$0xf]
    %v2233 = vld [vmem:[%s2206 + $0x68] sm:$0xf]
    %v2234 = vld [vmem:[%s2206 + $0x6c] sm:$0xf]
    %v2235 = vld [vmem:[%s2206 + $0x70] sm:$0xf]
    %v2236 = vld [vmem:[%s2206 + $0x74] sm:$0xf]
    %v2237 = vld [vmem:[%s2206 + $0x78] sm:$0xf]
    %v2238 = vld [vmem:[%s2206 + $0x7c] sm:$0xf]
    %v2255 = vunpack.c.l.b16 %v2190
    %v2256 = vunpack.c.l.b16 %v2191
    %v2257 = vunpack.c.l.b16 %v2192
    %v2258 = vunpack.c.l.b16 %v2193
    %v2259 = vunpack.c.l.b16 %v2194
    %v2260 = vunpack.c.l.b16 %v2195
    %v2261 = vunpack.c.l.b16 %v2196
    %v2262 = vunpack.c.l.b16 %v2197
    %v2263 = vunpack.c.l.b16 %v2198
    %v2264 = vunpack.c.l.b16 %v2199
    %v2265 = vunpack.c.l.b16 %v2200
    %v2266 = vunpack.c.l.b16 %v2201
    %v2267 = vunpack.c.l.b16 %v2202
    %v2268 = vunpack.c.l.b16 %v2203
    %v2269 = vunpack.c.l.b16 %v2204
    %v2270 = vunpack.c.l.b16 %v2205
    %v2271 = vrot.slane %v2257, 7
    %v2272 = vsel %vm1203, %v2271, %v2255
    %v2273 = vrot.slane %v2259, 6
    %v2274 = vsel %vm1206, %v2273, %v2272
    %v2275 = vrot.slane %v2261, 5
    %v2276 = vsel %vm1209, %v2275, %v2274
    %v2277 = vrot.slane %v2263, 4
    %v2278 = vsel %vm1212, %v2277, %v2276
    %v2279 = vrot.slane %v2265, 3
    %v2280 = vsel %vm1215, %v2279, %v2278
    %v2281 = vrot.slane %v2267, 2
    %v2282 = vsel %vm1218, %v2281, %v2280
    %v2283 = vrot.slane %v2269, 1
    %v2284 = vsel %vm1221, %v2283, %v2282
    %v2285 = vrot.slane %v2258, 7
    %v2286 = vsel %vm1203, %v2285, %v2256
    %v2287 = vrot.slane %v2260, 6
    %v2288 = vsel %vm1206, %v2287, %v2286
    %v2289 = vrot.slane %v2262, 5
    %v2290 = vsel %vm1209, %v2289, %v2288
    %v2291 = vrot.slane %v2264, 4
    %v2292 = vsel %vm1212, %v2291, %v2290
    %v2293 = vrot.slane %v2266, 3
    %v2294 = vsel %vm1215, %v2293, %v2292
    %v2295 = vrot.slane %v2268, 2
    %v2296 = vsel %vm1218, %v2295, %v2294
    %v2297 = vrot.slane %v2270, 1
    %v2298 = vsel %vm1221, %v2297, %v2296
    %v2299 = vpack.c.b16 %v2284, %v2284
    %v2300 = vpack.c.b16 %v2298, %v2298
    %v2335 = vunpack.c.l.b16 %v2207
    %v2336 = vunpack.c.l.b16 %v2208
    %v2337 = vunpack.c.l.b16 %v2209
    %v2338 = vunpack.c.l.b16 %v2210
    %v2339 = vunpack.c.l.b16 %v2211
    %v2340 = vunpack.c.l.b16 %v2212
    %v2341 = vunpack.c.l.b16 %v2213
    %v2342 = vunpack.c.l.b16 %v2214
    %v2343 = vunpack.c.l.b16 %v2215
    %v2344 = vunpack.c.l.b16 %v2216
    %v2345 = vunpack.c.l.b16 %v2217
    %v2346 = vunpack.c.l.b16 %v2218
    %v2347 = vunpack.c.l.b16 %v2219
    %v2348 = vunpack.c.l.b16 %v2220
    %v2349 = vunpack.c.l.b16 %v2221
    %v2350 = vunpack.c.l.b16 %v2222
    %v2351 = vunpack.c.l.b16 %v2223
    %v2352 = vunpack.c.l.b16 %v2224
    %v2353 = vunpack.c.l.b16 %v2225
    %v2354 = vunpack.c.l.b16 %v2226
    %v2355 = vunpack.c.l.b16 %v2227
    %v2356 = vunpack.c.l.b16 %v2228
    %v2357 = vunpack.c.l.b16 %v2229
    %v2358 = vunpack.c.l.b16 %v2230
    %v2359 = vunpack.c.l.b16 %v2231
    %v2360 = vunpack.c.l.b16 %v2232
    %v2361 = vunpack.c.l.b16 %v2233
    %v2362 = vunpack.c.l.b16 %v2234
    %v2363 = vunpack.c.l.b16 %v2235
    %v2364 = vunpack.c.l.b16 %v2236
    %v2365 = vunpack.c.l.b16 %v2237
    %v2366 = vunpack.c.l.b16 %v2238
    %v2367 = vpack.c.b16 %v2336, %v2335
    %v2368 = vpack.c.b16 %v2338, %v2337
    %v2369 = vpack.c.b16 %v2340, %v2339
    %v2370 = vpack.c.b16 %v2342, %v2341
    %v2371 = vpack.c.b16 %v2344, %v2343
    %v2372 = vpack.c.b16 %v2346, %v2345
    %v2373 = vpack.c.b16 %v2348, %v2347
    %v2374 = vpack.c.b16 %v2350, %v2349
    %v2375 = vpack.c.b16 %v2352, %v2351
    %v2376 = vpack.c.b16 %v2354, %v2353
    %v2377 = vpack.c.b16 %v2356, %v2355
    %v2378 = vpack.c.b16 %v2358, %v2357
    %v2379 = vpack.c.b16 %v2360, %v2359
    %v2380 = vpack.c.b16 %v2362, %v2361
    %v2381 = vpack.c.b16 %v2364, %v2363
    %v2382 = vpack.c.b16 %v2366, %v2365
    %2399 = vmatprep.subr.bf16.mxu0 0
    %2400 = vmatpush1.bf16.msra.mxu0 %v2367
    %2401 = vmatprep.subr.bf16.mxu0 0
    %2402 = vmatpush1.bf16.msra.mxu0 %v2368
    %2403 = vmatprep.subr.bf16.mxu0 0
    %2404 = vmatpush1.bf16.msra.mxu0 %v2369
    %2405 = vmatprep.subr.bf16.mxu0 0
    %2406 = vmatpush1.bf16.msra.mxu0 %v2370
    %2407 = vmatprep.subr.bf16.mxu0 0
    %2408 = vmatpush1.bf16.msra.mxu0 %v2371
    %2409 = vmatprep.subr.bf16.mxu0 0
    %2410 = vmatpush1.bf16.msra.mxu0 %v2372
    %2411 = vmatprep.subr.bf16.mxu0 0
    %2412 = vmatpush1.bf16.msra.mxu0 %v2373
    %2413 = vmatprep.subr.bf16.mxu0 0
    %2414 = vmatpush1.bf16.msra.mxu0 %v2374
    %2415 = vmatprep.subr.bf16.mxu0 0
    %2416 = vmatpush1.bf16.msra.mxu0 %v2375
    %2417 = vmatprep.subr.bf16.mxu0 0
    %2418 = vmatpush1.bf16.msra.mxu0 %v2376
    %2419 = vmatprep.subr.bf16.mxu0 0
    %2420 = vmatpush1.bf16.msra.mxu0 %v2377
    %2421 = vmatprep.subr.bf16.mxu0 0
    %2422 = vmatpush1.bf16.msra.mxu0 %v2378
    %2423 = vmatprep.subr.bf16.mxu0 0
    %2424 = vmatpush1.bf16.msra.mxu0 %v2379
    %2425 = vmatprep.subr.bf16.mxu0 0
    %2426 = vmatpush1.bf16.msra.mxu0 %v2380
    %2427 = vmatprep.subr.bf16.mxu0 0
    %2428 = vmatpush1.bf16.msra.mxu0 %v2381
    %2429 = vmatprep.subr.bf16.mxu0 0
    %2430 = vmatpush1.bf16.msra.mxu0 %v2382
    %2431 = vmatprep.mubr.bf16.mxu0 %v2300
    %2432 = vmatmul.mubr.bf16.gmra.mrb[0].mxu0 %v2299
    %v2433 = vpop.f32.mrb[0].mxu0
    %v2434 = vadd.f32 0.0, %v2433
    %v2435 = vpop.f32.mrb[0].mxu0
    %v2436 = vpop.f32.mrb[0].mxu0
    %v2437 = vpop.f32.mrb[0].mxu0
    %2438 = vdwg.mxu0
    %v2439 = vadd.f32 %v2085, %v2434
    %s2440 = scalar_lea.vmem [#allocation3], 4
    %v2441 = vld [vmem:[%s2440] ss:$8 sm:$0x3]
    %s2442 = scalar_lea.vmem [#allocation3], 20
    %v2443 = vld [vmem:[%s2442] ss:$8 sm:$0x3]
    %s2444 = scalar_lea.vmem [#allocation3], 36
    %v2445 = vld [vmem:[%s2444] ss:$8 sm:$0x3]
    %s2446 = scalar_lea.vmem [#allocation3], 52
    %v2447 = vld [vmem:[%s2446] ss:$8 sm:$0x3]
    %s2448 = scalar_lea.vmem [#allocation3], 68
    %v2449 = vld [vmem:[%s2448] ss:$8 sm:$0x3]
    %s2450 = scalar_lea.vmem [#allocation3], 84
    %v2451 = vld [vmem:[%s2450] ss:$8 sm:$0x3]
    %s2452 = scalar_lea.vmem [#allocation3], 100
    %v2453 = vld [vmem:[%s2452] ss:$8 sm:$0x3]
    %s2454 = scalar_lea.vmem [#allocation3], 116
    %v2455 = vld [vmem:[%s2454] ss:$8 sm:$0x3]
    %v2464 = vlaneseq
    %v2465 = vshrl.u32 %v2464, 7
    %v2466 = vsub.s32 0, %v2465
    %v2467 = vrot.slane %v2441, %v2466
    %v2468 = vlaneseq
    %v2469 = vshrl.u32 %v2468, 7
    %v2470 = vsub.s32 1, %v2469
    %v2471 = vrot.slane %v2441, %v2470
    %v2472 = vlaneseq
    %v2473 = vshrl.u32 %v2472, 7
    %v2474 = vsub.s32 0, %v2473
    %v2475 = vrot.slane %v2443, %v2474
    %v2476 = vlaneseq
    %v2477 = vshrl.u32 %v2476, 7
    %v2478 = vsub.s32 1, %v2477
    %v2479 = vrot.slane %v2443, %v2478
    %v2480 = vlaneseq
    %v2481 = vshrl.u32 %v2480, 7
    %v2482 = vsub.s32 0, %v2481
    %v2483 = vrot.slane %v2445, %v2482
    %v2484 = vlaneseq
    %v2485 = vshrl.u32 %v2484, 7
    %v2486 = vsub.s32 1, %v2485
    %v2487 = vrot.slane %v2445, %v2486
    %v2488 = vlaneseq
    %v2489 = vshrl.u32 %v2488, 7
    %v2490 = vsub.s32 0, %v2489
    %v2491 = vrot.slane %v2447, %v2490
    %v2492 = vlaneseq
    %v2493 = vshrl.u32 %v2492, 7
    %v2494 = vsub.s32 1, %v2493
    %v2495 = vrot.slane %v2447, %v2494
    %v2496 = vlaneseq
    %v2497 = vshrl.u32 %v2496, 7
    %v2498 = vsub.s32 0, %v2497
    %v2499 = vrot.slane %v2449, %v2498
    %v2500 = vlaneseq
    %v2501 = vshrl.u32 %v2500, 7
    %v2502 = vsub.s32 1, %v2501
    %v2503 = vrot.slane %v2449, %v2502
    %v2504 = vlaneseq
    %v2505 = vshrl.u32 %v2504, 7
    %v2506 = vsub.s32 0, %v2505
    %v2507 = vrot.slane %v2451, %v2506
    %v2508 = vlaneseq
    %v2509 = vshrl.u32 %v2508, 7
    %v2510 = vsub.s32 1, %v2509
    %v2511 = vrot.slane %v2451, %v2510
    %v2512 = vlaneseq
    %v2513 = vshrl.u32 %v2512, 7
    %v2514 = vsub.s32 0, %v2513
    %v2515 = vrot.slane %v2453, %v2514
    %v2516 = vlaneseq
    %v2517 = vshrl.u32 %v2516, 7
    %v2518 = vsub.s32 1, %v2517
    %v2519 = vrot.slane %v2453, %v2518
    %v2520 = vlaneseq
    %v2521 = vshrl.u32 %v2520, 7
    %v2522 = vsub.s32 0, %v2521
    %v2523 = vrot.slane %v2455, %v2522
    %v2524 = vlaneseq
    %v2525 = vshrl.u32 %v2524, 7
    %v2526 = vsub.s32 1, %v2525
    %v2527 = vrot.slane %v2455, %v2526
    %v2544 = vpack.c.bf16 %v2467, %v2467
    %v2545 = vpack.c.bf16 %v2471, %v2471
    %v2546 = vpack.c.bf16 %v2475, %v2475
    %v2547 = vpack.c.bf16 %v2479, %v2479
    %v2548 = vpack.c.bf16 %v2483, %v2483
    %v2549 = vpack.c.bf16 %v2487, %v2487
    %v2550 = vpack.c.bf16 %v2491, %v2491
    %v2551 = vpack.c.bf16 %v2495, %v2495
    %v2552 = vpack.c.bf16 %v2499, %v2499
    %v2553 = vpack.c.bf16 %v2503, %v2503
    %v2554 = vpack.c.bf16 %v2507, %v2507
    %v2555 = vpack.c.bf16 %v2511, %v2511
    %v2556 = vpack.c.bf16 %v2515, %v2515
    %v2557 = vpack.c.bf16 %v2519, %v2519
    %v2558 = vpack.c.bf16 %v2523, %v2523
    %v2559 = vpack.c.bf16 %v2527, %v2527
    %s2560 = scalar_lea.vmem %s6, 512
    %v2561 = vld [vmem:[%s2560] sm:$0xf]
    %v2562 = vld [vmem:[%s2560 + $0x4] sm:$0xf]
    %v2563 = vld [vmem:[%s2560 + $0x8] sm:$0xf]
    %v2564 = vld [vmem:[%s2560 + $0xc] sm:$0xf]
    %v2565 = vld [vmem:[%s2560 + $0x10] sm:$0xf]
    %v2566 = vld [vmem:[%s2560 + $0x14] sm:$0xf]
    %v2567 = vld [vmem:[%s2560 + $0x18] sm:$0xf]
    %v2568 = vld [vmem:[%s2560 + $0x1c] sm:$0xf]
    %v2569 = vld [vmem:[%s2560 + $0x20] sm:$0xf]
    %v2570 = vld [vmem:[%s2560 + $0x24] sm:$0xf]
    %v2571 = vld [vmem:[%s2560 + $0x28] sm:$0xf]
    %v2572 = vld [vmem:[%s2560 + $0x2c] sm:$0xf]
    %v2573 = vld [vmem:[%s2560 + $0x30] sm:$0xf]
    %v2574 = vld [vmem:[%s2560 + $0x34] sm:$0xf]
    %v2575 = vld [vmem:[%s2560 + $0x38] sm:$0xf]
    %v2576 = vld [vmem:[%s2560 + $0x3c] sm:$0xf]
    %v2577 = vld [vmem:[%s2560 + $0x40] sm:$0xf]
    %v2578 = vld [vmem:[%s2560 + $0x44] sm:$0xf]
    %v2579 = vld [vmem:[%s2560 + $0x48] sm:$0xf]
    %v2580 = vld [vmem:[%s2560 + $0x4c] sm:$0xf]
    %v2581 = vld [vmem:[%s2560 + $0x50] sm:$0xf]
    %v2582 = vld [vmem:[%s2560 + $0x54] sm:$0xf]
    %v2583 = vld [vmem:[%s2560 + $0x58] sm:$0xf]
    %v2584 = vld [vmem:[%s2560 + $0x5c] sm:$0xf]
    %v2585 = vld [vmem:[%s2560 + $0x60] sm:$0xf]
    %v2586 = vld [vmem:[%s2560 + $0x64] sm:$0xf]
    %v2587 = vld [vmem:[%s2560 + $0x68] sm:$0xf]
    %v2588 = vld [vmem:[%s2560 + $0x6c] sm:$0xf]
    %v2589 = vld [vmem:[%s2560 + $0x70] sm:$0xf]
    %v2590 = vld [vmem:[%s2560 + $0x74] sm:$0xf]
    %v2591 = vld [vmem:[%s2560 + $0x78] sm:$0xf]
    %v2592 = vld [vmem:[%s2560 + $0x7c] sm:$0xf]
    %v2609 = vunpack.c.l.b16 %v2544
    %v2610 = vunpack.c.l.b16 %v2545
    %v2611 = vunpack.c.l.b16 %v2546
    %v2612 = vunpack.c.l.b16 %v2547
    %v2613 = vunpack.c.l.b16 %v2548
    %v2614 = vunpack.c.l.b16 %v2549
    %v2615 = vunpack.c.l.b16 %v2550
    %v2616 = vunpack.c.l.b16 %v2551
    %v2617 = vunpack.c.l.b16 %v2552
    %v2618 = vunpack.c.l.b16 %v2553
    %v2619 = vunpack.c.l.b16 %v2554
    %v2620 = vunpack.c.l.b16 %v2555
    %v2621 = vunpack.c.l.b16 %v2556
    %v2622 = vunpack.c.l.b16 %v2557
    %v2623 = vunpack.c.l.b16 %v2558
    %v2624 = vunpack.c.l.b16 %v2559
    %v2625 = vrot.slane %v2611, 7
    %v2626 = vsel %vm1203, %v2625, %v2609
    %v2627 = vrot.slane %v2613, 6
    %v2628 = vsel %vm1206, %v2627, %v2626
    %v2629 = vrot.slane %v2615, 5
    %v2630 = vsel %vm1209, %v2629, %v2628
    %v2631 = vrot.slane %v2617, 4
    %v2632 = vsel %vm1212, %v2631, %v2630
    %v2633 = vrot.slane %v2619, 3
    %v2634 = vsel %vm1215, %v2633, %v2632
    %v2635 = vrot.slane %v2621, 2
    %v2636 = vsel %vm1218, %v2635, %v2634
    %v2637 = vrot.slane %v2623, 1
    %v2638 = vsel %vm1221, %v2637, %v2636
    %v2639 = vrot.slane %v2612, 7
    %v2640 = vsel %vm1203, %v2639, %v2610
    %v2641 = vrot.slane %v2614, 6
    %v2642 = vsel %vm1206, %v2641, %v2640
    %v2643 = vrot.slane %v2616, 5
    %v2644 = vsel %vm1209, %v2643, %v2642
    %v2645 = vrot.slane %v2618, 4
    %v2646 = vsel %vm1212, %v2645, %v2644
    %v2647 = vrot.slane %v2620, 3
    %v2648 = vsel %vm1215, %v2647, %v2646
    %v2649 = vrot.slane %v2622, 2
    %v2650 = vsel %vm1218, %v2649, %v2648
    %v2651 = vrot.slane %v2624, 1
    %v2652 = vsel %vm1221, %v2651, %v2650
    %v2653 = vpack.c.b16 %v2638, %v2638
    %v2654 = vpack.c.b16 %v2652, %v2652
    %v2689 = vunpack.c.l.b16 %v2561
    %v2690 = vunpack.c.l.b16 %v2562
    %v2691 = vunpack.c.l.b16 %v2563
    %v2692 = vunpack.c.l.b16 %v2564
    %v2693 = vunpack.c.l.b16 %v2565
    %v2694 = vunpack.c.l.b16 %v2566
    %v2695 = vunpack.c.l.b16 %v2567
    %v2696 = vunpack.c.l.b16 %v2568
    %v2697 = vunpack.c.l.b16 %v2569
    %v2698 = vunpack.c.l.b16 %v2570
    %v2699 = vunpack.c.l.b16 %v2571
    %v2700 = vunpack.c.l.b16 %v2572
    %v2701 = vunpack.c.l.b16 %v2573
    %v2702 = vunpack.c.l.b16 %v2574
    %v2703 = vunpack.c.l.b16 %v2575
    %v2704 = vunpack.c.l.b16 %v2576
    %v2705 = vunpack.c.l.b16 %v2577
    %v2706 = vunpack.c.l.b16 %v2578
    %v2707 = vunpack.c.l.b16 %v2579
    %v2708 = vunpack.c.l.b16 %v2580
    %v2709 = vunpack.c.l.b16 %v2581
    %v2710 = vunpack.c.l.b16 %v2582
    %v2711 = vunpack.c.l.b16 %v2583
    %v2712 = vunpack.c.l.b16 %v2584
    %v2713 = vunpack.c.l.b16 %v2585
    %v2714 = vunpack.c.l.b16 %v2586
    %v2715 = vunpack.c.l.b16 %v2587
    %v2716 = vunpack.c.l.b16 %v2588
    %v2717 = vunpack.c.l.b16 %v2589
    %v2718 = vunpack.c.l.b16 %v2590
    %v2719 = vunpack.c.l.b16 %v2591
    %v2720 = vunpack.c.l.b16 %v2592
    %v2721 = vpack.c.b16 %v2690, %v2689
    %v2722 = vpack.c.b16 %v2692, %v2691
    %v2723 = vpack.c.b16 %v2694, %v2693
    %v2724 = vpack.c.b16 %v2696, %v2695
    %v2725 = vpack.c.b16 %v2698, %v2697
    %v2726 = vpack.c.b16 %v2700, %v2699
    %v2727 = vpack.c.b16 %v2702, %v2701
    %v2728 = vpack.c.b16 %v2704, %v2703
    %v2729 = vpack.c.b16 %v2706, %v2705
    %v2730 = vpack.c.b16 %v2708, %v2707
    %v2731 = vpack.c.b16 %v2710, %v2709
    %v2732 = vpack.c.b16 %v2712, %v2711
    %v2733 = vpack.c.b16 %v2714, %v2713
    %v2734 = vpack.c.b16 %v2716, %v2715
    %v2735 = vpack.c.b16 %v2718, %v2717
    %v2736 = vpack.c.b16 %v2720, %v2719
    %2753 = vmatprep.subr.bf16.mxu0 0
    %2754 = vmatpush1.bf16.msra.mxu0 %v2721
    %2755 = vmatprep.subr.bf16.mxu0 0
    %2756 = vmatpush1.bf16.msra.mxu0 %v2722
    %2757 = vmatprep.subr.bf16.mxu0 0
    %2758 = vmatpush1.bf16.msra.mxu0 %v2723
    %2759 = vmatprep.subr.bf16.mxu0 0
    %2760 = vmatpush1.bf16.msra.mxu0 %v2724
    %2761 = vmatprep.subr.bf16.mxu0 0
    %2762 = vmatpush1.bf16.msra.mxu0 %v2725
    %2763 = vmatprep.subr.bf16.mxu0 0
    %2764 = vmatpush1.bf16.msra.mxu0 %v2726
    %2765 = vmatprep.subr.bf16.mxu0 0
    %2766 = vmatpush1.bf16.msra.mxu0 %v2727
    %2767 = vmatprep.subr.bf16.mxu0 0
    %2768 = vmatpush1.bf16.msra.mxu0 %v2728
    %2769 = vmatprep.subr.bf16.mxu0 0
    %2770 = vmatpush1.bf16.msra.mxu0 %v2729
    %2771 = vmatprep.subr.bf16.mxu0 0
    %2772 = vmatpush1.bf16.msra.mxu0 %v2730
    %2773 = vmatprep.subr.bf16.mxu0 0
    %2774 = vmatpush1.bf16.msra.mxu0 %v2731
    %2775 = vmatprep.subr.bf16.mxu0 0
    %2776 = vmatpush1.bf16.msra.mxu0 %v2732
    %2777 = vmatprep.subr.bf16.mxu0 0
    %2778 = vmatpush1.bf16.msra.mxu0 %v2733
    %2779 = vmatprep.subr.bf16.mxu0 0
    %2780 = vmatpush1.bf16.msra.mxu0 %v2734
    %2781 = vmatprep.subr.bf16.mxu0 0
    %2782 = vmatpush1.bf16.msra.mxu0 %v2735
    %2783 = vmatprep.subr.bf16.mxu0 0
    %2784 = vmatpush1.bf16.msra.mxu0 %v2736
    %2785 = vmatprep.mubr.bf16.mxu0 %v2654
    %2786 = vmatmul.mubr.bf16.gmra.mrb[0].mxu0 %v2653
    %v2787 = vpop.f32.mrb[0].mxu0
    %v2788 = vadd.f32 0.0, %v2787
    %v2789 = vpop.f32.mrb[0].mxu0
    %v2790 = vpop.f32.mrb[0].mxu0
    %v2791 = vpop.f32.mrb[0].mxu0
    %2792 = vdwg.mxu0
    %v2793 = vadd.f32 %v2439, %v2788
    %s2794 = scalar_lea.vmem [#allocation3], 5
    %v2795 = vld [vmem:[%s2794] ss:$8 sm:$0x3]
    %s2796 = scalar_lea.vmem [#allocation3], 21
    %v2797 = vld [vmem:[%s2796] ss:$8 sm:$0x3]
    %s2798 = scalar_lea.vmem [#allocation3], 37
    %v2799 = vld [vmem:[%s2798] ss:$8 sm:$0x3]
    %s2800 = scalar_lea.vmem [#allocation3], 53
    %v2801 = vld [vmem:[%s2800] ss:$8 sm:$0x3]
    %s2802 = scalar_lea.vmem [#allocation3], 69
    %v2803 = vld [vmem:[%s2802] ss:$8 sm:$0x3]
    %s2804 = scalar_lea.vmem [#allocation3], 85
    %v2805 = vld [vmem:[%s2804] ss:$8 sm:$0x3]
    %s2806 = scalar_lea.vmem [#allocation3], 101
    %v2807 = vld [vmem:[%s2806] ss:$8 sm:$0x3]
    %s2808 = scalar_lea.vmem [#allocation3], 117
    %v2809 = vld [vmem:[%s2808] ss:$8 sm:$0x3]
    %v2818 = vlaneseq
    %v2819 = vshrl.u32 %v2818, 7
    %v2820 = vsub.s32 0, %v2819
    %v2821 = vrot.slane %v2795, %v2820
    %v2822 = vlaneseq
    %v2823 = vshrl.u32 %v2822, 7
    %v2824 = vsub.s32 1, %v2823
    %v2825 = vrot.slane %v2795, %v2824
    %v2826 = vlaneseq
    %v2827 = vshrl.u32 %v2826, 7
    %v2828 = vsub.s32 0, %v2827
    %v2829 = vrot.slane %v2797, %v2828
    %v2830 = vlaneseq
    %v2831 = vshrl.u32 %v2830, 7
    %v2832 = vsub.s32 1, %v2831
    %v2833 = vrot.slane %v2797, %v2832
    %v2834 = vlaneseq
    %v2835 = vshrl.u32 %v2834, 7
    %v2836 = vsub.s32 0, %v2835
    %v2837 = vrot.slane %v2799, %v2836
    %v2838 = vlaneseq
    %v2839 = vshrl.u32 %v2838, 7
    %v2840 = vsub.s32 1, %v2839
    %v2841 = vrot.slane %v2799, %v2840
    %v2842 = vlaneseq
    %v2843 = vshrl.u32 %v2842, 7
    %v2844 = vsub.s32 0, %v2843
    %v2845 = vrot.slane %v2801, %v2844
    %v2846 = vlaneseq
    %v2847 = vshrl.u32 %v2846, 7
    %v2848 = vsub.s32 1, %v2847
    %v2849 = vrot.slane %v2801, %v2848
    %v2850 = vlaneseq
    %v2851 = vshrl.u32 %v2850, 7
    %v2852 = vsub.s32 0, %v2851
    %v2853 = vrot.slane %v2803, %v2852
    %v2854 = vlaneseq
    %v2855 = vshrl.u32 %v2854, 7
    %v2856 = vsub.s32 1, %v2855
    %v2857 = vrot.slane %v2803, %v2856
    %v2858 = vlaneseq
    %v2859 = vshrl.u32 %v2858, 7
    %v2860 = vsub.s32 0, %v2859
    %v2861 = vrot.slane %v2805, %v2860
    %v2862 = vlaneseq
    %v2863 = vshrl.u32 %v2862, 7
    %v2864 = vsub.s32 1, %v2863
    %v2865 = vrot.slane %v2805, %v2864
    %v2866 = vlaneseq
    %v2867 = vshrl.u32 %v2866, 7
    %v2868 = vsub.s32 0, %v2867
    %v2869 = vrot.slane %v2807, %v2868
    %v2870 = vlaneseq
    %v2871 = vshrl.u32 %v2870, 7
    %v2872 = vsub.s32 1, %v2871
    %v2873 = vrot.slane %v2807, %v2872
    %v2874 = vlaneseq
    %v2875 = vshrl.u32 %v2874, 7
    %v2876 = vsub.s32 0, %v2875
    %v2877 = vrot.slane %v2809, %v2876
    %v2878 = vlaneseq
    %v2879 = vshrl.u32 %v2878, 7
    %v2880 = vsub.s32 1, %v2879
    %v2881 = vrot.slane %v2809, %v2880
    %v2898 = vpack.c.bf16 %v2821, %v2821
    %v2899 = vpack.c.bf16 %v2825, %v2825
    %v2900 = vpack.c.bf16 %v2829, %v2829
    %v2901 = vpack.c.bf16 %v2833, %v2833
    %v2902 = vpack.c.bf16 %v2837, %v2837
    %v2903 = vpack.c.bf16 %v2841, %v2841
    %v2904 = vpack.c.bf16 %v2845, %v2845
    %v2905 = vpack.c.bf16 %v2849, %v2849
    %v2906 = vpack.c.bf16 %v2853, %v2853
    %v2907 = vpack.c.bf16 %v2857, %v2857
    %v2908 = vpack.c.bf16 %v2861, %v2861
    %v2909 = vpack.c.bf16 %v2865, %v2865
    %v2910 = vpack.c.bf16 %v2869, %v2869
    %v2911 = vpack.c.bf16 %v2873, %v2873
    %v2912 = vpack.c.bf16 %v2877, %v2877
    %v2913 = vpack.c.bf16 %v2881, %v2881
    %s2914 = scalar_lea.vmem %s6, 640
    %v2915 = vld [vmem:[%s2914] sm:$0xf]
    %v2916 = vld [vmem:[%s2914 + $0x4] sm:$0xf]
    %v2917 = vld [vmem:[%s2914 + $0x8] sm:$0xf]
    %v2918 = vld [vmem:[%s2914 + $0xc] sm:$0xf]
    %v2919 = vld [vmem:[%s2914 + $0x10] sm:$0xf]
    %v2920 = vld [vmem:[%s2914 + $0x14] sm:$0xf]
    %v2921 = vld [vmem:[%s2914 + $0x18] sm:$0xf]
    %v2922 = vld [vmem:[%s2914 + $0x1c] sm:$0xf]
    %v2923 = vld [vmem:[%s2914 + $0x20] sm:$0xf]
    %v2924 = vld [vmem:[%s2914 + $0x24] sm:$0xf]
    %v2925 = vld [vmem:[%s2914 + $0x28] sm:$0xf]
    %v2926 = vld [vmem:[%s2914 + $0x2c] sm:$0xf]
    %v2927 = vld [vmem:[%s2914 + $0x30] sm:$0xf]
    %v2928 = vld [vmem:[%s2914 + $0x34] sm:$0xf]
    %v2929 = vld [vmem:[%s2914 + $0x38] sm:$0xf]
    %v2930 = vld [vmem:[%s2914 + $0x3c] sm:$0xf]
    %v2931 = vld [vmem:[%s2914 + $0x40] sm:$0xf]
    %v2932 = vld [vmem:[%s2914 + $0x44] sm:$0xf]
    %v2933 = vld [vmem:[%s2914 + $0x48] sm:$0xf]
    %v2934 = vld [vmem:[%s2914 + $0x4c] sm:$0xf]
    %v2935 = vld [vmem:[%s2914 + $0x50] sm:$0xf]
    %v2936 = vld [vmem:[%s2914 + $0x54] sm:$0xf]
    %v2937 = vld [vmem:[%s2914 + $0x58] sm:$0xf]
    %v2938 = vld [vmem:[%s2914 + $0x5c] sm:$0xf]
    %v2939 = vld [vmem:[%s2914 + $0x60] sm:$0xf]
    %v2940 = vld [vmem:[%s2914 + $0x64] sm:$0xf]
    %v2941 = vld [vmem:[%s2914 + $0x68] sm:$0xf]
    %v2942 = vld [vmem:[%s2914 + $0x6c] sm:$0xf]
    %v2943 = vld [vmem:[%s2914 + $0x70] sm:$0xf]
    %v2944 = vld [vmem:[%s2914 + $0x74] sm:$0xf]
    %v2945 = vld [vmem:[%s2914 + $0x78] sm:$0xf]
    %v2946 = vld [vmem:[%s2914 + $0x7c] sm:$0xf]
    %v2963 = vunpack.c.l.b16 %v2898
    %v2964 = vunpack.c.l.b16 %v2899
    %v2965 = vunpack.c.l.b16 %v2900
    %v2966 = vunpack.c.l.b16 %v2901
    %v2967 = vunpack.c.l.b16 %v2902
    %v2968 = vunpack.c.l.b16 %v2903
    %v2969 = vunpack.c.l.b16 %v2904
    %v2970 = vunpack.c.l.b16 %v2905
    %v2971 = vunpack.c.l.b16 %v2906
    %v2972 = vunpack.c.l.b16 %v2907
    %v2973 = vunpack.c.l.b16 %v2908
    %v2974 = vunpack.c.l.b16 %v2909
    %v2975 = vunpack.c.l.b16 %v2910
    %v2976 = vunpack.c.l.b16 %v2911
    %v2977 = vunpack.c.l.b16 %v2912
    %v2978 = vunpack.c.l.b16 %v2913
    %v2979 = vrot.slane %v2965, 7
    %v2980 = vsel %vm1203, %v2979, %v2963
    %v2981 = vrot.slane %v2967, 6
    %v2982 = vsel %vm1206, %v2981, %v2980
    %v2983 = vrot.slane %v2969, 5
    %v2984 = vsel %vm1209, %v2983, %v2982
    %v2985 = vrot.slane %v2971, 4
    %v2986 = vsel %vm1212, %v2985, %v2984
    %v2987 = vrot.slane %v2973, 3
    %v2988 = vsel %vm1215, %v2987, %v2986
    %v2989 = vrot.slane %v2975, 2
    %v2990 = vsel %vm1218, %v2989, %v2988
    %v2991 = vrot.slane %v2977, 1
    %v2992 = vsel %vm1221, %v2991, %v2990
    %v2993 = vrot.slane %v2966, 7
    %v2994 = vsel %vm1203, %v2993, %v2964
    %v2995 = vrot.slane %v2968, 6
    %v2996 = vsel %vm1206, %v2995, %v2994
    %v2997 = vrot.slane %v2970, 5
    %v2998 = vsel %vm1209, %v2997, %v2996
    %v2999 = vrot.slane %v2972, 4
    %v3000 = vsel %vm1212, %v2999, %v2998
    %v3001 = vrot.slane %v2974, 3
    %v3002 = vsel %vm1215, %v3001, %v3000
    %v3003 = vrot.slane %v2976, 2
    %v3004 = vsel %vm1218, %v3003, %v3002
    %v3005 = vrot.slane %v2978, 1
    %v3006 = vsel %vm1221, %v3005, %v3004
    %v3007 = vpack.c.b16 %v2992, %v2992
    %v3008 = vpack.c.b16 %v3006, %v3006
    %v3043 = vunpack.c.l.b16 %v2915
    %v3044 = vunpack.c.l.b16 %v2916
    %v3045 = vunpack.c.l.b16 %v2917
    %v3046 = vunpack.c.l.b16 %v2918
    %v3047 = vunpack.c.l.b16 %v2919
    %v3048 = vunpack.c.l.b16 %v2920
    %v3049 = vunpack.c.l.b16 %v2921
    %v3050 = vunpack.c.l.b16 %v2922
    %v3051 = vunpack.c.l.b16 %v2923
    %v3052 = vunpack.c.l.b16 %v2924
    %v3053 = vunpack.c.l.b16 %v2925
    %v3054 = vunpack.c.l.b16 %v2926
    %v3055 = vunpack.c.l.b16 %v2927
    %v3056 = vunpack.c.l.b16 %v2928
    %v3057 = vunpack.c.l.b16 %v2929
    %v3058 = vunpack.c.l.b16 %v2930
    %v3059 = vunpack.c.l.b16 %v2931
    %v3060 = vunpack.c.l.b16 %v2932
    %v3061 = vunpack.c.l.b16 %v2933
    %v3062 = vunpack.c.l.b16 %v2934
    %v3063 = vunpack.c.l.b16 %v2935
    %v3064 = vunpack.c.l.b16 %v2936
    %v3065 = vunpack.c.l.b16 %v2937
    %v3066 = vunpack.c.l.b16 %v2938
    %v3067 = vunpack.c.l.b16 %v2939
    %v3068 = vunpack.c.l.b16 %v2940
    %v3069 = vunpack.c.l.b16 %v2941
    %v3070 = vunpack.c.l.b16 %v2942
    %v3071 = vunpack.c.l.b16 %v2943
    %v3072 = vunpack.c.l.b16 %v2944
    %v3073 = vunpack.c.l.b16 %v2945
    %v3074 = vunpack.c.l.b16 %v2946
    %v3075 = vpack.c.b16 %v3044, %v3043
    %v3076 = vpack.c.b16 %v3046, %v3045
    %v3077 = vpack.c.b16 %v3048, %v3047
    %v3078 = vpack.c.b16 %v3050, %v3049
    %v3079 = vpack.c.b16 %v3052, %v3051
    %v3080 = vpack.c.b16 %v3054, %v3053
    %v3081 = vpack.c.b16 %v3056, %v3055
    %v3082 = vpack.c.b16 %v3058, %v3057
    %v3083 = vpack.c.b16 %v3060, %v3059
    %v3084 = vpack.c.b16 %v3062, %v3061
    %v3085 = vpack.c.b16 %v3064, %v3063
    %v3086 = vpack.c.b16 %v3066, %v3065
    %v3087 = vpack.c.b16 %v3068, %v3067
    %v3088 = vpack.c.b16 %v3070, %v3069
    %v3089 = vpack.c.b16 %v3072, %v3071
    %v3090 = vpack.c.b16 %v3074, %v3073
    %3107 = vmatprep.subr.bf16.mxu0 0
    %3108 = vmatpush1.bf16.msra.mxu0 %v3075
    %3109 = vmatprep.subr.bf16.mxu0 0
    %3110 = vmatpush1.bf16.msra.mxu0 %v3076
    %3111 = vmatprep.subr.bf16.mxu0 0
    %3112 = vmatpush1.bf16.msra.mxu0 %v3077
    %3113 = vmatprep.subr.bf16.mxu0 0
    %3114 = vmatpush1.bf16.msra.mxu0 %v3078
    %3115 = vmatprep.subr.bf16.mxu0 0
    %3116 = vmatpush1.bf16.msra.mxu0 %v3079
    %3117 = vmatprep.subr.bf16.mxu0 0
    %3118 = vmatpush1.bf16.msra.mxu0 %v3080
    %3119 = vmatprep.subr.bf16.mxu0 0
    %3120 = vmatpush1.bf16.msra.mxu0 %v3081
    %3121 = vmatprep.subr.bf16.mxu0 0
    %3122 = vmatpush1.bf16.msra.mxu0 %v3082
    %3123 = vmatprep.subr.bf16.mxu0 0
    %3124 = vmatpush1.bf16.msra.mxu0 %v3083
    %3125 = vmatprep.subr.bf16.mxu0 0
    %3126 = vmatpush1.bf16.msra.mxu0 %v3084
    %3127 = vmatprep.subr.bf16.mxu0 0
    %3128 = vmatpush1.bf16.msra.mxu0 %v3085
    %3129 = vmatprep.subr.bf16.mxu0 0
    %3130 = vmatpush1.bf16.msra.mxu0 %v3086
    %3131 = vmatprep.subr.bf16.mxu0 0
    %3132 = vmatpush1.bf16.msra.mxu0 %v3087
    %3133 = vmatprep.subr.bf16.mxu0 0
    %3134 = vmatpush1.bf16.msra.mxu0 %v3088
    %3135 = vmatprep.subr.bf16.mxu0 0
    %3136 = vmatpush1.bf16.msra.mxu0 %v3089
    %3137 = vmatprep.subr.bf16.mxu0 0
    %3138 = vmatpush1.bf16.msra.mxu0 %v3090
    %3139 = vmatprep.mubr.bf16.mxu0 %v3008
    %3140 = vmatmul.mubr.bf16.gmra.mrb[0].mxu0 %v3007
    %v3141 = vpop.f32.mrb[0].mxu0
    %v3142 = vadd.f32 0.0, %v3141
    %v3143 = vpop.f32.mrb[0].mxu0
    %v3144 = vpop.f32.mrb[0].mxu0
    %v3145 = vpop.f32.mrb[0].mxu0
    %3146 = vdwg.mxu0
    %v3147 = vadd.f32 %v2793, %v3142
    %s3148 = scalar_lea.vmem [#allocation3], 6
    %v3149 = vld [vmem:[%s3148] ss:$8 sm:$0x3]
    %s3150 = scalar_lea.vmem [#allocation3], 22
    %v3151 = vld [vmem:[%s3150] ss:$8 sm:$0x3]
    %s3152 = scalar_lea.vmem [#allocation3], 38
    %v3153 = vld [vmem:[%s3152] ss:$8 sm:$0x3]
    %s3154 = scalar_lea.vmem [#allocation3], 54
    %v3155 = vld [vmem:[%s3154] ss:$8 sm:$0x3]
    %s3156 = scalar_lea.vmem [#allocation3], 70
    %v3157 = vld [vmem:[%s3156] ss:$8 sm:$0x3]
    %s3158 = scalar_lea.vmem [#allocation3], 86
    %v3159 = vld [vmem:[%s3158] ss:$8 sm:$0x3]
    %s3160 = scalar_lea.vmem [#allocation3], 102
    %v3161 = vld [vmem:[%s3160] ss:$8 sm:$0x3]
    %s3162 = scalar_lea.vmem [#allocation3], 118
    %v3163 = vld [vmem:[%s3162] ss:$8 sm:$0x3]
    %v3172 = vlaneseq
    %v3173 = vshrl.u32 %v3172, 7
    %v3174 = vsub.s32 0, %v3173
    %v3175 = vrot.slane %v3149, %v3174
    %v3176 = vlaneseq
    %v3177 = vshrl.u32 %v3176, 7
    %v3178 = vsub.s32 1, %v3177
    %v3179 = vrot.slane %v3149, %v3178
    %v3180 = vlaneseq
    %v3181 = vshrl.u32 %v3180, 7
    %v3182 = vsub.s32 0, %v3181
    %v3183 = vrot.slane %v3151, %v3182
    %v3184 = vlaneseq
    %v3185 = vshrl.u32 %v3184, 7
    %v3186 = vsub.s32 1, %v3185
    %v3187 = vrot.slane %v3151, %v3186
    %v3188 = vlaneseq
    %v3189 = vshrl.u32 %v3188, 7
    %v3190 = vsub.s32 0, %v3189
    %v3191 = vrot.slane %v3153, %v3190
    %v3192 = vlaneseq
    %v3193 = vshrl.u32 %v3192, 7
    %v3194 = vsub.s32 1, %v3193
    %v3195 = vrot.slane %v3153, %v3194
    %v3196 = vlaneseq
    %v3197 = vshrl.u32 %v3196, 7
    %v3198 = vsub.s32 0, %v3197
    %v3199 = vrot.slane %v3155, %v3198
    %v3200 = vlaneseq
    %v3201 = vshrl.u32 %v3200, 7
    %v3202 = vsub.s32 1, %v3201
    %v3203 = vrot.slane %v3155, %v3202
    %v3204 = vlaneseq
    %v3205 = vshrl.u32 %v3204, 7
    %v3206 = vsub.s32 0, %v3205
    %v3207 = vrot.slane %v3157, %v3206
    %v3208 = vlaneseq
    %v3209 = vshrl.u32 %v3208, 7
    %v3210 = vsub.s32 1, %v3209
    %v3211 = vrot.slane %v3157, %v3210
    %v3212 = vlaneseq
    %v3213 = vshrl.u32 %v3212, 7
    %v3214 = vsub.s32 0, %v3213
    %v3215 = vrot.slane %v3159, %v3214
    %v3216 = vlaneseq
    %v3217 = vshrl.u32 %v3216, 7
    %v3218 = vsub.s32 1, %v3217
    %v3219 = vrot.slane %v3159, %v3218
    %v3220 = vlaneseq
    %v3221 = vshrl.u32 %v3220, 7
    %v3222 = vsub.s32 0, %v3221
    %v3223 = vrot.slane %v3161, %v3222
    %v3224 = vlaneseq
    %v3225 = vshrl.u32 %v3224, 7
    %v3226 = vsub.s32 1, %v3225
    %v3227 = vrot.slane %v3161, %v3226
    %v3228 = vlaneseq
    %v3229 = vshrl.u32 %v3228, 7
    %v3230 = vsub.s32 0, %v3229
    %v3231 = vrot.slane %v3163, %v3230
    %v3232 = vlaneseq
    %v3233 = vshrl.u32 %v3232, 7
    %v3234 = vsub.s32 1, %v3233
    %v3235 = vrot.slane %v3163, %v3234
    %v3252 = vpack.c.bf16 %v3175, %v3175
    %v3253 = vpack.c.bf16 %v3179, %v3179
    %v3254 = vpack.c.bf16 %v3183, %v3183
    %v3255 = vpack.c.bf16 %v3187, %v3187
    %v3256 = vpack.c.bf16 %v3191, %v3191
    %v3257 = vpack.c.bf16 %v3195, %v3195
    %v3258 = vpack.c.bf16 %v3199, %v3199
    %v3259 = vpack.c.bf16 %v3203, %v3203
    %v3260 = vpack.c.bf16 %v3207, %v3207
    %v3261 = vpack.c.bf16 %v3211, %v3211
    %v3262 = vpack.c.bf16 %v3215, %v3215
    %v3263 = vpack.c.bf16 %v3219, %v3219
    %v3264 = vpack.c.bf16 %v3223, %v3223
    %v3265 = vpack.c.bf16 %v3227, %v3227
    %v3266 = vpack.c.bf16 %v3231, %v3231
    %v3267 = vpack.c.bf16 %v3235, %v3235
    %s3268 = scalar_lea.vmem %s6, 768
    %v3269 = vld [vmem:[%s3268] sm:$0xf]
    %v3270 = vld [vmem:[%s3268 + $0x4] sm:$0xf]
    %v3271 = vld [vmem:[%s3268 + $0x8] sm:$0xf]
    %v3272 = vld [vmem:[%s3268 + $0xc] sm:$0xf]
    %v3273 = vld [vmem:[%s3268 + $0x10] sm:$0xf]
    %v3274 = vld [vmem:[%s3268 + $0x14] sm:$0xf]
    %v3275 = vld [vmem:[%s3268 + $0x18] sm:$0xf]
    %v3276 = vld [vmem:[%s3268 + $0x1c] sm:$0xf]
    %v3277 = vld [vmem:[%s3268 + $0x20] sm:$0xf]
    %v3278 = vld [vmem:[%s3268 + $0x24] sm:$0xf]
    %v3279 = vld [vmem:[%s3268 + $0x28] sm:$0xf]
    %v3280 = vld [vmem:[%s3268 + $0x2c] sm:$0xf]
    %v3281 = vld [vmem:[%s3268 + $0x30] sm:$0xf]
    %v3282 = vld [vmem:[%s3268 + $0x34] sm:$0xf]
    %v3283 = vld [vmem:[%s3268 + $0x38] sm:$0xf]
    %v3284 = vld [vmem:[%s3268 + $0x3c] sm:$0xf]
    %v3285 = vld [vmem:[%s3268 + $0x40] sm:$0xf]
    %v3286 = vld [vmem:[%s3268 + $0x44] sm:$0xf]
    %v3287 = vld [vmem:[%s3268 + $0x48] sm:$0xf]
    %v3288 = vld [vmem:[%s3268 + $0x4c] sm:$0xf]
    %v3289 = vld [vmem:[%s3268 + $0x50] sm:$0xf]
    %v3290 = vld [vmem:[%s3268 + $0x54] sm:$0xf]
    %v3291 = vld [vmem:[%s3268 + $0x58] sm:$0xf]
    %v3292 = vld [vmem:[%s3268 + $0x5c] sm:$0xf]
    %v3293 = vld [vmem:[%s3268 + $0x60] sm:$0xf]
    %v3294 = vld [vmem:[%s3268 + $0x64] sm:$0xf]
    %v3295 = vld [vmem:[%s3268 + $0x68] sm:$0xf]
    %v3296 = vld [vmem:[%s3268 + $0x6c] sm:$0xf]
    %v3297 = vld [vmem:[%s3268 + $0x70] sm:$0xf]
    %v3298 = vld [vmem:[%s3268 + $0x74] sm:$0xf]
    %v3299 = vld [vmem:[%s3268 + $0x78] sm:$0xf]
    %v3300 = vld [vmem:[%s3268 + $0x7c] sm:$0xf]
    %v3317 = vunpack.c.l.b16 %v3252
    %v3318 = vunpack.c.l.b16 %v3253
    %v3319 = vunpack.c.l.b16 %v3254
    %v3320 = vunpack.c.l.b16 %v3255
    %v3321 = vunpack.c.l.b16 %v3256
    %v3322 = vunpack.c.l.b16 %v3257
    %v3323 = vunpack.c.l.b16 %v3258
    %v3324 = vunpack.c.l.b16 %v3259
    %v3325 = vunpack.c.l.b16 %v3260
    %v3326 = vunpack.c.l.b16 %v3261
    %v3327 = vunpack.c.l.b16 %v3262
    %v3328 = vunpack.c.l.b16 %v3263
    %v3329 = vunpack.c.l.b16 %v3264
    %v3330 = vunpack.c.l.b16 %v3265
    %v3331 = vunpack.c.l.b16 %v3266
    %v3332 = vunpack.c.l.b16 %v3267
    %v3333 = vrot.slane %v3319, 7
    %v3334 = vsel %vm1203, %v3333, %v3317
    %v3335 = vrot.slane %v3321, 6
    %v3336 = vsel %vm1206, %v3335, %v3334
    %v3337 = vrot.slane %v3323, 5
    %v3338 = vsel %vm1209, %v3337, %v3336
    %v3339 = vrot.slane %v3325, 4
    %v3340 = vsel %vm1212, %v3339, %v3338
    %v3341 = vrot.slane %v3327, 3
    %v3342 = vsel %vm1215, %v3341, %v3340
    %v3343 = vrot.slane %v3329, 2
    %v3344 = vsel %vm1218, %v3343, %v3342
    %v3345 = vrot.slane %v3331, 1
    %v3346 = vsel %vm1221, %v3345, %v3344
    %v3347 = vrot.slane %v3320, 7
    %v3348 = vsel %vm1203, %v3347, %v3318
    %v3349 = vrot.slane %v3322, 6
    %v3350 = vsel %vm1206, %v3349, %v3348
    %v3351 = vrot.slane %v3324, 5
    %v3352 = vsel %vm1209, %v3351, %v3350
    %v3353 = vrot.slane %v3326, 4
    %v3354 = vsel %vm1212, %v3353, %v3352
    %v3355 = vrot.slane %v3328, 3
    %v3356 = vsel %vm1215, %v3355, %v3354
    %v3357 = vrot.slane %v3330, 2
    %v3358 = vsel %vm1218, %v3357, %v3356
    %v3359 = vrot.slane %v3332, 1
    %v3360 = vsel %vm1221, %v3359, %v3358
    %v3361 = vpack.c.b16 %v3346, %v3346
    %v3362 = vpack.c.b16 %v3360, %v3360
    %v3397 = vunpack.c.l.b16 %v3269
    %v3398 = vunpack.c.l.b16 %v3270
    %v3399 = vunpack.c.l.b16 %v3271
    %v3400 = vunpack.c.l.b16 %v3272
    %v3401 = vunpack.c.l.b16 %v3273
    %v3402 = vunpack.c.l.b16 %v3274
    %v3403 = vunpack.c.l.b16 %v3275
    %v3404 = vunpack.c.l.b16 %v3276
    %v3405 = vunpack.c.l.b16 %v3277
    %v3406 = vunpack.c.l.b16 %v3278
    %v3407 = vunpack.c.l.b16 %v3279
    %v3408 = vunpack.c.l.b16 %v3280
    %v3409 = vunpack.c.l.b16 %v3281
    %v3410 = vunpack.c.l.b16 %v3282
    %v3411 = vunpack.c.l.b16 %v3283
    %v3412 = vunpack.c.l.b16 %v3284
    %v3413 = vunpack.c.l.b16 %v3285
    %v3414 = vunpack.c.l.b16 %v3286
    %v3415 = vunpack.c.l.b16 %v3287
    %v3416 = vunpack.c.l.b16 %v3288
    %v3417 = vunpack.c.l.b16 %v3289
    %v3418 = vunpack.c.l.b16 %v3290
    %v3419 = vunpack.c.l.b16 %v3291
    %v3420 = vunpack.c.l.b16 %v3292
    %v3421 = vunpack.c.l.b16 %v3293
    %v3422 = vunpack.c.l.b16 %v3294
    %v3423 = vunpack.c.l.b16 %v3295
    %v3424 = vunpack.c.l.b16 %v3296
    %v3425 = vunpack.c.l.b16 %v3297
    %v3426 = vunpack.c.l.b16 %v3298
    %v3427 = vunpack.c.l.b16 %v3299
    %v3428 = vunpack.c.l.b16 %v3300
    %v3429 = vpack.c.b16 %v3398, %v3397
    %v3430 = vpack.c.b16 %v3400, %v3399
    %v3431 = vpack.c.b16 %v3402, %v3401
    %v3432 = vpack.c.b16 %v3404, %v3403
    %v3433 = vpack.c.b16 %v3406, %v3405
    %v3434 = vpack.c.b16 %v3408, %v3407
    %v3435 = vpack.c.b16 %v3410, %v3409
    %v3436 = vpack.c.b16 %v3412, %v3411
    %v3437 = vpack.c.b16 %v3414, %v3413
    %v3438 = vpack.c.b16 %v3416, %v3415
    %v3439 = vpack.c.b16 %v3418, %v3417
    %v3440 = vpack.c.b16 %v3420, %v3419
    %v3441 = vpack.c.b16 %v3422, %v3421
    %v3442 = vpack.c.b16 %v3424, %v3423
    %v3443 = vpack.c.b16 %v3426, %v3425
    %v3444 = vpack.c.b16 %v3428, %v3427
    %3461 = vmatprep.subr.bf16.mxu0 0
    %3462 = vmatpush1.bf16.msra.mxu0 %v3429
    %3463 = vmatprep.subr.bf16.mxu0 0
    %3464 = vmatpush1.bf16.msra.mxu0 %v3430
    %3465 = vmatprep.subr.bf16.mxu0 0
    %3466 = vmatpush1.bf16.msra.mxu0 %v3431
    %3467 = vmatprep.subr.bf16.mxu0 0
    %3468 = vmatpush1.bf16.msra.mxu0 %v3432
    %3469 = vmatprep.subr.bf16.mxu0 0
    %3470 = vmatpush1.bf16.msra.mxu0 %v3433
    %3471 = vmatprep.subr.bf16.mxu0 0
    %3472 = vmatpush1.bf16.msra.mxu0 %v3434
    %3473 = vmatprep.subr.bf16.mxu0 0
    %3474 = vmatpush1.bf16.msra.mxu0 %v3435
    %3475 = vmatprep.subr.bf16.mxu0 0
    %3476 = vmatpush1.bf16.msra.mxu0 %v3436
    %3477 = vmatprep.subr.bf16.mxu0 0
    %3478 = vmatpush1.bf16.msra.mxu0 %v3437
    %3479 = vmatprep.subr.bf16.mxu0 0
    %3480 = vmatpush1.bf16.msra.mxu0 %v3438
    %3481 = vmatprep.subr.bf16.mxu0 0
    %3482 = vmatpush1.bf16.msra.mxu0 %v3439
    %3483 = vmatprep.subr.bf16.mxu0 0
    %3484 = vmatpush1.bf16.msra.mxu0 %v3440
    %3485 = vmatprep.subr.bf16.mxu0 0
    %3486 = vmatpush1.bf16.msra.mxu0 %v3441
    %3487 = vmatprep.subr.bf16.mxu0 0
    %3488 = vmatpush1.bf16.msra.mxu0 %v3442
    %3489 = vmatprep.subr.bf16.mxu0 0
    %3490 = vmatpush1.bf16.msra.mxu0 %v3443
    %3491 = vmatprep.subr.bf16.mxu0 0
    %3492 = vmatpush1.bf16.msra.mxu0 %v3444
    %3493 = vmatprep.mubr.bf16.mxu0 %v3362
    %3494 = vmatmul.mubr.bf16.gmra.mrb[0].mxu0 %v3361
    %v3495 = vpop.f32.mrb[0].mxu0
    %v3496 = vadd.f32 0.0, %v3495
    %v3497 = vpop.f32.mrb[0].mxu0
    %v3498 = vpop.f32.mrb[0].mxu0
    %v3499 = vpop.f32.mrb[0].mxu0
    %3500 = vdwg.mxu0
    %v3501 = vadd.f32 %v3147, %v3496
    %s3502 = scalar_lea.vmem [#allocation3], 7
    %v3503 = vld [vmem:[%s3502] ss:$8 sm:$0x3]
    %s3504 = scalar_lea.vmem [#allocation3], 23
    %v3505 = vld [vmem:[%s3504] ss:$8 sm:$0x3]
    %s3506 = scalar_lea.vmem [#allocation3], 39
    %v3507 = vld [vmem:[%s3506] ss:$8 sm:$0x3]
    %s3508 = scalar_lea.vmem [#allocation3], 55
    %v3509 = vld [vmem:[%s3508] ss:$8 sm:$0x3]
    %s3510 = scalar_lea.vmem [#allocation3], 71
    %v3511 = vld [vmem:[%s3510] ss:$8 sm:$0x3]
    %s3512 = scalar_lea.vmem [#allocation3], 87
    %v3513 = vld [vmem:[%s3512] ss:$8 sm:$0x3]
    %s3514 = scalar_lea.vmem [#allocation3], 103
    %v3515 = vld [vmem:[%s3514] ss:$8 sm:$0x3]
    %s3516 = scalar_lea.vmem [#allocation3], 119
    %v3517 = vld [vmem:[%s3516] ss:$8 sm:$0x3]
    %v3526 = vlaneseq
    %v3527 = vshrl.u32 %v3526, 7
    %v3528 = vsub.s32 0, %v3527
    %v3529 = vrot.slane %v3503, %v3528
    %v3530 = vlaneseq
    %v3531 = vshrl.u32 %v3530, 7
    %v3532 = vsub.s32 1, %v3531
    %v3533 = vrot.slane %v3503, %v3532
    %v3534 = vlaneseq
    %v3535 = vshrl.u32 %v3534, 7
    %v3536 = vsub.s32 0, %v3535
    %v3537 = vrot.slane %v3505, %v3536
    %v3538 = vlaneseq
    %v3539 = vshrl.u32 %v3538, 7
    %v3540 = vsub.s32 1, %v3539
    %v3541 = vrot.slane %v3505, %v3540
    %v3542 = vlaneseq
    %v3543 = vshrl.u32 %v3542, 7
    %v3544 = vsub.s32 0, %v3543
    %v3545 = vrot.slane %v3507, %v3544
    %v3546 = vlaneseq
    %v3547 = vshrl.u32 %v3546, 7
    %v3548 = vsub.s32 1, %v3547
    %v3549 = vrot.slane %v3507, %v3548
    %v3550 = vlaneseq
    %v3551 = vshrl.u32 %v3550, 7
    %v3552 = vsub.s32 0, %v3551
    %v3553 = vrot.slane %v3509, %v3552
    %v3554 = vlaneseq
    %v3555 = vshrl.u32 %v3554, 7
    %v3556 = vsub.s32 1, %v3555
    %v3557 = vrot.slane %v3509, %v3556
    %v3558 = vlaneseq
    %v3559 = vshrl.u32 %v3558, 7
    %v3560 = vsub.s32 0, %v3559
    %v3561 = vrot.slane %v3511, %v3560
    %v3562 = vlaneseq
    %v3563 = vshrl.u32 %v3562, 7
    %v3564 = vsub.s32 1, %v3563
    %v3565 = vrot.slane %v3511, %v3564
    %v3566 = vlaneseq
    %v3567 = vshrl.u32 %v3566, 7
    %v3568 = vsub.s32 0, %v3567
    %v3569 = vrot.slane %v3513, %v3568
    %v3570 = vlaneseq
    %v3571 = vshrl.u32 %v3570, 7
    %v3572 = vsub.s32 1, %v3571
    %v3573 = vrot.slane %v3513, %v3572
    %v3574 = vlaneseq
    %v3575 = vshrl.u32 %v3574, 7
    %v3576 = vsub.s32 0, %v3575
    %v3577 = vrot.slane %v3515, %v3576
    %v3578 = vlaneseq
    %v3579 = vshrl.u32 %v3578, 7
    %v3580 = vsub.s32 1, %v3579
    %v3581 = vrot.slane %v3515, %v3580
    %v3582 = vlaneseq
    %v3583 = vshrl.u32 %v3582, 7
    %v3584 = vsub.s32 0, %v3583
    %v3585 = vrot.slane %v3517, %v3584
    %v3586 = vlaneseq
    %v3587 = vshrl.u32 %v3586, 7
    %v3588 = vsub.s32 1, %v3587
    %v3589 = vrot.slane %v3517, %v3588
    %v3606 = vpack.c.bf16 %v3529, %v3529
    %v3607 = vpack.c.bf16 %v3533, %v3533
    %v3608 = vpack.c.bf16 %v3537, %v3537
    %v3609 = vpack.c.bf16 %v3541, %v3541
    %v3610 = vpack.c.bf16 %v3545, %v3545
    %v3611 = vpack.c.bf16 %v3549, %v3549
    %v3612 = vpack.c.bf16 %v3553, %v3553
    %v3613 = vpack.c.bf16 %v3557, %v3557
    %v3614 = vpack.c.bf16 %v3561, %v3561
    %v3615 = vpack.c.bf16 %v3565, %v3565
    %v3616 = vpack.c.bf16 %v3569, %v3569
    %v3617 = vpack.c.bf16 %v3573, %v3573
    %v3618 = vpack.c.bf16 %v3577, %v3577
    %v3619 = vpack.c.bf16 %v3581, %v3581
    %v3620 = vpack.c.bf16 %v3585, %v3585
    %v3621 = vpack.c.bf16 %v3589, %v3589
    %s3622 = scalar_lea.vmem %s6, 896
    %v3623 = vld [vmem:[%s3622] sm:$0xf]
    %v3624 = vld [vmem:[%s3622 + $0x4] sm:$0xf]
    %v3625 = vld [vmem:[%s3622 + $0x8] sm:$0xf]
    %v3626 = vld [vmem:[%s3622 + $0xc] sm:$0xf]
    %v3627 = vld [vmem:[%s3622 + $0x10] sm:$0xf]
    %v3628 = vld [vmem:[%s3622 + $0x14] sm:$0xf]
    %v3629 = vld [vmem:[%s3622 + $0x18] sm:$0xf]
    %v3630 = vld [vmem:[%s3622 + $0x1c] sm:$0xf]
    %v3631 = vld [vmem:[%s3622 + $0x20] sm:$0xf]
    %v3632 = vld [vmem:[%s3622 + $0x24] sm:$0xf]
    %v3633 = vld [vmem:[%s3622 + $0x28] sm:$0xf]
    %v3634 = vld [vmem:[%s3622 + $0x2c] sm:$0xf]
    %v3635 = vld [vmem:[%s3622 + $0x30] sm:$0xf]
    %v3636 = vld [vmem:[%s3622 + $0x34] sm:$0xf]
    %v3637 = vld [vmem:[%s3622 + $0x38] sm:$0xf]
    %v3638 = vld [vmem:[%s3622 + $0x3c] sm:$0xf]
    %v3639 = vld [vmem:[%s3622 + $0x40] sm:$0xf]
    %v3640 = vld [vmem:[%s3622 + $0x44] sm:$0xf]
    %v3641 = vld [vmem:[%s3622 + $0x48] sm:$0xf]
    %v3642 = vld [vmem:[%s3622 + $0x4c] sm:$0xf]
    %v3643 = vld [vmem:[%s3622 + $0x50] sm:$0xf]
    %v3644 = vld [vmem:[%s3622 + $0x54] sm:$0xf]
    %v3645 = vld [vmem:[%s3622 + $0x58] sm:$0xf]
    %v3646 = vld [vmem:[%s3622 + $0x5c] sm:$0xf]
    %v3647 = vld [vmem:[%s3622 + $0x60] sm:$0xf]
    %v3648 = vld [vmem:[%s3622 + $0x64] sm:$0xf]
    %v3649 = vld [vmem:[%s3622 + $0x68] sm:$0xf]
    %v3650 = vld [vmem:[%s3622 + $0x6c] sm:$0xf]
    %v3651 = vld [vmem:[%s3622 + $0x70] sm:$0xf]
    %v3652 = vld [vmem:[%s3622 + $0x74] sm:$0xf]
    %v3653 = vld [vmem:[%s3622 + $0x78] sm:$0xf]
    %v3654 = vld [vmem:[%s3622 + $0x7c] sm:$0xf]
    %v3671 = vunpack.c.l.b16 %v3606
    %v3672 = vunpack.c.l.b16 %v3607
    %v3673 = vunpack.c.l.b16 %v3608
    %v3674 = vunpack.c.l.b16 %v3609
    %v3675 = vunpack.c.l.b16 %v3610
    %v3676 = vunpack.c.l.b16 %v3611
    %v3677 = vunpack.c.l.b16 %v3612
    %v3678 = vunpack.c.l.b16 %v3613
    %v3679 = vunpack.c.l.b16 %v3614
    %v3680 = vunpack.c.l.b16 %v3615
    %v3681 = vunpack.c.l.b16 %v3616
    %v3682 = vunpack.c.l.b16 %v3617
    %v3683 = vunpack.c.l.b16 %v3618
    %v3684 = vunpack.c.l.b16 %v3619
    %v3685 = vunpack.c.l.b16 %v3620
    %v3686 = vunpack.c.l.b16 %v3621
    %v3687 = vrot.slane %v3673, 7
    %v3688 = vsel %vm1203, %v3687, %v3671
    %v3689 = vrot.slane %v3675, 6
    %v3690 = vsel %vm1206, %v3689, %v3688
    %v3691 = vrot.slane %v3677, 5
    %v3692 = vsel %vm1209, %v3691, %v3690
    %v3693 = vrot.slane %v3679, 4
    %v3694 = vsel %vm1212, %v3693, %v3692
    %v3695 = vrot.slane %v3681, 3
    %v3696 = vsel %vm1215, %v3695, %v3694
    %v3697 = vrot.slane %v3683, 2
    %v3698 = vsel %vm1218, %v3697, %v3696
    %v3699 = vrot.slane %v3685, 1
    %v3700 = vsel %vm1221, %v3699, %v3698
    %v3701 = vrot.slane %v3674, 7
    %v3702 = vsel %vm1203, %v3701, %v3672
    %v3703 = vrot.slane %v3676, 6
    %v3704 = vsel %vm1206, %v3703, %v3702
    %v3705 = vrot.slane %v3678, 5
    %v3706 = vsel %vm1209, %v3705, %v3704
    %v3707 = vrot.slane %v3680, 4
    %v3708 = vsel %vm1212, %v3707, %v3706
    %v3709 = vrot.slane %v3682, 3
    %v3710 = vsel %vm1215, %v3709, %v3708
    %v3711 = vrot.slane %v3684, 2
    %v3712 = vsel %vm1218, %v3711, %v3710
    %v3713 = vrot.slane %v3686, 1
    %v3714 = vsel %vm1221, %v3713, %v3712
    %v3715 = vpack.c.b16 %v3700, %v3700
    %v3716 = vpack.c.b16 %v3714, %v3714
    %v3751 = vunpack.c.l.b16 %v3623
    %v3752 = vunpack.c.l.b16 %v3624
    %v3753 = vunpack.c.l.b16 %v3625
    %v3754 = vunpack.c.l.b16 %v3626
    %v3755 = vunpack.c.l.b16 %v3627
    %v3756 = vunpack.c.l.b16 %v3628
    %v3757 = vunpack.c.l.b16 %v3629
    %v3758 = vunpack.c.l.b16 %v3630
    %v3759 = vunpack.c.l.b16 %v3631
    %v3760 = vunpack.c.l.b16 %v3632
    %v3761 = vunpack.c.l.b16 %v3633
    %v3762 = vunpack.c.l.b16 %v3634
    %v3763 = vunpack.c.l.b16 %v3635
    %v3764 = vunpack.c.l.b16 %v3636
    %v3765 = vunpack.c.l.b16 %v3637
    %v3766 = vunpack.c.l.b16 %v3638
    %v3767 = vunpack.c.l.b16 %v3639
    %v3768 = vunpack.c.l.b16 %v3640
    %v3769 = vunpack.c.l.b16 %v3641
    %v3770 = vunpack.c.l.b16 %v3642
    %v3771 = vunpack.c.l.b16 %v3643
    %v3772 = vunpack.c.l.b16 %v3644
    %v3773 = vunpack.c.l.b16 %v3645
    %v3774 = vunpack.c.l.b16 %v3646
    %v3775 = vunpack.c.l.b16 %v3647
    %v3776 = vunpack.c.l.b16 %v3648
    %v3777 = vunpack.c.l.b16 %v3649
    %v3778 = vunpack.c.l.b16 %v3650
    %v3779 = vunpack.c.l.b16 %v3651
    %v3780 = vunpack.c.l.b16 %v3652
    %v3781 = vunpack.c.l.b16 %v3653
    %v3782 = vunpack.c.l.b16 %v3654
    %v3783 = vpack.c.b16 %v3752, %v3751
    %v3784 = vpack.c.b16 %v3754, %v3753
    %v3785 = vpack.c.b16 %v3756, %v3755
    %v3786 = vpack.c.b16 %v3758, %v3757
    %v3787 = vpack.c.b16 %v3760, %v3759
    %v3788 = vpack.c.b16 %v3762, %v3761
    %v3789 = vpack.c.b16 %v3764, %v3763
    %v3790 = vpack.c.b16 %v3766, %v3765
    %v3791 = vpack.c.b16 %v3768, %v3767
    %v3792 = vpack.c.b16 %v3770, %v3769
    %v3793 = vpack.c.b16 %v3772, %v3771
    %v3794 = vpack.c.b16 %v3774, %v3773
    %v3795 = vpack.c.b16 %v3776, %v3775
    %v3796 = vpack.c.b16 %v3778, %v3777
    %v3797 = vpack.c.b16 %v3780, %v3779
    %v3798 = vpack.c.b16 %v3782, %v3781
    %3815 = vmatprep.subr.bf16.mxu0 0
    %3816 = vmatpush1.bf16.msra.mxu0 %v3783
    %3817 = vmatprep.subr.bf16.mxu0 0
    %3818 = vmatpush1.bf16.msra.mxu0 %v3784
    %3819 = vmatprep.subr.bf16.mxu0 0
    %3820 = vmatpush1.bf16.msra.mxu0 %v3785
    %3821 = vmatprep.subr.bf16.mxu0 0
    %3822 = vmatpush1.bf16.msra.mxu0 %v3786
    %3823 = vmatprep.subr.bf16.mxu0 0
    %3824 = vmatpush1.bf16.msra.mxu0 %v3787
    %3825 = vmatprep.subr.bf16.mxu0 0
    %3826 = vmatpush1.bf16.msra.mxu0 %v3788
    %3827 = vmatprep.subr.bf16.mxu0 0
    %3828 = vmatpush1.bf16.msra.mxu0 %v3789
    %3829 = vmatprep.subr.bf16.mxu0 0
    %3830 = vmatpush1.bf16.msra.mxu0 %v3790
    %3831 = vmatprep.subr.bf16.mxu0 0
    %3832 = vmatpush1.bf16.msra.mxu0 %v3791
    %3833 = vmatprep.subr.bf16.mxu0 0
    %3834 = vmatpush1.bf16.msra.mxu0 %v3792
    %3835 = vmatprep.subr.bf16.mxu0 0
    %3836 = vmatpush1.bf16.msra.mxu0 %v3793
    %3837 = vmatprep.subr.bf16.mxu0 0
    %3838 = vmatpush1.bf16.msra.mxu0 %v3794
    %3839 = vmatprep.subr.bf16.mxu0 0
    %3840 = vmatpush1.bf16.msra.mxu0 %v3795
    %3841 = vmatprep.subr.bf16.mxu0 0
    %3842 = vmatpush1.bf16.msra.mxu0 %v3796
    %3843 = vmatprep.subr.bf16.mxu0 0
    %3844 = vmatpush1.bf16.msra.mxu0 %v3797
    %3845 = vmatprep.subr.bf16.mxu0 0
    %3846 = vmatpush1.bf16.msra.mxu0 %v3798
    %3847 = vmatprep.mubr.bf16.mxu0 %v3716
    %3848 = vmatmul.mubr.bf16.gmra.mrb[0].mxu0 %v3715
    %v3849 = vpop.f32.mrb[0].mxu0
    %v3850 = vadd.f32 0.0, %v3849
    %v3851 = vpop.f32.mrb[0].mxu0
    %v3852 = vpop.f32.mrb[0].mxu0
    %v3853 = vpop.f32.mrb[0].mxu0
    %3854 = vdwg.mxu0
    %v3855 = vadd.f32 %v3501, %v3850
    %vm3856 = vcmask 80896
    %3857 = vst.msk [vmem:[#allocation6] sm:$0xff] %vm3856, %v3855
    %v3858 = vsel %vm3856, %v3855, -inf
    %3859 = vmax.xlane.f32.xlu0 %v3858
    %v3860 = vpop.xlane.xlu0 %3859
    %v3861 = vsub.f32 %v3855, %v3860
    %v3862 = vmul.f32 %v3861, 1.442695
    %v3863 = vpow.pop %v3862
    %v3864 = vsel %vm3856, %v3863, 0.0
    %3865 = vadd.xlane.f32.xlu0 %v3864
    %v3866 = vpop.xlane.xlu0 %3865
    %v3867 = vrcp.pop %v3866
    %v3868 = vmul.f32 %v3863, %v3867
    %v3869 = vlog2.pop %v3866
    %v3870 = vmul.f32 %v3869, 0.6931472
    %v3871 = vsub.f32 %v3861, %v3870
    %v3872 = vmax.f32 %v3871, -100.0
    %v3873 = vsub.f32 1.0, %v3868
    %v3874 = vlog2.pop %v3873
    %v3875 = vmul.f32 %v3874, 0.6931472
    %v3876 = vmax.f32 %v3875, -100.0
    %v3877 = vld [vmem:[%s8] sm:$0xff]
    %v3878 = vld [vmem:[%s9] sm:$0xff]
    %v3879 = vstv %s876
    %v3880 = vmul.f32 %v3879, %v3877
    %s3881 = ssub.f32 1.0, %s876
    %v3882 = vstv %s3881
    %v3883 = vmul.f32 %v3882, %v3878
    %v3884 = vadd.f32 %v3880, %v3883
    %v3885 = vmul.f32 %v3877, %v3872
    %v3886 = vsub.f32 1.0, %v3877
    %v3887 = vmul.f32 %v3886, %v3876
    %v3888 = vadd.f32 %v3885, %v3887
    %v3889 = vsel %vm3856, %v3888, 0.0
    %3890 = vadd.xlane.f32.xlu0 %v3889
    %v3891 = vpop.xlane.xlu0 %3890
    %v3892 = vrot.slane %v3891, 4
    %v3893 = vadd.f32 %v3891, %v3892
    %v3894 = vrot.slane %v3893, 2
    %v3895 = vadd.f32 %v3893, %v3894
    %v3896 = vrot.slane %v3895, 1
    %v3897 = vadd.f32 %v3895, %v3896
    %s3898 = vtos %v3897
    %v3899 = vrcp.pop 80.0
    %s3900 = vtos %v3899
    %s3901 = smul.f32 %s3898, %s3900
    %s3902 = ssub.f32 0.0, %s3901
    %s3903 = smul.f32 %s3902, %s876
    %v3904 = vmul.f32 %v3878, %v3872
    %v3905 = vsub.f32 1.0, %v3878
    %v3906 = vmul.f32 %v3905, %v3876
    %v3907 = vadd.f32 %v3904, %v3906
    %v3908 = vsel %vm3856, %v3907, 0.0
    %3909 = vadd.xlane.f32.xlu0 %v3908
    %v3910 = vpop.xlane.xlu0 %3909
    %v3911 = vrot.slane %v3910, 4
    %v3912 = vadd.f32 %v3910, %v3911
    %v3913 = vrot.slane %v3912, 2
    %v3914 = vadd.f32 %v3912, %v3913
    %v3915 = vrot.slane %v3914, 1
    %v3916 = vadd.f32 %v3914, %v3915
    %s3917 = vtos %v3916
    %v3918 = vrcp.pop 80.0
    %s3919 = vtos %v3918
    %s3920 = smul.f32 %s3917, %s3919
    %s3921 = ssub.f32 0.0, %s3920
    %s3922 = smul.f32 %s3921, %s3881
    %s3923 = sadd.f32 %s3903, %s3922
    %v3924 = vmul.f32 %v3884, %v3872
    %v3925 = vsub.f32 1.0, %v3884
    %v3926 = vmul.f32 %v3925, %v3876
    %v3927 = vadd.f32 %v3924, %v3926
    %v3928 = vsel %vm3856, %v3927, 0.0
    %3929 = vadd.xlane.f32.xlu0 %v3928
    %v3930 = vpop.xlane.xlu0 %3929
    %v3931 = vrot.slane %v3930, 4
    %v3932 = vadd.f32 %v3930, %v3931
    %v3933 = vrot.slane %v3932, 2
    %v3934 = vadd.f32 %v3932, %v3933
    %v3935 = vrot.slane %v3934, 1
    %v3936 = vadd.f32 %v3934, %v3935
    %s3937 = vtos %v3936
    %v3938 = vrcp.pop 80.0
    %s3939 = vtos %v3938
    %s3940 = smul.f32 %s3937, %s3939
    %s3941 = ssub.f32 0.0, %s3940
    %s3942 = sadd.f32 %s3923, %s3941
    %v3943 = vstv %s3942
    %vm3944 = vcmask 0
    %3945 = vst.msk [vmem:[#allocation8] sm:$0x1] %vm3944, %v3943
    // Predicated region
    $region38: #{patchup_forward.1} parent=1 // pred_check
      _
    $region39: #{patchup_forward.1} parent=1 // pred_check_branch
      %3947 = sbr.rel (0) target = $region41
    $region40: #{patchup_forward.1} parent=1 // pred_region
      %s3949 = ssub.s32 128, 128
      %3950 = vsyncadd [#allocation7], %s3949
      %s3952 = sshll.u32 [#allocation6], 4
      %s3953 = int_to_ptr.vmem [resolvable:$true] %s3952
      %3955 = dma.vmem_to_hbm [thread:$0]  %s3953, 128, %s10, [#allocation7]
    $region41: #{patchup_forward.1} parent=1 // pred_fallthru
      _
    // Predicated region
    $region42: #{patchup_forward.1} parent=1 // pred_check
      _
    $region43: #{patchup_forward.1} parent=1 // pred_check_branch
      %3957 = sbr.rel (0) target = $region45
    $region44: #{patchup_forward.1} parent=1 // pred_region
      %s3959 = ssub.s32 16, 16
      %3960 = vsyncadd [#allocation9], %s3959
      %s3962 = sshll.u32 [#allocation8], 4
      %s3963 = int_to_ptr.vmem [resolvable:$true] %s3962
      %3965 = dma.vmem_to_hbm [thread:$0]  %s3963, 16, %s11, [#allocation9]
    $region45: #{patchup_forward.1} parent=1 // pred_fallthru
      _
    // Predicated region
    $region46: #{patchup_forward.1} parent=1 // pred_check
      _
    $region47: #{patchup_forward.1} parent=1 // pred_check_branch
      %3967 = sbr.rel (0) target = $region49
    $region48: #{patchup_forward.1} parent=1 // pred_region
      %3968 = dma.done [#allocation7], 128
    $region49: #{patchup_forward.1} parent=1 // pred_fallthru
      _
    // Predicated region
    $region50: #{patchup_forward.1} parent=1 // pred_check
      _
    $region51: #{patchup_forward.1} parent=1 // pred_check_branch
      %3970 = sbr.rel (0) target = $region53
    $region52: #{patchup_forward.1} parent=1 // pred_region
      %3971 = dma.done [#allocation9], 16
    $region53: #{patchup_forward.1} parent=1 // pred_fallthru
      _
    %3972 = vsyncpa [#allocation7], 1
    %3973 = vsyncpa [#allocation9], 1

</llo_original>
